<compile_context>
chip_gen: v7x
topology: tpu7x:2x2x1
jax: 0.10.0
libtpu: 0.0.40
codegen_flags: <defaults>
</compile_context>

<pallas_src>
import functools

import jax
import jax.numpy as jnp
from jax.experimental import pallas as pl
from jax.experimental.pallas import tpu as pltpu

LANE = 128      # padded Cout / FC width -> lane-dense outputs
CIN_PAD = 8     # conv input-channel padding -> K = k*k*8 (multiple of 8)


# ----------------------------- Pallas kernels ------------------------------

def _matmul_bias_relu_kernel(x_ref, w_ref, b_ref, o_ref, *, relu):
    # bf16 x bf16 -> f32 accumulate on the MXU; f32 epilogue (v5e-safe).
    acc = jnp.dot(x_ref[...], w_ref[...], preferred_element_type=jnp.float32)
    acc = acc + b_ref[...]                      # [1, 128] broadcasts over rows
    if relu:
        acc = jnp.maximum(acc, 0.0)
    o_ref[...] = acc.astype(o_ref.dtype)


def _pick_m_tile(m, target=512):
    """Largest multiple-of-8 divisor of m that is <= target (else m)."""
    if m <= target:
        return m
    for t in range(target - target % 8, 7, -8):
        if m % t == 0:
            return t
    return m


def matmul_bias_relu(x_bf16, w_bf16, b_row_f32, *, relu):
    """y = x @ w + b (optional ReLU). x:[M,K] bf16, w:[K,128] bf16, b:[1,128] f32."""
    M, K = x_bf16.shape
    _, N = w_bf16.shape
    tm = _pick_m_tile(M)
    return pl.pallas_call(
        functools.partial(_matmul_bias_relu_kernel, relu=relu),
        out_shape=jax.ShapeDtypeStruct((M, N), jnp.float32),
        grid=(M // tm,),
        in_specs=[
            pl.BlockSpec((tm, K), lambda i: (i, 0)),
            pl.BlockSpec((K, N), lambda i: (0, 0)),   # constant -> fetched once
            pl.BlockSpec((1, N), lambda i: (0, 0)),   # constant -> fetched once
        ],
        out_specs=pl.BlockSpec((tm, N), lambda i: (i, 0)),
        compiler_params=pltpu.CompilerParams(dimension_semantics=("parallel",)),
    )(x_bf16, w_bf16, b_row_f32)


def _maxpool2x2_kernel(x_ref, o_ref):
    x = x_ref[...]                                    # [B*Hp, 2, Wp, 2*128]
    v = jnp.maximum(x[:, 0], x[:, 1])                 # vertical (ho) max
    o_ref[...] = jnp.maximum(v[..., :LANE], v[..., LANE:])   # horizontal (wo) max


def maxpool2x2(y, B, Ho, Wo):
    """MaxPool2d(2,2). y: conv output [B*Ho*Wo, 128] (rows ordered b,ho,wo).
    Returns [B*Hp, Wp, 128]. Uses a free lane-dense reshape, no strided slices."""
    Hp, Wp = Ho // 2, Wo // 2
    x = y.reshape(B * Hp, 2, Wp, 2 * LANE)            # free metadata reshape
    return pl.pallas_call(
        _maxpool2x2_kernel,
        out_shape=jax.ShapeDtypeStruct((B * Hp, Wp, LANE), y.dtype),
    )(x)


def _fc_stack_kernel(x_ref, w1, b1, w2, b2, w3, b3, o_ref):
    h = jnp.dot(x_ref[...], w1[...], preferred_element_type=jnp.float32)
    h = jnp.maximum(h + b1[...], 0.0)
    h = jnp.dot(h.astype(jnp.bfloat16), w2[...], preferred_element_type=jnp.float32)
    h = jnp.maximum(h + b2[...], 0.0)
    h = jnp.dot(h.astype(jnp.bfloat16), w3[...], preferred_element_type=jnp.float32)
    o_ref[...] = (h + b3[...]).astype(o_ref.dtype)


def fc_stack(x_bf16, w1, b1, w2, b2, w3, b3):
    """Fused fc1(ReLU)+fc2(ReLU)+fc3 in one pallas_call. All widths padded to 128."""
    B = x_bf16.shape[0]
    return pl.pallas_call(
        _fc_stack_kernel,
        out_shape=jax.ShapeDtypeStruct((B, LANE), jnp.float32),
    )(x_bf16, w1, b1, w2, b2, w3, b3)


# ------------------------------ glue (JAX) ---------------------------------

def _im2col_nhwc(x, k):
    """x: [B, H, W, C] -> patches [B*Ho*Wo, k*k*C], feature order (ki, kj, c)."""
    B, H, W, C = x.shape
    Ho, Wo = H - k + 1, W - k + 1
    cols = [x[:, di:di + Ho, dj:dj + Wo, :] for di in range(k) for dj in range(k)]
    p = jnp.stack(cols, axis=3)                       # [B, Ho, Wo, k*k, C]
    return p.reshape(B * Ho * Wo, k * k * C), Ho, Wo


def conv_relu_pool(x_nhwc_bf16, w_mat, b_row, k):
    """Conv2d(valid, stride 1) + ReLU + MaxPool2x2, channels padded to 128."""
    B = x_nhwc_bf16.shape[0]
    patches, Ho, Wo = _im2col_nhwc(x_nhwc_bf16, k)    # [B*Ho*Wo, k*k*CIN_PAD]
    y = matmul_bias_relu(patches, w_mat, b_row, relu=True)   # [B*Ho*Wo, 128] f32
    return maxpool2x2(y, B, Ho, Wo), Ho // 2, Wo // 2


def net_forward(p, x_nchw):
    B = x_nchw.shape[0]
    # single layout change at entry: NCHW -> NHWC, pad channels 3->8, bf16
    x = jnp.transpose(x_nchw, (0, 2, 3, 1))
    x = jnp.pad(x, ((0, 0), (0, 0), (0, 0), (0, CIN_PAD - x.shape[-1])))
    x = x.astype(jnp.bfloat16)

    h, Hp, Wp = conv_relu_pool(x, p["conv1_w"], p["conv1_b"], 5)     # [B*14,14,128]
    h = h.reshape(B, Hp, Wp, LANE)[..., :CIN_PAD].astype(jnp.bfloat16)  # 8 ch (6 real)
    h, Hp, Wp = conv_relu_pool(h, p["conv2_w"], p["conv2_b"], 5)     # [B*5,5,128]

    x_flat = h.reshape(B, Hp * Wp * LANE).astype(jnp.bfloat16)       # [B, 3200]
    out = fc_stack(x_flat, p["fc1_w"], p["fc1_b"], p["fc2_w"], p["fc2_b"],
                   p["fc3_w"], p["fc3_b"])                           # [B, 128]
    return out[:, :10]


# -------------------- one-time parameter preparation -----------------------

def prepare_params(tp):
    """Convert PyTorch-layout params to kernel layout ONCE: transpose, pad
    Cout/FC widths to 128 and K to CIN_PAD multiples, permute fc1 to the NHWC
    flatten order, cast weights to bf16 (biases stay f32)."""
    def conv_w(w):                                    # [Cout,Cin,k,k] -> [k*k*8, 128]
        Cout, Cin, k, _ = w.shape
        w = jnp.transpose(w, (2, 3, 1, 0))            # [k, k, Cin, Cout]
        w = jnp.pad(w, ((0, 0), (0, 0), (0, CIN_PAD - Cin), (0, LANE - Cout)))
        return w.reshape(k * k * CIN_PAD, LANE).astype(jnp.bfloat16)

    def bias(b):
        return jnp.pad(b, (0, LANE - b.shape[0])).reshape(1, LANE).astype(jnp.float32)

    def fc_w(w):                                      # [N, K] -> [128, 128] (pre-.T)
        N, K = w.shape
        return jnp.pad(w.T, ((0, LANE - K), (0, LANE - N))).astype(jnp.bfloat16)

    # fc1: PyTorch flatten is (C,H,W); our activations flatten as (H,W,Cpad=128).
    w1 = tp["fc1_w"].reshape(120, 16, 5, 5)           # [N, C, H, W]
    w1 = jnp.transpose(w1, (2, 3, 1, 0))              # [H, W, C, N]
    w1 = jnp.pad(w1, ((0, 0), (0, 0), (0, LANE - 16), (0, LANE - 120)))
    w1 = w1.reshape(5 * 5 * LANE, LANE).astype(jnp.bfloat16)

    return {
        "conv1_w": conv_w(tp["conv1_w"]), "conv1_b": bias(tp["conv1_b"]),
        "conv2_w": conv_w(tp["conv2_w"]), "conv2_b": bias(tp["conv2_b"]),
        "fc1_w": w1,                      "fc1_b": bias(tp["fc1_b"]),
        "fc2_w": fc_w(tp["fc2_w"]),       "fc2_b": bias(tp["fc2_b"]),
        "fc3_w": fc_w(tp["fc3_w"]),       "fc3_b": bias(tp["fc3_b"]),
    }


def init_params(key):
    """Deterministic init mimicking PyTorch's U(-1/sqrt(fan_in), 1/sqrt(fan_in))."""
    def uniform(k, shape, fan_in):
        bound = 1.0 / jnp.sqrt(float(fan_in))
        return jax.random.uniform(k, shape, jnp.float32, -bound, bound)

    ks = jax.random.split(key, 10)
    return {
        "conv1_w": uniform(ks[0], (6, 3, 5, 5), 3 * 5 * 5),
        "conv1_b": uniform(ks[1], (6,), 3 * 5 * 5),
        "conv2_w": uniform(ks[2], (16, 6, 5, 5), 6 * 5 * 5),
        "conv2_b": uniform(ks[3], (16,), 6 * 5 * 5),
        "fc1_w": uniform(ks[4], (120, 400), 400),
        "fc1_b": uniform(ks[5], (120,), 400),
        "fc2_w": uniform(ks[6], (84, 120), 120),
        "fc2_b": uniform(ks[7], (84,), 120),
        "fc3_w": uniform(ks[8], (10, 84), 84),
        "fc3_b": uniform(ks[9], (10,), 84),
    }


if __name__ == "__main__":
    key = jax.random.PRNGKey(0)
    k_params, k_x = jax.random.split(key)
    torch_layout_params = init_params(k_params)
    params = prepare_params(torch_layout_params)      # one-time layout/pad/cast
    x = jax.random.normal(k_x, (2, 3, 32, 32), dtype=jnp.float32)  # NCHW like torch

    out = jax.jit(net_forward)(params, x)
    out = jax.block_until_ready(out)
    assert out.shape == (2, 10), out.shape
    assert bool(jnp.all(jnp.isfinite(out)))
    print("KERNEL_OK")
</pallas_src>

<mosaic_0001>
module attributes {stable_mosaic.version = 11 : i64} {
  func.func @_matmul_bias_relu_kernel(%arg0: i32, %arg1: memref<392x200xbf16, #tpu.memory_space<vmem>>, %arg2: memref<200x128xbf16, #tpu.memory_space<vmem>>, %arg3: memref<1x128xf32, #tpu.memory_space<vmem>>, %arg4: memref<392x128xf32, #tpu.memory_space<vmem>>) attributes {dimension_semantics = [#tpu.dimension_semantics<parallel>], iteration_bounds = array<i64: 4>, scalar_prefetch = 0 : i64, scratch_operands = 0 : i64, tpu.core_type = #tpu.core_type<tc>, window_params = [{transform_indices = @transform_0, window_bounds = array<i64: 392, 200>}, {pipeline_mode = #tpu.pipeline_mode<synchronous>, transform_indices = @transform_1, window_bounds = array<i64: 200, 128>}, {pipeline_mode = #tpu.pipeline_mode<synchronous>, transform_indices = @transform_2, window_bounds = array<i64: 1, 128>}, {transform_indices = @transform_3, window_bounds = array<i64: 392, 128>}]} {
    %c0 = arith.constant 0 : index
    %c0_0 = arith.constant 0 : index
    %0 = vector.load %arg1[%c0, %c0_0] : memref<392x200xbf16, #tpu.memory_space<vmem>>, vector<392x200xbf16>
    %c0_1 = arith.constant 0 : index
    %c0_2 = arith.constant 0 : index
    %1 = vector.load %arg2[%c0_1, %c0_2] : memref<200x128xbf16, #tpu.memory_space<vmem>>, vector<200x128xbf16>
    %cst = arith.constant dense<0.000000e+00> : vector<392x128xf32>
    %2 = tpu.matmul %0, %1, %cst {dimension_numbers = #tpu.dot_dimension_numbers<[1], [0], [0], [1], [0, 0, 1, 1], [], []>} : vector<392x200xbf16>, vector<200x128xbf16>, vector<392x128xf32> -> vector<392x128xf32>
    %c0_3 = arith.constant 0 : index
    %c0_4 = arith.constant 0 : index
    %3 = vector.load %arg3[%c0_3, %c0_4] : memref<1x128xf32, #tpu.memory_space<vmem>>, vector<1x128xf32>
    %4 = vector.broadcast %3 : vector<1x128xf32> to vector<392x128xf32>
    %5 = arith.addf %2, %4 : vector<392x128xf32>
    %cst_5 = arith.constant 0.000000e+00 : f32
    %6 = vector.broadcast %cst_5 : f32 to vector<392x128xf32>
    %7 = arith.maximumf %5, %6 : vector<392x128xf32>
    %c0_6 = arith.constant 0 : index
    %c0_7 = arith.constant 0 : index
    %8 = vector.load %arg4[%c0_6, %c0_7] : memref<392x128xf32, #tpu.memory_space<vmem>>, vector<392x128xf32>
    tpu.vector_store %arg4[%c0_6, %c0_7], %7 {strides = array<i32>} : memref<392x128xf32, #tpu.memory_space<vmem>>, vector<392x128xf32>,
    return
  }
  func.func @transform_0(%arg0: i32) -> (i32, i32) {
    %c0_i32 = arith.constant 0 : i32
    %c0_i32_0 = arith.constant 0 : i32
    return %arg0, %c0_i32 : i32, i32
  }
  func.func @transform_1(%arg0: i32) -> (i32, i32) {
    %c0_i32 = arith.constant 0 : i32
    %c0_i32_0 = arith.constant 0 : i32
    %c0_i32_1 = arith.constant 0 : i32
    return %c0_i32, %c0_i32_0 : i32, i32
  }
  func.func @transform_2(%arg0: i32) -> (i32, i32) {
    %c0_i32 = arith.constant 0 : i32
    %c0_i32_0 = arith.constant 0 : i32
    %c0_i32_1 = arith.constant 0 : i32
    return %c0_i32, %c0_i32_0 : i32, i32
  }
  func.func @transform_3(%arg0: i32) -> (i32, i32) {
    %c0_i32 = arith.constant 0 : i32
    %c0_i32_0 = arith.constant 0 : i32
    return %arg0, %c0_i32 : i32, i32
  }
}

module attributes {stable_mosaic.version = 11 : i64} {
  func.func @_maxpool2x2_kernel(%arg0: memref<28x2x14x256xf32, #tpu.memory_space<vmem>>, %arg1: memref<28x14x128xf32, #tpu.memory_space<vmem>>) attributes {dimension_semantics = [], scalar_prefetch = 0 : i64, scratch_operands = 0 : i64, tpu.core_type = #tpu.core_type<tc>} {
    %c0 = arith.constant 0 : index
    %c0_0 = arith.constant 0 : index
    %c0_1 = arith.constant 0 : index
    %c0_2 = arith.constant 0 : index
    %0 = vector.load %arg0[%c0, %c0_0, %c0_1, %c0_2] : memref<28x2x14x256xf32, #tpu.memory_space<vmem>>, vector<28x2x14x256xf32>
    %1 = vector.extract_strided_slice %0 {offsets = [0, 0, 0, 0], sizes = [28, 1, 14, 256], strides = [1, 1, 1, 1]} : vector<28x2x14x256xf32> to vector<28x1x14x256xf32>
    %2 = vector.shape_cast %1 : vector<28x1x14x256xf32> to vector<28x14x256xf32>
    %3 = vector.extract_strided_slice %0 {offsets = [0, 1, 0, 0], sizes = [28, 1, 14, 256], strides = [1, 1, 1, 1]} : vector<28x2x14x256xf32> to vector<28x1x14x256xf32>
    %4 = vector.shape_cast %3 : vector<28x1x14x256xf32> to vector<28x14x256xf32>
    %5 = arith.maximumf %2, %4 : vector<28x14x256xf32>
    %6 = vector.extract_strided_slice %5 {offsets = [0, 0, 0], sizes = [28, 14, 128], strides = [1, 1, 1]} : vector<28x14x256xf32> to vector<28x14x128xf32>
    %7 = vector.extract_strided_slice %5 {offsets = [0, 0, 128], sizes = [28, 14, 128], strides = [1, 1, 1]} : vector<28x14x256xf32> to vector<28x14x128xf32>
    %8 = arith.maximumf %6, %7 : vector<28x14x128xf32>
    %c0_3 = arith.constant 0 : index
    %c0_4 = arith.constant 0 : index
    %c0_5 = arith.constant 0 : index
    %9 = vector.load %arg1[%c0_3, %c0_4, %c0_5] : memref<28x14x128xf32, #tpu.memory_space<vmem>>, vector<28x14x128xf32>
    tpu.vector_store %arg1[%c0_3, %c0_4, %c0_5], %8 {strides = array<i32>} : memref<28x14x128xf32, #tpu.memory_space<vmem>>, vector<28x14x128xf32>,
    return
  }
}

module attributes {stable_mosaic.version = 11 : i64} {
  func.func @_matmul_bias_relu_kernel(%arg0: i32, %arg1: memref<200x200xbf16, #tpu.memory_space<vmem>>, %arg2: memref<200x128xbf16, #tpu.memory_space<vmem>>, %arg3: memref<1x128xf32, #tpu.memory_space<vmem>>, %arg4: memref<200x128xf32, #tpu.memory_space<vmem>>) attributes {dimension_semantics = [#tpu.dimension_semantics<parallel>], iteration_bounds = array<i64: 1>, scalar_prefetch = 0 : i64, scratch_operands = 0 : i64, tpu.core_type = #tpu.core_type<tc>, window_params = [{transform_indices = @transform_0, window_bounds = array<i64: 200, 200>}, {pipeline_mode = #tpu.pipeline_mode<synchronous>, transform_indices = @transform_1, window_bounds = array<i64: 200, 128>}, {pipeline_mode = #tpu.pipeline_mode<synchronous>, transform_indices = @transform_2, window_bounds = array<i64: 1, 128>}, {transform_indices = @transform_3, window_bounds = array<i64: 200, 128>}]} {
    %c0 = arith.constant 0 : index
    %c0_0 = arith.constant 0 : index
    %0 = vector.load %arg1[%c0, %c0_0] : memref<200x200xbf16, #tpu.memory_space<vmem>>, vector<200x200xbf16>
    %c0_1 = arith.constant 0 : index
    %c0_2 = arith.constant 0 : index
    %1 = vector.load %arg2[%c0_1, %c0_2] : memref<200x128xbf16, #tpu.memory_space<vmem>>, vector<200x128xbf16>
    %cst = arith.constant dense<0.000000e+00> : vector<200x128xf32>
    %2 = tpu.matmul %0, %1, %cst {dimension_numbers = #tpu.dot_dimension_numbers<[1], [0], [0], [1], [0, 0, 1, 1], [], []>} : vector<200x200xbf16>, vector<200x128xbf16>, vector<200x128xf32> -> vector<200x128xf32>
    %c0_3 = arith.constant 0 : index
    %c0_4 = arith.constant 0 : index
    %3 = vector.load %arg3[%c0_3, %c0_4] : memref<1x128xf32, #tpu.memory_space<vmem>>, vector<1x128xf32>
    %4 = vector.broadcast %3 : vector<1x128xf32> to vector<200x128xf32>
    %5 = arith.addf %2, %4 : vector<200x128xf32>
    %cst_5 = arith.constant 0.000000e+00 : f32
    %6 = vector.broadcast %cst_5 : f32 to vector<200x128xf32>
    %7 = arith.maximumf %5, %6 : vector<200x128xf32>
    %c0_6 = arith.constant 0 : index
    %c0_7 = arith.constant 0 : index
    %8 = vector.load %arg4[%c0_6, %c0_7] : memref<200x128xf32, #tpu.memory_space<vmem>>, vector<200x128xf32>
    tpu.vector_store %arg4[%c0_6, %c0_7], %7 {strides = array<i32>} : memref<200x128xf32, #tpu.memory_space<vmem>>, vector<200x128xf32>,
    return
  }
  func.func @transform_0(%arg0: i32) -> (i32, i32) {
    %c0_i32 = arith.constant 0 : i32
    %c0_i32_0 = arith.constant 0 : i32
    return %arg0, %c0_i32 : i32, i32
  }
  func.func @transform_1(%arg0: i32) -> (i32, i32) {
    %c0_i32 = arith.constant 0 : i32
    %c0_i32_0 = arith.constant 0 : i32
    %c0_i32_1 = arith.constant 0 : i32
    return %c0_i32, %c0_i32_0 : i32, i32
  }
  func.func @transform_2(%arg0: i32) -> (i32, i32) {
    %c0_i32 = arith.constant 0 : i32
    %c0_i32_0 = arith.constant 0 : i32
    %c0_i32_1 = arith.constant 0 : i32
    return %c0_i32, %c0_i32_0 : i32, i32
  }
  func.func @transform_3(%arg0: i32) -> (i32, i32) {
    %c0_i32 = arith.constant 0 : i32
    %c0_i32_0 = arith.constant 0 : i32
    return %arg0, %c0_i32 : i32, i32
  }
}

module attributes {stable_mosaic.version = 11 : i64} {
  func.func @_maxpool2x2_kernel(%arg0: memref<10x2x5x256xf32, #tpu.memory_space<vmem>>, %arg1: memref<10x5x128xf32, #tpu.memory_space<vmem>>) attributes {dimension_semantics = [], scalar_prefetch = 0 : i64, scratch_operands = 0 : i64, tpu.core_type = #tpu.core_type<tc>} {
    %c0 = arith.constant 0 : index
    %c0_0 = arith.constant 0 : index
    %c0_1 = arith.constant 0 : index
    %c0_2 = arith.constant 0 : index
    %0 = vector.load %arg0[%c0, %c0_0, %c0_1, %c0_2] : memref<10x2x5x256xf32, #tpu.memory_space<vmem>>, vector<10x2x5x256xf32>
    %1 = vector.extract_strided_slice %0 {offsets = [0, 0, 0, 0], sizes = [10, 1, 5, 256], strides = [1, 1, 1, 1]} : vector<10x2x5x256xf32> to vector<10x1x5x256xf32>
    %2 = vector.shape_cast %1 : vector<10x1x5x256xf32> to vector<10x5x256xf32>
    %3 = vector.extract_strided_slice %0 {offsets = [0, 1, 0, 0], sizes = [10, 1, 5, 256], strides = [1, 1, 1, 1]} : vector<10x2x5x256xf32> to vector<10x1x5x256xf32>
    %4 = vector.shape_cast %3 : vector<10x1x5x256xf32> to vector<10x5x256xf32>
    %5 = arith.maximumf %2, %4 : vector<10x5x256xf32>
    %6 = vector.extract_strided_slice %5 {offsets = [0, 0, 0], sizes = [10, 5, 128], strides = [1, 1, 1]} : vector<10x5x256xf32> to vector<10x5x128xf32>
    %7 = vector.extract_strided_slice %5 {offsets = [0, 0, 128], sizes = [10, 5, 128], strides = [1, 1, 1]} : vector<10x5x256xf32> to vector<10x5x128xf32>
    %8 = arith.maximumf %6, %7 : vector<10x5x128xf32>
    %c0_3 = arith.constant 0 : index
    %c0_4 = arith.constant 0 : index
    %c0_5 = arith.constant 0 : index
    %9 = vector.load %arg1[%c0_3, %c0_4, %c0_5] : memref<10x5x128xf32, #tpu.memory_space<vmem>>, vector<10x5x128xf32>
    tpu.vector_store %arg1[%c0_3, %c0_4, %c0_5], %8 {strides = array<i32>} : memref<10x5x128xf32, #tpu.memory_space<vmem>>, vector<10x5x128xf32>,
    return
  }
}

module attributes {stable_mosaic.version = 11 : i64} {
  func.func @_fc_stack_kernel(%arg0: memref<2x3200xbf16, #tpu.memory_space<vmem>>, %arg1: memref<3200x128xbf16, #tpu.memory_space<vmem>>, %arg2: memref<1x128xf32, #tpu.memory_space<vmem>>, %arg3: memref<128x128xbf16, #tpu.memory_space<vmem>>, %arg4: memref<1x128xf32, #tpu.memory_space<vmem>>, %arg5: memref<128x128xbf16, #tpu.memory_space<vmem>>, %arg6: memref<1x128xf32, #tpu.memory_space<vmem>>, %arg7: memref<2x128xf32, #tpu.memory_space<vmem>>) attributes {dimension_semantics = [], scalar_prefetch = 0 : i64, scratch_operands = 0 : i64, tpu.core_type = #tpu.core_type<tc>} {
    %c0 = arith.constant 0 : index
    %c0_0 = arith.constant 0 : index
    %0 = vector.load %arg0[%c0, %c0_0] : memref<2x3200xbf16, #tpu.memory_space<vmem>>, vector<2x3200xbf16>
    %c0_1 = arith.constant 0 : index
    %c0_2 = arith.constant 0 : index
    %1 = vector.load %arg1[%c0_1, %c0_2] : memref<3200x128xbf16, #tpu.memory_space<vmem>>, vector<3200x128xbf16>
    %cst = arith.constant dense<0.000000e+00> : vector<2x128xf32>
    %2 = tpu.matmul %0, %1, %cst {dimension_numbers = #tpu.dot_dimension_numbers<[1], [0], [0], [1], [0, 0, 1, 1], [], []>} : vector<2x3200xbf16>, vector<3200x128xbf16>, vector<2x128xf32> -> vector<2x128xf32>
    %c0_3 = arith.constant 0 : index
    %c0_4 = arith.constant 0 : index
    %3 = vector.load %arg2[%c0_3, %c0_4] : memref<1x128xf32, #tpu.memory_space<vmem>>, vector<1x128xf32>
    %4 = vector.broadcast %3 : vector<1x128xf32> to vector<2x128xf32>
    %5 = arith.addf %2, %4 : vector<2x128xf32>
    %cst_5 = arith.constant 0.000000e+00 : f32
    %6 = vector.broadcast %cst_5 : f32 to vector<2x128xf32>
    %7 = arith.maximumf %5, %6 : vector<2x128xf32>
    %8 = arith.truncf %7 : vector<2x128xf32> to vector<2x128xbf16>
    %c0_6 = arith.constant 0 : index
    %c0_7 = arith.constant 0 : index
    %9 = vector.load %arg3[%c0_6, %c0_7] : memref<128x128xbf16, #tpu.memory_space<vmem>>, vector<128x128xbf16>
    %cst_8 = arith.constant dense<0.000000e+00> : vector<2x128xf32>
    %10 = tpu.matmul %8, %9, %cst_8 {dimension_numbers = #tpu.dot_dimension_numbers<[1], [0], [0], [1], [0, 0, 1, 1], [], []>} : vector<2x128xbf16>, vector<128x128xbf16>, vector<2x128xf32> -> vector<2x128xf32>
    %c0_9 = arith.constant 0 : index
    %c0_10 = arith.constant 0 : index
    %11 = vector.load %arg4[%c0_9, %c0_10] : memref<1x128xf32, #tpu.memory_space<vmem>>, vector<1x128xf32>
    %12 = vector.broadcast %11 : vector<1x128xf32> to vector<2x128xf32>
    %13 = arith.addf %10, %12 : vector<2x128xf32>
    %cst_11 = arith.constant 0.000000e+00 : f32
    %14 = vector.broadcast %cst_11 : f32 to vector<2x128xf32>
    %15 = arith.maximumf %13, %14 : vector<2x128xf32>
    %16 = arith.truncf %15 : vector<2x128xf32> to vector<2x128xbf16>
    %c0_12 = arith.constant 0 : index
    %c0_13 = arith.constant 0 : index
    %17 = vector.load %arg5[%c0_12, %c0_13] : memref<128x128xbf16, #tpu.memory_space<vmem>>, vector<128x128xbf16>
    %cst_14 = arith.constant dense<0.000000e+00> : vector<2x128xf32>
    %18 = tpu.matmul %16, %17, %cst_14 {dimension_numbers = #tpu.dot_dimension_numbers<[1], [0], [0], [1], [0, 0, 1, 1], [], []>} : vector<2x128xbf16>, vector<128x128xbf16>, vector<2x128xf32> -> vector<2x128xf32>
    %c0_15 = arith.constant 0 : index
    %c0_16 = arith.constant 0 : index
    %19 = vector.load %arg6[%c0_15, %c0_16] : memref<1x128xf32, #tpu.memory_space<vmem>>, vector<1x128xf32>
    %20 = vector.broadcast %19 : vector<1x128xf32> to vector<2x128xf32>
    %21 = arith.addf %18, %20 : vector<2x128xf32>
    %c0_17 = arith.constant 0 : index
    %c0_18 = arith.constant 0 : index
    %22 = vector.load %arg7[%c0_17, %c0_18] : memref<2x128xf32, #tpu.memory_space<vmem>>, vector<2x128xf32>
    tpu.vector_store %arg7[%c0_17, %c0_18], %21 {strides = array<i32>} : memref<2x128xf32, #tpu.memory_space<vmem>>, vector<2x128xf32>,
    return
  }
}

</mosaic_0001>

<llo_original>
// kernel: net_forward.5
$region0: #{net_forward.5}
  #allocation0 [shape = 'u32[]', space=smem, size = 0x4, offset = 0x4, fixed_abs, tag = 'smem constant byte address 0x4 - core index']
  #allocation1 [shape = 'u32[144,128]{1,0:T(1,128)}', space=vmem, size = 0x12000, scoped, tag = 'internal scratch']
  %s0 = inlined_call_operand.vmem [shape: bf16[1568,200], index: 0, kind: input, shape index: {}]
  %s1 = inlined_call_operand.vmem [shape: bf16[200,128], index: 1, kind: input, shape index: {}]
  %s2 = inlined_call_operand.vmem [shape: f32[1,128], index: 2, kind: input, shape index: {}]
  %s3 = inlined_call_operand.vmem [shape: f32[1568,128], index: 3, kind: output, shape index: {}]
  %s4 = sld [smem:[#allocation0]]
  $region45: #{net_forward.5} parent=0
    _
  %s6 = ssub.s32 1, %s4
  %s7 = scalar_select 0, %s6, %s4
  loop: start=0, step=1, limit=6
  $region2: #{net_forward.5} parent=0 // loop_pre_header
    _
  $region3: #{net_forward.5} parent=0 // loop_header
    %s9 = sphi 0, %s13
    %p10 = scmp.ge.s32.totalorder %s9, 6
    %s19 = sphi 0, %s21
    %s22 = sphi 0, %s19
    %s23 = sphi 0, %s22
    %s39 = sphi 0, %s23
    %s43 = sphi 0, %s43
    %s45 = sphi 0, %s43
    %s46 = sphi 0, %s45
    %s60 = sphi 0, %s46
    %s64 = sphi 0, %s64
    %s66 = sphi 0, %s64
    %s67 = sphi 0, %s66
    %s81 = sphi 0, %s67
    %s87 = sphi 0, %s89
    %s90 = sphi 0, %s87
    %s91 = sphi 0, %s90
    %s107 = sphi 0, %s91
  $region4: #{net_forward.5} parent=0 // loop_header_branch
    %12 = sbr.rel (%p10) target = $region8
  $region5: #{net_forward.5} parent=0 // loop_body
    %s14 = ssub.s32 %s9, 1
    %s15 = ssub.s32 %s9, 2
    %s16 = sadd.s32 %s9, 1
    %s17 = ssub.s32 %s9, %s16
    %p18 = scmp.eq.s32.totalorder %s17, 0
    %s20 = sadd.s32 %s19, 1
    %s21 = scalar_select %p18, %s19, %s20
    %p24 = pneg %p18
    %p25 = scmp.eq.s32.totalorder %s9, 3
    %p26 = por %p24, %p25
    %p27 = scmp.ne.s32.totalorder %s19, %s22
    %p28 = scmp.eq.s32.totalorder %s9, 0
    %p29 = por %p27, %p28
    %p30 = scmp.ne.s32.totalorder %s19, %s22
    %p31 = scmp.eq.s32.totalorder %s14, 3
    %p32 = por %p30, %p31
    %p33 = scmp.ne.s32.totalorder %s22, %s23
    %p34 = scmp.eq.s32.totalorder %s14, 0
    %p35 = por %p33, %p34
    %p36 = scmp.ne.s32.totalorder %s22, %s23
    %p37 = scmp.eq.s32.totalorder %s15, 3
    %p38 = por %p36, %p37
    %p40 = scmp.ne.s32.totalorder %s23, %s39
    %p41 = scmp.eq.s32.totalorder %s15, 0
    %p42 = por %p40, %p41
    %s44 = sadd.s32 %s43, 1
    %p47 = scmp.eq.s32.totalorder %s9, 3
    %p48 = scmp.ne.s32.totalorder %s43, %s45
    %p49 = scmp.eq.s32.totalorder %s9, 0
    %p50 = por %p48, %p49
    %p51 = scmp.ne.s32.totalorder %s43, %s45
    %p52 = scmp.eq.s32.totalorder %s14, 3
    %p53 = por %p51, %p52
    %p54 = scmp.ne.s32.totalorder %s45, %s46
    %p55 = scmp.eq.s32.totalorder %s14, 0
    %p56 = por %p54, %p55
    %p57 = scmp.ne.s32.totalorder %s45, %s46
    %p58 = scmp.eq.s32.totalorder %s15, 3
    %p59 = por %p57, %p58
    %p61 = scmp.ne.s32.totalorder %s46, %s60
    %p62 = scmp.eq.s32.totalorder %s15, 0
    %p63 = por %p61, %p62
    %s65 = sadd.s32 %s64, 1
    %p68 = scmp.eq.s32.totalorder %s9, 3
    %p69 = scmp.ne.s32.totalorder %s64, %s66
    %p70 = scmp.eq.s32.totalorder %s9, 0
    %p71 = por %p69, %p70
    %p72 = scmp.ne.s32.totalorder %s64, %s66
    %p73 = scmp.eq.s32.totalorder %s14, 3
    %p74 = por %p72, %p73
    %p75 = scmp.ne.s32.totalorder %s66, %s67
    %p76 = scmp.eq.s32.totalorder %s14, 0
    %p77 = por %p75, %p76
    %p78 = scmp.ne.s32.totalorder %s66, %s67
    %p79 = scmp.eq.s32.totalorder %s15, 3
    %p80 = por %p78, %p79
    %p82 = scmp.ne.s32.totalorder %s67, %s81
    %p83 = scmp.eq.s32.totalorder %s15, 0
    %p84 = por %p82, %p83
    %s85 = ssub.s32 %s9, %s16
    %p86 = scmp.eq.s32.totalorder %s85, 0
    %s88 = sadd.s32 %s87, 1
    %s89 = scalar_select %p86, %s87, %s88
    %p92 = pneg %p86
    %p93 = scmp.eq.s32.totalorder %s9, 3
    %p94 = por %p92, %p93
    %p95 = scmp.ne.s32.totalorder %s87, %s90
    %p96 = scmp.eq.s32.totalorder %s9, 0
    %p97 = por %p95, %p96
    %p98 = scmp.ne.s32.totalorder %s87, %s90
    %p99 = scmp.eq.s32.totalorder %s14, 3
    %p100 = por %p98, %p99
    %p101 = scmp.ne.s32.totalorder %s90, %s91
    %p102 = scmp.eq.s32.totalorder %s14, 0
    %p103 = por %p101, %p102
    %p104 = scmp.ne.s32.totalorder %s90, %s91
    %p105 = scmp.eq.s32.totalorder %s15, 3
    %p106 = por %p104, %p105
    %p108 = scmp.ne.s32.totalorder %s91, %s107
    %p109 = scmp.eq.s32.totalorder %s15, 0
    %p110 = por %p108, %p109
    %p111 = scmp.le.s32.totalorder 1, %s9
    %p112 = scmp.lt.s32.totalorder %s9, 5
    %p113 = pnand %p111, %p112
    %p114 = pneg %p113
    // Predicated region
    $region9: #{net_forward.5} parent=5 // pred_check
      _
    $region10: #{net_forward.5} parent=5 // pred_check_branch
      %116 = sbr.rel (%p113) target = $region12
    $region11: #{net_forward.5} parent=5 // pred_region
      %s117 = ssub.s32 %s9, 1
      // Predicated region
      $region13: #{net_forward.5} parent=11 // pred_check
        %p118 = pneg %p56
      $region14: #{net_forward.5} parent=11 // pred_check_branch
        %120 = sbr.rel (%p118) target = $region16
      $region15: #{net_forward.5} parent=11 // pred_region
        _
      $region16: #{net_forward.5} parent=11 // pred_fallthru
        _
      // Predicated region
      $region17: #{net_forward.5} parent=11 // pred_check
        %p121 = pneg %p77
      $region18: #{net_forward.5} parent=11 // pred_check_branch
        %123 = sbr.rel (%p121) target = $region20
      $region19: #{net_forward.5} parent=11 // pred_region
        _
      $region20: #{net_forward.5} parent=11 // pred_fallthru
        _
    $region12: #{net_forward.5} parent=5 // pred_fallthru
      _
    %p124 = scmp.lt.s32.totalorder %s9, 4
    // Predicated region
    $region21: #{net_forward.5} parent=5 // pred_check
      %p125 = pneg %p124
    $region22: #{net_forward.5} parent=5 // pred_check_branch
      %127 = sbr.rel (%p125) target = $region24
    $region23: #{net_forward.5} parent=5 // pred_region
      // Predicated region
      $region25: #{net_forward.5} parent=23 // pred_check
        %p128 = pneg %p29
      $region26: #{net_forward.5} parent=23 // pred_check_branch
        %130 = sbr.rel (%p128) target = $region28
      $region27: #{net_forward.5} parent=23 // pred_region
        %s131 = smul.u32 49, %s9
        %p132 = scmp.lt.s32.totalorder %s131, 195
        %s133 = scalar_select %p132, %s131, 195
        %s134 = smul.addr %s133, 2
        %s135 = smul.addr %s134, 4
        %s136 = scalar_lea.vmem %s0, %s135
        %s137 = smul.u32 49, %s9
      $region28: #{net_forward.5} parent=23 // pred_fallthru
        _
    $region24: #{net_forward.5} parent=5 // pred_fallthru
      _
    %p138 = scmp.le.s32.totalorder 1, %s9
    %p139 = scmp.lt.s32.totalorder %s9, 5
    %p140 = pnand %p138, %p139
    %p141 = pneg %p140
    // Predicated region
    $region29: #{net_forward.5} parent=5 // pred_check
      _
    $region30: #{net_forward.5} parent=5 // pred_check_branch
      %143 = sbr.rel (%p140) target = $region32
    $region31: #{net_forward.5} parent=5 // pred_region
      %s144 = ssub.s32 %s9, 1
      %s145 = smul.u32 49, %s14
      %p146 = scmp.lt.s32.totalorder %s145, 195
      %s147 = scalar_select %p146, %s145, 195
      %s148 = smul.addr %s147, 2
      %s149 = smul.addr %s148, 4
      %s150 = scalar_lea.vmem %s0, %s149
      %p151 = pneg %p35
      %p152 = pneg %p32
      %p153 = pneg %p56
      %p154 = pneg %p53
      %p155 = pneg %p77
      %p156 = pneg %p74
      %p157 = pneg %p103
      %p158 = pneg %p100
      %s159 = smul.u32 49, %s14
      %p160 = scmp.lt.s32.totalorder %s159, 195
      %s161 = scalar_select %p160, %s159, 195
      %s162 = smul.addr %s161, 8
      %s163 = scalar_lea.vmem %s3, %s162
      %s164 = smul.u32 49, %s14
      %p165 = scmp.lt.s32.totalorder %s164, 195
      %s166 = scalar_select %p165, %s164, 195
      %s167 = smul.addr %s166, 2
      %s168 = smul.addr %s167, 4
      %s169 = scalar_lea.vmem %s0, %s168
      %s170 = smul.u32 49, %s14
      %s171 = smul.u32 49, %s14
      %p172 = scmp.lt.s32.totalorder %s171, 195
      %s173 = scalar_select %p172, %s171, 195
      %s174 = smul.addr %s173, 8
      %s175 = scalar_lea.vmem %s3, %s174
      %s176 = smul.u32 49, %s14
      %v178 = vld [vmem:[%s169] sm:$0xff]
      %v179 = vld [vmem:[%s169 + $0x8] sm:$0xff]
      %v180 = vld [vmem:[%s169 + $0x10] sm:$0xff]
      %v181 = vld [vmem:[%s169 + $0x18] sm:$0xff]
      %v182 = vld [vmem:[%s169 + $0x20] sm:$0xff]
      %v183 = vld [vmem:[%s169 + $0x28] sm:$0xff]
      %v184 = vld [vmem:[%s169 + $0x30] sm:$0xff]
      %v185 = vld [vmem:[%s169 + $0x38] sm:$0xff]
      %v186 = vld [vmem:[%s169 + $0x40] sm:$0xff]
      %v187 = vld [vmem:[%s169 + $0x48] sm:$0xff]
      %v188 = vld [vmem:[%s169 + $0x50] sm:$0xff]
      %v189 = vld [vmem:[%s169 + $0x58] sm:$0xff]
      %v190 = vld [vmem:[%s169 + $0x60] sm:$0xff]
      %v191 = vld [vmem:[%s169 + $0x68] sm:$0xff]
      %v192 = vld [vmem:[%s169 + $0x70] sm:$0xff]
      %v193 = vld [vmem:[%s169 + $0x78] sm:$0xff]
      %v194 = vld [vmem:[%s169 + $0x80] sm:$0xff]
      %v195 = vld [vmem:[%s169 + $0x88] sm:$0xff]
      %v196 = vld [vmem:[%s169 + $0x90] sm:$0xff]
      %v197 = vld [vmem:[%s169 + $0x98] sm:$0xff]
      %v198 = vld [vmem:[%s169 + $0xa0] sm:$0xff]
      %v199 = vld [vmem:[%s169 + $0xa8] sm:$0xff]
      %v200 = vld [vmem:[%s169 + $0xb0] sm:$0xff]
      %v201 = vld [vmem:[%s169 + $0xb8] sm:$0xff]
      %v202 = vld [vmem:[%s169 + $0xc0] sm:$0xff]
      %v203 = vld [vmem:[%s169 + $0xc8] sm:$0xff]
      %v204 = vld [vmem:[%s169 + $0xd0] sm:$0xff]
      %v205 = vld [vmem:[%s169 + $0xd8] sm:$0xff]
      %v206 = vld [vmem:[%s169 + $0xe0] sm:$0xff]
      %v207 = vld [vmem:[%s169 + $0xe8] sm:$0xff]
      %v208 = vld [vmem:[%s169 + $0xf0] sm:$0xff]
      %v209 = vld [vmem:[%s169 + $0xf8] sm:$0xff]
      %v210 = vld [vmem:[%s169 + $0x100] sm:$0xff]
      %v211 = vld [vmem:[%s169 + $0x108] sm:$0xff]
      %v212 = vld [vmem:[%s169 + $0x110] sm:$0xff]
      %v213 = vld [vmem:[%s169 + $0x118] sm:$0xff]
      %v214 = vld [vmem:[%s169 + $0x120] sm:$0xff]
      %v215 = vld [vmem:[%s169 + $0x128] sm:$0xff]
      %v216 = vld [vmem:[%s169 + $0x130] sm:$0xff]
      %v217 = vld [vmem:[%s169 + $0x138] sm:$0xff]
      %v218 = vld [vmem:[%s169 + $0x140] sm:$0xff]
      %v219 = vld [vmem:[%s169 + $0x148] sm:$0xff]
      %v220 = vld [vmem:[%s169 + $0x150] sm:$0xff]
      %v221 = vld [vmem:[%s169 + $0x158] sm:$0xff]
      %v222 = vld [vmem:[%s169 + $0x160] sm:$0xff]
      %v223 = vld [vmem:[%s169 + $0x168] sm:$0xff]
      %v224 = vld [vmem:[%s169 + $0x170] sm:$0xff]
      %v225 = vld [vmem:[%s169 + $0x178] sm:$0xff]
      %v226 = vld [vmem:[%s169 + $0x180] sm:$0xff]
      %v227 = vld [vmem:[%s1] sm:$0xf]
      %v228 = vld [vmem:[%s1 + $0x4] sm:$0xf]
      %v229 = vld [vmem:[%s1 + $0x8] sm:$0xf]
      %v230 = vld [vmem:[%s1 + $0xc] sm:$0xf]
      %v231 = vld [vmem:[%s1 + $0x10] sm:$0xf]
      %v232 = vld [vmem:[%s1 + $0x14] sm:$0xf]
      %v233 = vld [vmem:[%s1 + $0x18] sm:$0xf]
      %v234 = vld [vmem:[%s1 + $0x1c] sm:$0xf]
      %v235 = vld [vmem:[%s1 + $0x20] sm:$0xf]
      %v236 = vld [vmem:[%s1 + $0x24] sm:$0xf]
      %v237 = vld [vmem:[%s1 + $0x28] sm:$0xf]
      %v238 = vld [vmem:[%s1 + $0x2c] sm:$0xf]
      %v239 = vld [vmem:[%s1 + $0x30] sm:$0xf]
      %v240 = vld [vmem:[%s1 + $0x34] sm:$0xf]
      %v241 = vld [vmem:[%s1 + $0x38] sm:$0xf]
      %v242 = vld [vmem:[%s1 + $0x3c] sm:$0xf]
      %v243 = vld [vmem:[%s1 + $0x40] sm:$0xf]
      %v244 = vld [vmem:[%s1 + $0x44] sm:$0xf]
      %v245 = vld [vmem:[%s1 + $0x48] sm:$0xf]
      %v246 = vld [vmem:[%s1 + $0x4c] sm:$0xf]
      %v247 = vld [vmem:[%s1 + $0x50] sm:$0xf]
      %v248 = vld [vmem:[%s1 + $0x54] sm:$0xf]
      %v249 = vld [vmem:[%s1 + $0x58] sm:$0xf]
      %v250 = vld [vmem:[%s1 + $0x5c] sm:$0xf]
      %v251 = vld [vmem:[%s1 + $0x60] sm:$0xf]
      %v252 = vld [vmem:[%s2] sm:$0x1]
      %v254 = vlaneseq
      %v255 = vshrl.u32 %v254, 7
      %v256 = vsub.s32 0, %v255
      %v257 = vrot.slane %v252, %v256
      %v308 = vunpack.c.l.b16 %v178
      %v309 = vunpack.c.h.b16 %v178
      %v310 = vunpack.c.l.b16 %v179
      %v311 = vunpack.c.h.b16 %v179
      %v312 = vunpack.c.l.b16 %v180
      %v313 = vunpack.c.h.b16 %v180
      %v314 = vunpack.c.l.b16 %v181
      %v315 = vunpack.c.h.b16 %v181
      %v316 = vunpack.c.l.b16 %v182
      %v317 = vunpack.c.h.b16 %v182
      %v318 = vunpack.c.l.b16 %v183
      %v319 = vunpack.c.h.b16 %v183
      %v320 = vunpack.c.l.b16 %v184
      %v321 = vunpack.c.h.b16 %v184
      %v322 = vunpack.c.l.b16 %v185
      %v323 = vunpack.c.h.b16 %v185
      %v324 = vunpack.c.l.b16 %v186
      %v325 = vunpack.c.h.b16 %v186
      %v326 = vunpack.c.l.b16 %v187
      %v327 = vunpack.c.h.b16 %v187
      %v328 = vunpack.c.l.b16 %v188
      %v329 = vunpack.c.h.b16 %v188
      %v330 = vunpack.c.l.b16 %v189
      %v331 = vunpack.c.h.b16 %v189
      %v332 = vunpack.c.l.b16 %v190
      %v333 = vunpack.c.h.b16 %v190
      %v334 = vunpack.c.l.b16 %v191
      %v335 = vunpack.c.h.b16 %v191
      %v336 = vunpack.c.l.b16 %v192
      %v337 = vunpack.c.h.b16 %v192
      %v338 = vunpack.c.l.b16 %v193
      %v339 = vunpack.c.h.b16 %v193
      %v340 = vunpack.c.l.b16 %v194
      %v341 = vunpack.c.h.b16 %v194
      %v342 = vunpack.c.l.b16 %v195
      %v343 = vunpack.c.h.b16 %v195
      %v344 = vunpack.c.l.b16 %v196
      %v345 = vunpack.c.h.b16 %v196
      %v346 = vunpack.c.l.b16 %v197
      %v347 = vunpack.c.h.b16 %v197
      %v348 = vunpack.c.l.b16 %v198
      %v349 = vunpack.c.h.b16 %v198
      %v350 = vunpack.c.l.b16 %v199
      %v351 = vunpack.c.h.b16 %v199
      %v352 = vunpack.c.l.b16 %v200
      %v353 = vunpack.c.h.b16 %v200
      %v354 = vunpack.c.l.b16 %v201
      %v355 = vunpack.c.h.b16 %v201
      %v356 = vunpack.c.l.b16 %v202
      %v357 = vunpack.c.h.b16 %v202
      %v358 = vunpack.c.l.b16 %v203
      %v359 = vunpack.c.h.b16 %v203
      %v360 = vunpack.c.l.b16 %v204
      %v361 = vunpack.c.h.b16 %v204
      %v362 = vunpack.c.l.b16 %v205
      %v363 = vunpack.c.h.b16 %v205
      %v364 = vunpack.c.l.b16 %v206
      %v365 = vunpack.c.h.b16 %v206
      %v366 = vunpack.c.l.b16 %v207
      %v367 = vunpack.c.h.b16 %v207
      %v368 = vunpack.c.l.b16 %v208
      %v369 = vunpack.c.h.b16 %v208
      %v370 = vunpack.c.l.b16 %v209
      %v371 = vunpack.c.h.b16 %v209
      %v372 = vunpack.c.l.b16 %v210
      %v373 = vunpack.c.h.b16 %v210
      %v374 = vunpack.c.l.b16 %v211
      %v375 = vunpack.c.h.b16 %v211
      %v376 = vunpack.c.l.b16 %v212
      %v377 = vunpack.c.h.b16 %v212
      %v378 = vunpack.c.l.b16 %v213
      %v379 = vunpack.c.h.b16 %v213
      %v380 = vunpack.c.l.b16 %v214
      %v381 = vunpack.c.h.b16 %v214
      %v382 = vunpack.c.l.b16 %v215
      %v383 = vunpack.c.h.b16 %v215
      %v384 = vunpack.c.l.b16 %v216
      %v385 = vunpack.c.h.b16 %v216
      %v386 = vunpack.c.l.b16 %v217
      %v387 = vunpack.c.h.b16 %v217
      %v388 = vunpack.c.l.b16 %v218
      %v389 = vunpack.c.h.b16 %v218
      %v390 = vunpack.c.l.b16 %v219
      %v391 = vunpack.c.h.b16 %v219
      %v392 = vunpack.c.l.b16 %v220
      %v393 = vunpack.c.h.b16 %v220
      %v394 = vunpack.c.l.b16 %v221
      %v395 = vunpack.c.h.b16 %v221
      %v396 = vunpack.c.l.b16 %v222
      %v397 = vunpack.c.h.b16 %v222
      %v398 = vunpack.c.l.b16 %v223
      %v399 = vunpack.c.h.b16 %v223
      %v400 = vunpack.c.l.b16 %v224
      %v401 = vunpack.c.h.b16 %v224
      %v402 = vunpack.c.l.b16 %v225
      %v403 = vunpack.c.h.b16 %v225
      %v404 = vunpack.c.l.b16 %v226
      %v405 = vunpack.c.h.b16 %v226
      %v406 = vpack.c.b16 %v310, %v308
      %v407 = vpack.c.b16 %v311, %v309
      %v408 = vpack.c.b16 %v314, %v312
      %v409 = vpack.c.b16 %v315, %v313
      %v410 = vpack.c.b16 %v318, %v316
      %v411 = vpack.c.b16 %v319, %v317
      %v412 = vpack.c.b16 %v322, %v320
      %v413 = vpack.c.b16 %v323, %v321
      %v414 = vpack.c.b16 %v326, %v324
      %v415 = vpack.c.b16 %v327, %v325
      %v416 = vpack.c.b16 %v330, %v328
      %v417 = vpack.c.b16 %v331, %v329
      %v418 = vpack.c.b16 %v334, %v332
      %v419 = vpack.c.b16 %v335, %v333
      %v420 = vpack.c.b16 %v338, %v336
      %v421 = vpack.c.b16 %v339, %v337
      %v422 = vpack.c.b16 %v342, %v340
      %v423 = vpack.c.b16 %v343, %v341
      %v424 = vpack.c.b16 %v346, %v344
      %v425 = vpack.c.b16 %v347, %v345
      %v426 = vpack.c.b16 %v350, %v348
      %v427 = vpack.c.b16 %v351, %v349
      %v428 = vpack.c.b16 %v354, %v352
      %v429 = vpack.c.b16 %v355, %v353
      %v430 = vpack.c.b16 %v358, %v356
      %v431 = vpack.c.b16 %v359, %v357
      %v432 = vpack.c.b16 %v362, %v360
      %v433 = vpack.c.b16 %v363, %v361
      %v434 = vpack.c.b16 %v366, %v364
      %v435 = vpack.c.b16 %v367, %v365
      %v436 = vpack.c.b16 %v370, %v368
      %v437 = vpack.c.b16 %v371, %v369
      %v438 = vpack.c.b16 %v374, %v372
      %v439 = vpack.c.b16 %v375, %v373
      %v440 = vpack.c.b16 %v378, %v376
      %v441 = vpack.c.b16 %v379, %v377
      %v442 = vpack.c.b16 %v382, %v380
      %v443 = vpack.c.b16 %v383, %v381
      %v444 = vpack.c.b16 %v386, %v384
      %v445 = vpack.c.b16 %v387, %v385
      %v446 = vpack.c.b16 %v390, %v388
      %v447 = vpack.c.b16 %v391, %v389
      %v448 = vpack.c.b16 %v394, %v392
      %v449 = vpack.c.b16 %v395, %v393
      %v450 = vpack.c.b16 %v398, %v396
      %v451 = vpack.c.b16 %v399, %v397
      %v452 = vpack.c.b16 %v402, %v400
      %v453 = vpack.c.b16 %v403, %v401
      %v454 = vpack.c.b16 %v404, %v404
      %v455 = vpack.c.b16 %v405, %v405
      %v506 = vunpack.c.l.b16 %v227
      %v507 = vunpack.c.l.b16 %v228
      %v508 = vunpack.c.l.b16 %v229
      %v509 = vunpack.c.l.b16 %v230
      %v510 = vunpack.c.l.b16 %v231
      %v511 = vunpack.c.l.b16 %v232
      %v512 = vunpack.c.l.b16 %v233
      %v513 = vunpack.c.l.b16 %v234
      %v514 = vunpack.c.l.b16 %v235
      %v515 = vunpack.c.l.b16 %v236
      %v516 = vunpack.c.l.b16 %v237
      %v517 = vunpack.c.l.b16 %v238
      %v518 = vunpack.c.l.b16 %v239
      %v519 = vunpack.c.l.b16 %v240
      %v520 = vunpack.c.l.b16 %v241
      %v521 = vunpack.c.l.b16 %v242
      %v522 = vunpack.c.l.b16 %v243
      %v523 = vunpack.c.l.b16 %v244
      %v524 = vunpack.c.l.b16 %v245
      %v525 = vunpack.c.l.b16 %v246
      %v526 = vunpack.c.l.b16 %v247
      %v527 = vunpack.c.l.b16 %v248
      %v528 = vunpack.c.l.b16 %v249
      %v529 = vunpack.c.l.b16 %v250
      %v530 = vunpack.c.l.b16 %v251
      %v531 = vpack.c.b16 %v507, %v506
      %v532 = vpack.c.b16 %v509, %v508
      %v533 = vpack.c.b16 %v511, %v510
      %v534 = vpack.c.b16 %v513, %v512
      %v535 = vpack.c.b16 %v515, %v514
      %v536 = vpack.c.b16 %v517, %v516
      %v537 = vpack.c.b16 %v519, %v518
      %v538 = vpack.c.b16 %v521, %v520
      %v539 = vpack.c.b16 %v523, %v522
      %v540 = vpack.c.b16 %v525, %v524
      %v541 = vpack.c.b16 %v527, %v526
      %v542 = vpack.c.b16 %v529, %v528
      %v543 = vpack.c.b16 %v530, %v530
      %vm556 = vcmask 588800
      %v558 = vsel %vm556, %v407, 0
      %v561 = vsel %vm556, %v409, 0
      %v564 = vsel %vm556, %v411, 0
      %v567 = vsel %vm556, %v413, 0
      %v570 = vsel %vm556, %v415, 0
      %v573 = vsel %vm556, %v417, 0
      %v576 = vsel %vm556, %v419, 0
      %v579 = vsel %vm556, %v421, 0
      %v582 = vsel %vm556, %v423, 0
      %v585 = vsel %vm556, %v425, 0
      %v588 = vsel %vm556, %v427, 0
      %v591 = vsel %vm556, %v429, 0
      %v594 = vsel %vm556, %v431, 0
      %v597 = vsel %vm556, %v433, 0
      %v600 = vsel %vm556, %v435, 0
      %v603 = vsel %vm556, %v437, 0
      %v606 = vsel %vm556, %v439, 0
      %v609 = vsel %vm556, %v441, 0
      %v612 = vsel %vm556, %v443, 0
      %v615 = vsel %vm556, %v445, 0
      %v618 = vsel %vm556, %v447, 0
      %v621 = vsel %vm556, %v449, 0
      %v624 = vsel %vm556, %v451, 0
      %v627 = vsel %vm556, %v453, 0
      %v630 = vsel %vm556, %v455, 0
      %vm632 = vcmask 1043456
      %v634 = vsel %vm632, %v543, 0
      %636 = vmatprep.subr.bf16.mxu0 0
      %637 = vmatpush1.bf16.msra.mxu0 %v531
      %638 = vmatprep.subr.bf16.mxu0 0
      %639 = vmatpush1.bf16.msra.mxu0 %v532
      %640 = vmatprep.subr.bf16.mxu0 0
      %641 = vmatpush1.bf16.msra.mxu0 %v533
      %642 = vmatprep.subr.bf16.mxu0 0
      %643 = vmatpush1.bf16.msra.mxu0 %v534
      %644 = vmatprep.subr.bf16.mxu0 0
      %645 = vmatpush1.bf16.msra.mxu0 %v535
      %646 = vmatprep.subr.bf16.mxu0 0
      %647 = vmatpush1.bf16.msra.mxu0 %v536
      %648 = vmatprep.subr.bf16.mxu0 0
      %649 = vmatpush1.bf16.msra.mxu0 %v537
      %650 = vmatprep.subr.bf16.mxu0 0
      %651 = vmatpush1.bf16.msra.mxu0 %v538
      %652 = vmatprep.subr.bf16.mxu0 0
      %653 = vmatpush1.bf16.msra.mxu0 %v539
      %654 = vmatprep.subr.bf16.mxu0 0
      %655 = vmatpush1.bf16.msra.mxu0 %v540
      %656 = vmatprep.subr.bf16.mxu0 0
      %657 = vmatpush1.bf16.msra.mxu0 %v541
      %658 = vmatprep.subr.bf16.mxu0 0
      %659 = vmatpush1.bf16.msra.mxu0 %v542
      %660 = vmatprep.subr.bf16.mxu0 0
      %661 = vmatpush1.bf16.msra.mxu0 %v634
      %662 = vmatprep.subr.bf16.mxu0 0
      %663 = vmatpush1.bf16.msra.mxu0 0
      %664 = vmatprep.subr.bf16.mxu0 0
      %665 = vmatpush1.bf16.msra.mxu0 0
      %666 = vmatprep.subr.bf16.mxu0 0
      %667 = vmatpush1.bf16.msra.mxu0 0
      %668 = vmatprep.mubr.bf16.mxu0 %v558
      %669 = vmatmul.mubr.bf16.gmra.mrb[0].mxu0 %v406
      %v670 = vpop.f32.mrb[0].mxu0
      %v671 = vadd.f32 %v257, %v670
      %v672 = vpop.f32.mrb[0].mxu0
      %v673 = vpop.f32.mrb[0].mxu0
      %v674 = vadd.f32 %v257, %v673
      %v675 = vpop.f32.mrb[0].mxu0
      %676 = vmatprep.mubr.bf16.mxu0 %v561
      %677 = vmatmul.mubr.bf16.gmra.mrb[0].mxu0 %v408
      %v678 = vpop.f32.mrb[0].mxu0
      %v679 = vadd.f32 %v257, %v678
      %v680 = vpop.f32.mrb[0].mxu0
      %v681 = vpop.f32.mrb[0].mxu0
      %v682 = vadd.f32 %v257, %v681
      %v683 = vpop.f32.mrb[0].mxu0
      %684 = vmatprep.mubr.bf16.mxu0 %v564
      %685 = vmatmul.mubr.bf16.gmra.mrb[0].mxu0 %v410
      %v686 = vpop.f32.mrb[0].mxu0
      %v687 = vadd.f32 %v257, %v686
      %v688 = vpop.f32.mrb[0].mxu0
      %v689 = vpop.f32.mrb[0].mxu0
      %v690 = vadd.f32 %v257, %v689
      %v691 = vpop.f32.mrb[0].mxu0
      %692 = vmatprep.mubr.bf16.mxu0 %v567
      %693 = vmatmul.mubr.bf16.gmra.mrb[0].mxu0 %v412
      %v694 = vpop.f32.mrb[0].mxu0
      %v695 = vadd.f32 %v257, %v694
      %v696 = vpop.f32.mrb[0].mxu0
      %v697 = vpop.f32.mrb[0].mxu0
      %v698 = vadd.f32 %v257, %v697
      %v699 = vpop.f32.mrb[0].mxu0
      %700 = vmatprep.mubr.bf16.mxu0 %v570
      %701 = vmatmul.mubr.bf16.gmra.mrb[0].mxu0 %v414
      %v702 = vpop.f32.mrb[0].mxu0
      %v703 = vadd.f32 %v257, %v702
      %v704 = vpop.f32.mrb[0].mxu0
      %v705 = vpop.f32.mrb[0].mxu0
      %v706 = vadd.f32 %v257, %v705
      %v707 = vpop.f32.mrb[0].mxu0
      %708 = vmatprep.mubr.bf16.mxu0 %v573
      %709 = vmatmul.mubr.bf16.gmra.mrb[0].mxu0 %v416
      %v710 = vpop.f32.mrb[0].mxu0
      %v711 = vadd.f32 %v257, %v710
      %v712 = vpop.f32.mrb[0].mxu0
      %v713 = vpop.f32.mrb[0].mxu0
      %v714 = vadd.f32 %v257, %v713
      %v715 = vpop.f32.mrb[0].mxu0
      %716 = vmatprep.mubr.bf16.mxu0 %v576
      %717 = vmatmul.mubr.bf16.gmra.mrb[0].mxu0 %v418
      %v718 = vpop.f32.mrb[0].mxu0
      %v719 = vadd.f32 %v257, %v718
      %v720 = vpop.f32.mrb[0].mxu0
      %v721 = vpop.f32.mrb[0].mxu0
      %v722 = vadd.f32 %v257, %v721
      %v723 = vpop.f32.mrb[0].mxu0
      %724 = vmatprep.mubr.bf16.mxu0 %v579
      %725 = vmatmul.mubr.bf16.gmra.mrb[0].mxu0 %v420
      %v726 = vpop.f32.mrb[0].mxu0
      %v727 = vadd.f32 %v257, %v726
      %v728 = vpop.f32.mrb[0].mxu0
      %v729 = vpop.f32.mrb[0].mxu0
      %v730 = vadd.f32 %v257, %v729
      %v731 = vpop.f32.mrb[0].mxu0
      %732 = vmatprep.mubr.bf16.mxu0 %v582
      %733 = vmatmul.mubr.bf16.gmra.mrb[0].mxu0 %v422
      %v734 = vpop.f32.mrb[0].mxu0
      %v735 = vadd.f32 %v257, %v734
      %v736 = vpop.f32.mrb[0].mxu0
      %v737 = vpop.f32.mrb[0].mxu0
      %v738 = vadd.f32 %v257, %v737
      %v739 = vpop.f32.mrb[0].mxu0
      %740 = vmatprep.mubr.bf16.mxu0 %v585
      %741 = vmatmul.mubr.bf16.gmra.mrb[0].mxu0 %v424
      %v742 = vpop.f32.mrb[0].mxu0
      %v743 = vadd.f32 %v257, %v742
      %v744 = vpop.f32.mrb[0].mxu0
      %v745 = vpop.f32.mrb[0].mxu0
      %v746 = vadd.f32 %v257, %v745
      %v747 = vpop.f32.mrb[0].mxu0
      %748 = vmatprep.mubr.bf16.mxu0 %v588
      %749 = vmatmul.mubr.bf16.gmra.mrb[0].mxu0 %v426
      %v750 = vpop.f32.mrb[0].mxu0
      %v751 = vadd.f32 %v257, %v750
      %v752 = vpop.f32.mrb[0].mxu0
      %v753 = vpop.f32.mrb[0].mxu0
      %v754 = vadd.f32 %v257, %v753
      %v755 = vpop.f32.mrb[0].mxu0
      %756 = vmatprep.mubr.bf16.mxu0 %v591
      %757 = vmatmul.mubr.bf16.gmra.mrb[0].mxu0 %v428
      %v758 = vpop.f32.mrb[0].mxu0
      %v759 = vadd.f32 %v257, %v758
      %v760 = vpop.f32.mrb[0].mxu0
      %v761 = vpop.f32.mrb[0].mxu0
      %v762 = vadd.f32 %v257, %v761
      %v763 = vpop.f32.mrb[0].mxu0
      %764 = vmatprep.mubr.bf16.mxu0 %v594
      %765 = vmatmul.mubr.bf16.gmra.mrb[0].mxu0 %v430
      %v766 = vpop.f32.mrb[0].mxu0
      %v767 = vadd.f32 %v257, %v766
      %v768 = vpop.f32.mrb[0].mxu0
      %v769 = vpop.f32.mrb[0].mxu0
      %v770 = vadd.f32 %v257, %v769
      %v771 = vpop.f32.mrb[0].mxu0
      %772 = vmatprep.mubr.bf16.mxu0 %v597
      %773 = vmatmul.mubr.bf16.gmra.mrb[0].mxu0 %v432
      %v774 = vpop.f32.mrb[0].mxu0
      %v775 = vadd.f32 %v257, %v774
      %v776 = vpop.f32.mrb[0].mxu0
      %v777 = vpop.f32.mrb[0].mxu0
      %v778 = vadd.f32 %v257, %v777
      %v779 = vpop.f32.mrb[0].mxu0
      %780 = vmatprep.mubr.bf16.mxu0 %v600
      %781 = vmatmul.mubr.bf16.gmra.mrb[0].mxu0 %v434
      %v782 = vpop.f32.mrb[0].mxu0
      %v783 = vadd.f32 %v257, %v782
      %v784 = vpop.f32.mrb[0].mxu0
      %v785 = vpop.f32.mrb[0].mxu0
      %v786 = vadd.f32 %v257, %v785
      %v787 = vpop.f32.mrb[0].mxu0
      %788 = vmatprep.mubr.bf16.mxu0 %v603
      %789 = vmatmul.mubr.bf16.gmra.mrb[0].mxu0 %v436
      %v790 = vpop.f32.mrb[0].mxu0
      %v791 = vadd.f32 %v257, %v790
      %v792 = vpop.f32.mrb[0].mxu0
      %v793 = vpop.f32.mrb[0].mxu0
      %v794 = vadd.f32 %v257, %v793
      %v795 = vpop.f32.mrb[0].mxu0
      %796 = vmatprep.mubr.bf16.mxu0 %v606
      %797 = vmatmul.mubr.bf16.gmra.mrb[0].mxu0 %v438
      %v798 = vpop.f32.mrb[0].mxu0
      %v799 = vadd.f32 %v257, %v798
      %v800 = vpop.f32.mrb[0].mxu0
      %v801 = vpop.f32.mrb[0].mxu0
      %v802 = vadd.f32 %v257, %v801
      %v803 = vpop.f32.mrb[0].mxu0
      %804 = vmatprep.mubr.bf16.mxu0 %v609
      %805 = vmatmul.mubr.bf16.gmra.mrb[0].mxu0 %v440
      %v806 = vpop.f32.mrb[0].mxu0
      %v807 = vadd.f32 %v257, %v806
      %v808 = vpop.f32.mrb[0].mxu0
      %v809 = vpop.f32.mrb[0].mxu0
      %v810 = vadd.f32 %v257, %v809
      %v811 = vpop.f32.mrb[0].mxu0
      %812 = vmatprep.mubr.bf16.mxu0 %v612
      %813 = vmatmul.mubr.bf16.gmra.mrb[0].mxu0 %v442
      %v814 = vpop.f32.mrb[0].mxu0
      %v815 = vadd.f32 %v257, %v814
      %v816 = vpop.f32.mrb[0].mxu0
      %v817 = vpop.f32.mrb[0].mxu0
      %v818 = vadd.f32 %v257, %v817
      %v819 = vpop.f32.mrb[0].mxu0
      %820 = vmatprep.mubr.bf16.mxu0 %v615
      %821 = vmatmul.mubr.bf16.gmra.mrb[0].mxu0 %v444
      %v822 = vpop.f32.mrb[0].mxu0
      %v823 = vadd.f32 %v257, %v822
      %v824 = vpop.f32.mrb[0].mxu0
      %v825 = vpop.f32.mrb[0].mxu0
      %v826 = vadd.f32 %v257, %v825
      %v827 = vpop.f32.mrb[0].mxu0
      %828 = vmatprep.mubr.bf16.mxu0 %v618
      %829 = vmatmul.mubr.bf16.gmra.mrb[0].mxu0 %v446
      %v830 = vpop.f32.mrb[0].mxu0
      %v831 = vadd.f32 %v257, %v830
      %v832 = vpop.f32.mrb[0].mxu0
      %v833 = vpop.f32.mrb[0].mxu0
      %v834 = vadd.f32 %v257, %v833
      %v835 = vpop.f32.mrb[0].mxu0
      %836 = vmatprep.mubr.bf16.mxu0 %v621
      %837 = vmatmul.mubr.bf16.gmra.mrb[0].mxu0 %v448
      %v838 = vpop.f32.mrb[0].mxu0
      %v839 = vadd.f32 %v257, %v838
      %v840 = vpop.f32.mrb[0].mxu0
      %v841 = vpop.f32.mrb[0].mxu0
      %v842 = vadd.f32 %v257, %v841
      %v843 = vpop.f32.mrb[0].mxu0
      %844 = vmatprep.mubr.bf16.mxu0 %v624
      %845 = vmatmul.mubr.bf16.gmra.mrb[0].mxu0 %v450
      %v846 = vpop.f32.mrb[0].mxu0
      %v847 = vadd.f32 %v257, %v846
      %v848 = vpop.f32.mrb[0].mxu0
      %v849 = vpop.f32.mrb[0].mxu0
      %v850 = vadd.f32 %v257, %v849
      %v851 = vpop.f32.mrb[0].mxu0
      %852 = vmatprep.mubr.bf16.mxu0 %v627
      %853 = vmatmul.mubr.bf16.gmra.mrb[0].mxu0 %v452
      %v854 = vpop.f32.mrb[0].mxu0
      %v855 = vadd.f32 %v257, %v854
      %v856 = vpop.f32.mrb[0].mxu0
      %v857 = vpop.f32.mrb[0].mxu0
      %v858 = vadd.f32 %v257, %v857
      %v859 = vpop.f32.mrb[0].mxu0
      %860 = vmatprep.mubr.bf16.mxu0 %v630
      %861 = vmatmul.mubr.bf16.gmra.mrb[0].mxu0 %v454
      %v862 = vpop.f32.mrb[0].mxu0
      %v863 = vadd.f32 %v257, %v862
      %v864 = vpop.f32.mrb[0].mxu0
      %v865 = vpop.f32.mrb[0].mxu0
      %v866 = vpop.f32.mrb[0].mxu0
      %867 = vdwg.mxu0
      %v868 = vmax.f32 %v671, 0.0
      %v869 = vmax.f32 %v674, 0.0
      %v870 = vmax.f32 %v679, 0.0
      %v871 = vmax.f32 %v682, 0.0
      %v872 = vmax.f32 %v687, 0.0
      %v873 = vmax.f32 %v690, 0.0
      %v874 = vmax.f32 %v695, 0.0
      %v875 = vmax.f32 %v698, 0.0
      %v876 = vmax.f32 %v703, 0.0
      %v877 = vmax.f32 %v706, 0.0
      %v878 = vmax.f32 %v711, 0.0
      %v879 = vmax.f32 %v714, 0.0
      %v880 = vmax.f32 %v719, 0.0
      %v881 = vmax.f32 %v722, 0.0
      %v882 = vmax.f32 %v727, 0.0
      %v883 = vmax.f32 %v730, 0.0
      %v884 = vmax.f32 %v735, 0.0
      %v885 = vmax.f32 %v738, 0.0
      %v886 = vmax.f32 %v743, 0.0
      %v887 = vmax.f32 %v746, 0.0
      %v888 = vmax.f32 %v751, 0.0
      %v889 = vmax.f32 %v754, 0.0
      %v890 = vmax.f32 %v759, 0.0
      %v891 = vmax.f32 %v762, 0.0
      %v892 = vmax.f32 %v767, 0.0
      %v893 = vmax.f32 %v770, 0.0
      %v894 = vmax.f32 %v775, 0.0
      %v895 = vmax.f32 %v778, 0.0
      %v896 = vmax.f32 %v783, 0.0
      %v897 = vmax.f32 %v786, 0.0
      %v898 = vmax.f32 %v791, 0.0
      %v899 = vmax.f32 %v794, 0.0
      %v900 = vmax.f32 %v799, 0.0
      %v901 = vmax.f32 %v802, 0.0
      %v902 = vmax.f32 %v807, 0.0
      %v903 = vmax.f32 %v810, 0.0
      %v904 = vmax.f32 %v815, 0.0
      %v905 = vmax.f32 %v818, 0.0
      %v906 = vmax.f32 %v823, 0.0
      %v907 = vmax.f32 %v826, 0.0
      %v908 = vmax.f32 %v831, 0.0
      %v909 = vmax.f32 %v834, 0.0
      %v910 = vmax.f32 %v839, 0.0
      %v911 = vmax.f32 %v842, 0.0
      %v912 = vmax.f32 %v847, 0.0
      %v913 = vmax.f32 %v850, 0.0
      %v914 = vmax.f32 %v855, 0.0
      %v915 = vmax.f32 %v858, 0.0
      %v916 = vmax.f32 %v863, 0.0
      %917 = vst [vmem:[%s175] sm:$0xff] %v868
      %918 = vst [vmem:[%s175 + $0x8] sm:$0xff] %v869
      %919 = vst [vmem:[%s175 + $0x10] sm:$0xff] %v870
      %920 = vst [vmem:[%s175 + $0x18] sm:$0xff] %v871
      %921 = vst [vmem:[%s175 + $0x20] sm:$0xff] %v872
      %922 = vst [vmem:[%s175 + $0x28] sm:$0xff] %v873
      %923 = vst [vmem:[%s175 + $0x30] sm:$0xff] %v874
      %924 = vst [vmem:[%s175 + $0x38] sm:$0xff] %v875
      %925 = vst [vmem:[%s175 + $0x40] sm:$0xff] %v876
      %926 = vst [vmem:[%s175 + $0x48] sm:$0xff] %v877
      %927 = vst [vmem:[%s175 + $0x50] sm:$0xff] %v878
      %928 = vst [vmem:[%s175 + $0x58] sm:$0xff] %v879
      %929 = vst [vmem:[%s175 + $0x60] sm:$0xff] %v880
      %930 = vst [vmem:[%s175 + $0x68] sm:$0xff] %v881
      %931 = vst [vmem:[%s175 + $0x70] sm:$0xff] %v882
      %932 = vst [vmem:[%s175 + $0x78] sm:$0xff] %v883
      %933 = vst [vmem:[%s175 + $0x80] sm:$0xff] %v884
      %934 = vst [vmem:[%s175 + $0x88] sm:$0xff] %v885
      %935 = vst [vmem:[%s175 + $0x90] sm:$0xff] %v886
      %936 = vst [vmem:[%s175 + $0x98] sm:$0xff] %v887
      %937 = vst [vmem:[%s175 + $0xa0] sm:$0xff] %v888
      %938 = vst [vmem:[%s175 + $0xa8] sm:$0xff] %v889
      %939 = vst [vmem:[%s175 + $0xb0] sm:$0xff] %v890
      %940 = vst [vmem:[%s175 + $0xb8] sm:$0xff] %v891
      %941 = vst [vmem:[%s175 + $0xc0] sm:$0xff] %v892
      %942 = vst [vmem:[%s175 + $0xc8] sm:$0xff] %v893
      %943 = vst [vmem:[%s175 + $0xd0] sm:$0xff] %v894
      %944 = vst [vmem:[%s175 + $0xd8] sm:$0xff] %v895
      %945 = vst [vmem:[%s175 + $0xe0] sm:$0xff] %v896
      %946 = vst [vmem:[%s175 + $0xe8] sm:$0xff] %v897
      %947 = vst [vmem:[%s175 + $0xf0] sm:$0xff] %v898
      %948 = vst [vmem:[%s175 + $0xf8] sm:$0xff] %v899
      %949 = vst [vmem:[%s175 + $0x100] sm:$0xff] %v900
      %950 = vst [vmem:[%s175 + $0x108] sm:$0xff] %v901
      %951 = vst [vmem:[%s175 + $0x110] sm:$0xff] %v902
      %952 = vst [vmem:[%s175 + $0x118] sm:$0xff] %v903
      %953 = vst [vmem:[%s175 + $0x120] sm:$0xff] %v904
      %954 = vst [vmem:[%s175 + $0x128] sm:$0xff] %v905
      %955 = vst [vmem:[%s175 + $0x130] sm:$0xff] %v906
      %956 = vst [vmem:[%s175 + $0x138] sm:$0xff] %v907
      %957 = vst [vmem:[%s175 + $0x140] sm:$0xff] %v908
      %958 = vst [vmem:[%s175 + $0x148] sm:$0xff] %v909
      %959 = vst [vmem:[%s175 + $0x150] sm:$0xff] %v910
      %960 = vst [vmem:[%s175 + $0x158] sm:$0xff] %v911
      %961 = vst [vmem:[%s175 + $0x160] sm:$0xff] %v912
      %962 = vst [vmem:[%s175 + $0x168] sm:$0xff] %v913
      %963 = vst [vmem:[%s175 + $0x170] sm:$0xff] %v914
      %964 = vst [vmem:[%s175 + $0x178] sm:$0xff] %v915
      %965 = vst [vmem:[%s175 + $0x180] sm:$0xff] %v916
      %s966 = smul.u32 49, %s14
      %p967 = scmp.lt.s32.totalorder %s966, 195
      %s968 = scalar_select %p967, %s966, 195
      %s969 = smul.addr %s968, 8
      %s970 = scalar_lea.vmem %s3, %s969
      // Predicated region
      $region33: #{net_forward.5} parent=31 // pred_check
        %p971 = pneg %p100
      $region34: #{net_forward.5} parent=31 // pred_check_branch
        %973 = sbr.rel (%p971) target = $region36
      $region35: #{net_forward.5} parent=31 // pred_region
        %s974 = smul.u32 49, %s14
      $region36: #{net_forward.5} parent=31 // pred_fallthru
        _
    $region32: #{net_forward.5} parent=5 // pred_fallthru
      _
    %p975 = scmp.le.s32.totalorder 2, %s9
    // Predicated region
    $region37: #{net_forward.5} parent=5 // pred_check
      %p976 = pneg %p975
    $region38: #{net_forward.5} parent=5 // pred_check_branch
      %978 = sbr.rel (%p976) target = $region40
    $region39: #{net_forward.5} parent=5 // pred_region
      %s979 = ssub.s32 %s9, 2
      // Predicated region
      $region41: #{net_forward.5} parent=39 // pred_check
        %p980 = pneg %p106
      $region42: #{net_forward.5} parent=39 // pred_check_branch
        %982 = sbr.rel (%p980) target = $region44
      $region43: #{net_forward.5} parent=39 // pred_region
        %s983 = smul.u32 49, %s15
        %p984 = scmp.lt.s32.totalorder %s983, 195
        %s985 = scalar_select %p984, %s983, 195
        %s986 = smul.addr %s985, 8
        %s987 = scalar_lea.vmem %s3, %s986
      $region44: #{net_forward.5} parent=39 // pred_fallthru
        _
    $region40: #{net_forward.5} parent=5 // pred_fallthru
      _
  $region6: #{net_forward.5} parent=0 // loop_footer
    %s13 = sadd.s32 1, %s9
  $region7: #{net_forward.5} parent=0 // loop_footer_branch
    %8 = sbr.rel target = $region3
  $region8: #{net_forward.5} parent=0 // loop_exit
    _

// kernel: net_forward.6
$region0: #{net_forward.6}
  #allocation0 [shape = 'u32[]', space=smem, size = 0x4, offset = 0x4, fixed_abs, tag = 'smem constant byte address 0x4 - core index']
  #allocation1 [shape = 'u32[144,128]{1,0:T(1,128)}', space=vmem, size = 0x12000, scoped, tag = 'internal scratch']
  %s0 = inlined_call_operand.vmem [shape: f32[28,2,14,256], index: 0, kind: input, shape index: {}]
  %s1 = inlined_call_operand.vmem [shape: f32[28,14,128], index: 1, kind: output, shape index: {}]
  %s2 = sld [smem:[#allocation0]]
  $region14: #{net_forward.6} parent=0
    _
  %s4 = ssub.s32 1, %s2
  %s5 = scalar_select 0, %s4, %s2
  // Predicated region
  $region2: #{net_forward.6} parent=0 // pred_check
    _
  $region3: #{net_forward.6} parent=0 // pred_check_branch
    %7 = sbr.rel (0) target = $region5
  $region4: #{net_forward.6} parent=0 // pred_region
    _
  $region5: #{net_forward.6} parent=0 // pred_fallthru
    _
  %v8 = vld [vmem:[%s0] sm:$0xff]
  %v9 = vld [vmem:[%s0 + $0x8] sm:$0xff]
  %v10 = vld [vmem:[%s0 + $0x10] sm:$0x3f]
  %v11 = vld [vmem:[%s0 + $0x18] sm:$0x3f]
  %v12 = vld [vmem:[%s0 + $0x20] sm:$0xff]
  %v13 = vld [vmem:[%s0 + $0x28] sm:$0xff]
  %v14 = vld [vmem:[%s0 + $0x30] sm:$0x3f]
  %v15 = vld [vmem:[%s0 + $0x38] sm:$0x3f]
  %v16 = vld [vmem:[%s0 + $0x40] sm:$0xff]
  %v17 = vld [vmem:[%s0 + $0x48] sm:$0xff]
  %v18 = vld [vmem:[%s0 + $0x50] sm:$0x3f]
  %v19 = vld [vmem:[%s0 + $0x58] sm:$0x3f]
  %v20 = vld [vmem:[%s0 + $0x60] sm:$0xff]
  %v21 = vld [vmem:[%s0 + $0x68] sm:$0xff]
  %v22 = vld [vmem:[%s0 + $0x70] sm:$0x3f]
  %v23 = vld [vmem:[%s0 + $0x78] sm:$0x3f]
  %v24 = vld [vmem:[%s0 + $0x80] sm:$0xff]
  %v25 = vld [vmem:[%s0 + $0x88] sm:$0xff]
  %v26 = vld [vmem:[%s0 + $0x90] sm:$0x3f]
  %v27 = vld [vmem:[%s0 + $0x98] sm:$0x3f]
  %v28 = vld [vmem:[%s0 + $0xa0] sm:$0xff]
  %v29 = vld [vmem:[%s0 + $0xa8] sm:$0xff]
  %v30 = vld [vmem:[%s0 + $0xb0] sm:$0x3f]
  %v31 = vld [vmem:[%s0 + $0xb8] sm:$0x3f]
  %v32 = vld [vmem:[%s0 + $0xc0] sm:$0xff]
  %v33 = vld [vmem:[%s0 + $0xc8] sm:$0xff]
  %v34 = vld [vmem:[%s0 + $0xd0] sm:$0x3f]
  %v35 = vld [vmem:[%s0 + $0xd8] sm:$0x3f]
  %v36 = vld [vmem:[%s0 + $0xe0] sm:$0xff]
  %v37 = vld [vmem:[%s0 + $0xe8] sm:$0xff]
  %v38 = vld [vmem:[%s0 + $0xf0] sm:$0x3f]
  %v39 = vld [vmem:[%s0 + $0xf8] sm:$0x3f]
  %v40 = vld [vmem:[%s0 + $0x100] sm:$0xff]
  %v41 = vld [vmem:[%s0 + $0x108] sm:$0xff]
  %v42 = vld [vmem:[%s0 + $0x110] sm:$0x3f]
  %v43 = vld [vmem:[%s0 + $0x118] sm:$0x3f]
  %v44 = vld [vmem:[%s0 + $0x120] sm:$0xff]
  %v45 = vld [vmem:[%s0 + $0x128] sm:$0xff]
  %v46 = vld [vmem:[%s0 + $0x130] sm:$0x3f]
  %v47 = vld [vmem:[%s0 + $0x138] sm:$0x3f]
  %v48 = vld [vmem:[%s0 + $0x140] sm:$0xff]
  %v49 = vld [vmem:[%s0 + $0x148] sm:$0xff]
  %v50 = vld [vmem:[%s0 + $0x150] sm:$0x3f]
  %v51 = vld [vmem:[%s0 + $0x158] sm:$0x3f]
  %v52 = vld [vmem:[%s0 + $0x160] sm:$0xff]
  %v53 = vld [vmem:[%s0 + $0x168] sm:$0xff]
  %v54 = vld [vmem:[%s0 + $0x170] sm:$0x3f]
  %v55 = vld [vmem:[%s0 + $0x178] sm:$0x3f]
  %v56 = vld [vmem:[%s0 + $0x180] sm:$0xff]
  %v57 = vld [vmem:[%s0 + $0x188] sm:$0xff]
  %v58 = vld [vmem:[%s0 + $0x190] sm:$0x3f]
  %v59 = vld [vmem:[%s0 + $0x198] sm:$0x3f]
  %v60 = vld [vmem:[%s0 + $0x1a0] sm:$0xff]
  %v61 = vld [vmem:[%s0 + $0x1a8] sm:$0xff]
  %v62 = vld [vmem:[%s0 + $0x1b0] sm:$0x3f]
  %v63 = vld [vmem:[%s0 + $0x1b8] sm:$0x3f]
  %v64 = vld [vmem:[%s0 + $0x1c0] sm:$0xff]
  %v65 = vld [vmem:[%s0 + $0x1c8] sm:$0xff]
  %v66 = vld [vmem:[%s0 + $0x1d0] sm:$0x3f]
  %v67 = vld [vmem:[%s0 + $0x1d8] sm:$0x3f]
  %v68 = vld [vmem:[%s0 + $0x1e0] sm:$0xff]
  %v69 = vld [vmem:[%s0 + $0x1e8] sm:$0xff]
  %v70 = vld [vmem:[%s0 + $0x1f0] sm:$0x3f]
  %v71 = vld [vmem:[%s0 + $0x1f8] sm:$0x3f]
  %v72 = vld [vmem:[%s0 + $0x200] sm:$0xff]
  %v73 = vld [vmem:[%s0 + $0x208] sm:$0xff]
  %v74 = vld [vmem:[%s0 + $0x210] sm:$0x3f]
  %v75 = vld [vmem:[%s0 + $0x218] sm:$0x3f]
  %v76 = vld [vmem:[%s0 + $0x220] sm:$0xff]
  %v77 = vld [vmem:[%s0 + $0x228] sm:$0xff]
  %v78 = vld [vmem:[%s0 + $0x230] sm:$0x3f]
  %v79 = vld [vmem:[%s0 + $0x238] sm:$0x3f]
  %v80 = vld [vmem:[%s0 + $0x240] sm:$0xff]
  %v81 = vld [vmem:[%s0 + $0x248] sm:$0xff]
  %v82 = vld [vmem:[%s0 + $0x250] sm:$0x3f]
  %v83 = vld [vmem:[%s0 + $0x258] sm:$0x3f]
  %v84 = vld [vmem:[%s0 + $0x260] sm:$0xff]
  %v85 = vld [vmem:[%s0 + $0x268] sm:$0xff]
  %v86 = vld [vmem:[%s0 + $0x270] sm:$0x3f]
  %v87 = vld [vmem:[%s0 + $0x278] sm:$0x3f]
  %v88 = vld [vmem:[%s0 + $0x280] sm:$0xff]
  %v89 = vld [vmem:[%s0 + $0x288] sm:$0xff]
  %v90 = vld [vmem:[%s0 + $0x290] sm:$0x3f]
  %v91 = vld [vmem:[%s0 + $0x298] sm:$0x3f]
  %v92 = vld [vmem:[%s0 + $0x2a0] sm:$0xff]
  %v93 = vld [vmem:[%s0 + $0x2a8] sm:$0xff]
  %v94 = vld [vmem:[%s0 + $0x2b0] sm:$0x3f]
  %v95 = vld [vmem:[%s0 + $0x2b8] sm:$0x3f]
  %v96 = vld [vmem:[%s0 + $0x2c0] sm:$0xff]
  %v97 = vld [vmem:[%s0 + $0x2c8] sm:$0xff]
  %v98 = vld [vmem:[%s0 + $0x2d0] sm:$0x3f]
  %v99 = vld [vmem:[%s0 + $0x2d8] sm:$0x3f]
  %v100 = vld [vmem:[%s0 + $0x2e0] sm:$0xff]
  %v101 = vld [vmem:[%s0 + $0x2e8] sm:$0xff]
  %v102 = vld [vmem:[%s0 + $0x2f0] sm:$0x3f]
  %v103 = vld [vmem:[%s0 + $0x2f8] sm:$0x3f]
  %v104 = vld [vmem:[%s0 + $0x300] sm:$0xff]
  %v105 = vld [vmem:[%s0 + $0x308] sm:$0xff]
  %v106 = vld [vmem:[%s0 + $0x310] sm:$0x3f]
  %v107 = vld [vmem:[%s0 + $0x318] sm:$0x3f]
  %v108 = vld [vmem:[%s0 + $0x320] sm:$0xff]
  %v109 = vld [vmem:[%s0 + $0x328] sm:$0xff]
  %v110 = vld [vmem:[%s0 + $0x330] sm:$0x3f]
  %v111 = vld [vmem:[%s0 + $0x338] sm:$0x3f]
  %v112 = vld [vmem:[%s0 + $0x340] sm:$0xff]
  %v113 = vld [vmem:[%s0 + $0x348] sm:$0xff]
  %v114 = vld [vmem:[%s0 + $0x350] sm:$0x3f]
  %v115 = vld [vmem:[%s0 + $0x358] sm:$0x3f]
  %v116 = vld [vmem:[%s0 + $0x360] sm:$0xff]
  %v117 = vld [vmem:[%s0 + $0x368] sm:$0xff]
  %v118 = vld [vmem:[%s0 + $0x370] sm:$0x3f]
  %v119 = vld [vmem:[%s0 + $0x378] sm:$0x3f]
  %v120 = vld [vmem:[%s0 + $0x380] sm:$0xff]
  %v121 = vld [vmem:[%s0 + $0x388] sm:$0xff]
  %v122 = vld [vmem:[%s0 + $0x390] sm:$0x3f]
  %v123 = vld [vmem:[%s0 + $0x398] sm:$0x3f]
  %v124 = vld [vmem:[%s0 + $0x3a0] sm:$0xff]
  %v125 = vld [vmem:[%s0 + $0x3a8] sm:$0xff]
  %v126 = vld [vmem:[%s0 + $0x3b0] sm:$0x3f]
  %v127 = vld [vmem:[%s0 + $0x3b8] sm:$0x3f]
  %v128 = vld [vmem:[%s0 + $0x3c0] sm:$0xff]
  %v129 = vld [vmem:[%s0 + $0x3c8] sm:$0xff]
  %v130 = vld [vmem:[%s0 + $0x3d0] sm:$0x3f]
  %v131 = vld [vmem:[%s0 + $0x3d8] sm:$0x3f]
  %v132 = vld [vmem:[%s0 + $0x3e0] sm:$0xff]
  %v133 = vld [vmem:[%s0 + $0x3e8] sm:$0xff]
  %v134 = vld [vmem:[%s0 + $0x3f0] sm:$0x3f]
  %v135 = vld [vmem:[%s0 + $0x3f8] sm:$0x3f]
  %v136 = vld [vmem:[%s0 + $0x400] sm:$0xff]
  %v137 = vld [vmem:[%s0 + $0x408] sm:$0xff]
  %v138 = vld [vmem:[%s0 + $0x410] sm:$0x3f]
  %v139 = vld [vmem:[%s0 + $0x418] sm:$0x3f]
  %v140 = vld [vmem:[%s0 + $0x420] sm:$0xff]
  %v141 = vld [vmem:[%s0 + $0x428] sm:$0xff]
  %v142 = vld [vmem:[%s0 + $0x430] sm:$0x3f]
  %v143 = vld [vmem:[%s0 + $0x438] sm:$0x3f]
  %v144 = vld [vmem:[%s0 + $0x440] sm:$0xff]
  %v145 = vld [vmem:[%s0 + $0x448] sm:$0xff]
  %v146 = vld [vmem:[%s0 + $0x450] sm:$0x3f]
  %v147 = vld [vmem:[%s0 + $0x458] sm:$0x3f]
  %v148 = vld [vmem:[%s0 + $0x460] sm:$0xff]
  %v149 = vld [vmem:[%s0 + $0x468] sm:$0xff]
  %v150 = vld [vmem:[%s0 + $0x470] sm:$0x3f]
  %v151 = vld [vmem:[%s0 + $0x478] sm:$0x3f]
  %v152 = vld [vmem:[%s0 + $0x480] sm:$0xff]
  %v153 = vld [vmem:[%s0 + $0x488] sm:$0xff]
  %v154 = vld [vmem:[%s0 + $0x490] sm:$0x3f]
  %v155 = vld [vmem:[%s0 + $0x498] sm:$0x3f]
  %v156 = vld [vmem:[%s0 + $0x4a0] sm:$0xff]
  %v157 = vld [vmem:[%s0 + $0x4a8] sm:$0xff]
  %v158 = vld [vmem:[%s0 + $0x4b0] sm:$0x3f]
  %v159 = vld [vmem:[%s0 + $0x4b8] sm:$0x3f]
  %v160 = vld [vmem:[%s0 + $0x4c0] sm:$0xff]
  %v161 = vld [vmem:[%s0 + $0x4c8] sm:$0xff]
  %v162 = vld [vmem:[%s0 + $0x4d0] sm:$0x3f]
  %v163 = vld [vmem:[%s0 + $0x4d8] sm:$0x3f]
  %v164 = vld [vmem:[%s0 + $0x4e0] sm:$0xff]
  %v165 = vld [vmem:[%s0 + $0x4e8] sm:$0xff]
  %v166 = vld [vmem:[%s0 + $0x4f0] sm:$0x3f]
  %v167 = vld [vmem:[%s0 + $0x4f8] sm:$0x3f]
  %v168 = vld [vmem:[%s0 + $0x500] sm:$0xff]
  %v169 = vld [vmem:[%s0 + $0x508] sm:$0xff]
  %v170 = vld [vmem:[%s0 + $0x510] sm:$0x3f]
  %v171 = vld [vmem:[%s0 + $0x518] sm:$0x3f]
  %v172 = vld [vmem:[%s0 + $0x520] sm:$0xff]
  %v173 = vld [vmem:[%s0 + $0x528] sm:$0xff]
  %v174 = vld [vmem:[%s0 + $0x530] sm:$0x3f]
  %v175 = vld [vmem:[%s0 + $0x538] sm:$0x3f]
  %v176 = vld [vmem:[%s0 + $0x540] sm:$0xff]
  %v177 = vld [vmem:[%s0 + $0x548] sm:$0xff]
  %v178 = vld [vmem:[%s0 + $0x550] sm:$0x3f]
  %v179 = vld [vmem:[%s0 + $0x558] sm:$0x3f]
  %v180 = vld [vmem:[%s0 + $0x560] sm:$0xff]
  %v181 = vld [vmem:[%s0 + $0x568] sm:$0xff]
  %v182 = vld [vmem:[%s0 + $0x570] sm:$0x3f]
  %v183 = vld [vmem:[%s0 + $0x578] sm:$0x3f]
  %v184 = vld [vmem:[%s0 + $0x580] sm:$0xff]
  %v185 = vld [vmem:[%s0 + $0x588] sm:$0xff]
  %v186 = vld [vmem:[%s0 + $0x590] sm:$0x3f]
  %v187 = vld [vmem:[%s0 + $0x598] sm:$0x3f]
  %v188 = vld [vmem:[%s0 + $0x5a0] sm:$0xff]
  %v189 = vld [vmem:[%s0 + $0x5a8] sm:$0xff]
  %v190 = vld [vmem:[%s0 + $0x5b0] sm:$0x3f]
  %v191 = vld [vmem:[%s0 + $0x5b8] sm:$0x3f]
  %v192 = vld [vmem:[%s0 + $0x5c0] sm:$0xff]
  %v193 = vld [vmem:[%s0 + $0x5c8] sm:$0xff]
  %v194 = vld [vmem:[%s0 + $0x5d0] sm:$0x3f]
  %v195 = vld [vmem:[%s0 + $0x5d8] sm:$0x3f]
  %v196 = vld [vmem:[%s0 + $0x5e0] sm:$0xff]
  %v197 = vld [vmem:[%s0 + $0x5e8] sm:$0xff]
  %v198 = vld [vmem:[%s0 + $0x5f0] sm:$0x3f]
  %v199 = vld [vmem:[%s0 + $0x5f8] sm:$0x3f]
  %v200 = vld [vmem:[%s0 + $0x600] sm:$0xff]
  %v201 = vld [vmem:[%s0 + $0x608] sm:$0xff]
  %v202 = vld [vmem:[%s0 + $0x610] sm:$0x3f]
  %v203 = vld [vmem:[%s0 + $0x618] sm:$0x3f]
  %v204 = vld [vmem:[%s0 + $0x620] sm:$0xff]
  %v205 = vld [vmem:[%s0 + $0x628] sm:$0xff]
  %v206 = vld [vmem:[%s0 + $0x630] sm:$0x3f]
  %v207 = vld [vmem:[%s0 + $0x638] sm:$0x3f]
  %v208 = vld [vmem:[%s0 + $0x640] sm:$0xff]
  %v209 = vld [vmem:[%s0 + $0x648] sm:$0xff]
  %v210 = vld [vmem:[%s0 + $0x650] sm:$0x3f]
  %v211 = vld [vmem:[%s0 + $0x658] sm:$0x3f]
  %v212 = vld [vmem:[%s0 + $0x660] sm:$0xff]
  %v213 = vld [vmem:[%s0 + $0x668] sm:$0xff]
  %v214 = vld [vmem:[%s0 + $0x670] sm:$0x3f]
  %v215 = vld [vmem:[%s0 + $0x678] sm:$0x3f]
  %v216 = vld [vmem:[%s0 + $0x680] sm:$0xff]
  %v217 = vld [vmem:[%s0 + $0x688] sm:$0xff]
  %v218 = vld [vmem:[%s0 + $0x690] sm:$0x3f]
  %v219 = vld [vmem:[%s0 + $0x698] sm:$0x3f]
  %v220 = vld [vmem:[%s0 + $0x6a0] sm:$0xff]
  %v221 = vld [vmem:[%s0 + $0x6a8] sm:$0xff]
  %v222 = vld [vmem:[%s0 + $0x6b0] sm:$0x3f]
  %v223 = vld [vmem:[%s0 + $0x6b8] sm:$0x3f]
  %v224 = vld [vmem:[%s0 + $0x6c0] sm:$0xff]
  %v225 = vld [vmem:[%s0 + $0x6c8] sm:$0xff]
  %v226 = vld [vmem:[%s0 + $0x6d0] sm:$0x3f]
  %v227 = vld [vmem:[%s0 + $0x6d8] sm:$0x3f]
  %v228 = vld [vmem:[%s0 + $0x6e0] sm:$0xff]
  %v229 = vld [vmem:[%s0 + $0x6e8] sm:$0xff]
  %v230 = vld [vmem:[%s0 + $0x6f0] sm:$0x3f]
  %v231 = vld [vmem:[%s0 + $0x6f8] sm:$0x3f]
  %v232 = vmax.f32 %v8, %v12
  %v233 = vmax.f32 %v9, %v13
  %v234 = vmax.f32 %v10, %v14
  %v235 = vmax.f32 %v11, %v15
  %v236 = vmax.f32 %v16, %v20
  %v237 = vmax.f32 %v17, %v21
  %v238 = vmax.f32 %v18, %v22
  %v239 = vmax.f32 %v19, %v23
  %v240 = vmax.f32 %v24, %v28
  %v241 = vmax.f32 %v25, %v29
  %v242 = vmax.f32 %v26, %v30
  %v243 = vmax.f32 %v27, %v31
  %v244 = vmax.f32 %v32, %v36
  %v245 = vmax.f32 %v33, %v37
  %v246 = vmax.f32 %v34, %v38
  %v247 = vmax.f32 %v35, %v39
  %v248 = vmax.f32 %v40, %v44
  %v249 = vmax.f32 %v41, %v45
  %v250 = vmax.f32 %v42, %v46
  %v251 = vmax.f32 %v43, %v47
  %v252 = vmax.f32 %v48, %v52
  %v253 = vmax.f32 %v49, %v53
  %v254 = vmax.f32 %v50, %v54
  %v255 = vmax.f32 %v51, %v55
  %v256 = vmax.f32 %v56, %v60
  %v257 = vmax.f32 %v57, %v61
  %v258 = vmax.f32 %v58, %v62
  %v259 = vmax.f32 %v59, %v63
  %v260 = vmax.f32 %v64, %v68
  %v261 = vmax.f32 %v65, %v69
  %v262 = vmax.f32 %v66, %v70
  %v263 = vmax.f32 %v67, %v71
  %v264 = vmax.f32 %v72, %v76
  %v265 = vmax.f32 %v73, %v77
  %v266 = vmax.f32 %v74, %v78
  %v267 = vmax.f32 %v75, %v79
  %v268 = vmax.f32 %v80, %v84
  %v269 = vmax.f32 %v81, %v85
  %v270 = vmax.f32 %v82, %v86
  %v271 = vmax.f32 %v83, %v87
  %v272 = vmax.f32 %v88, %v92
  %v273 = vmax.f32 %v89, %v93
  %v274 = vmax.f32 %v90, %v94
  %v275 = vmax.f32 %v91, %v95
  %v276 = vmax.f32 %v96, %v100
  %v277 = vmax.f32 %v97, %v101
  %v278 = vmax.f32 %v98, %v102
  %v279 = vmax.f32 %v99, %v103
  %v280 = vmax.f32 %v104, %v108
  %v281 = vmax.f32 %v105, %v109
  %v282 = vmax.f32 %v106, %v110
  %v283 = vmax.f32 %v107, %v111
  %v284 = vmax.f32 %v112, %v116
  %v285 = vmax.f32 %v113, %v117
  %v286 = vmax.f32 %v114, %v118
  %v287 = vmax.f32 %v115, %v119
  %v288 = vmax.f32 %v120, %v124
  %v289 = vmax.f32 %v121, %v125
  %v290 = vmax.f32 %v122, %v126
  %v291 = vmax.f32 %v123, %v127
  %v292 = vmax.f32 %v128, %v132
  %v293 = vmax.f32 %v129, %v133
  %v294 = vmax.f32 %v130, %v134
  %v295 = vmax.f32 %v131, %v135
  %v296 = vmax.f32 %v136, %v140
  %v297 = vmax.f32 %v137, %v141
  %v298 = vmax.f32 %v138, %v142
  %v299 = vmax.f32 %v139, %v143
  %v300 = vmax.f32 %v144, %v148
  %v301 = vmax.f32 %v145, %v149
  %v302 = vmax.f32 %v146, %v150
  %v303 = vmax.f32 %v147, %v151
  %v304 = vmax.f32 %v152, %v156
  %v305 = vmax.f32 %v153, %v157
  %v306 = vmax.f32 %v154, %v158
  %v307 = vmax.f32 %v155, %v159
  %v308 = vmax.f32 %v160, %v164
  %v309 = vmax.f32 %v161, %v165
  %v310 = vmax.f32 %v162, %v166
  %v311 = vmax.f32 %v163, %v167
  %v312 = vmax.f32 %v168, %v172
  %v313 = vmax.f32 %v169, %v173
  %v314 = vmax.f32 %v170, %v174
  %v315 = vmax.f32 %v171, %v175
  %v316 = vmax.f32 %v176, %v180
  %v317 = vmax.f32 %v177, %v181
  %v318 = vmax.f32 %v178, %v182
  %v319 = vmax.f32 %v179, %v183
  %v320 = vmax.f32 %v184, %v188
  %v321 = vmax.f32 %v185, %v189
  %v322 = vmax.f32 %v186, %v190
  %v323 = vmax.f32 %v187, %v191
  %v324 = vmax.f32 %v192, %v196
  %v325 = vmax.f32 %v193, %v197
  %v326 = vmax.f32 %v194, %v198
  %v327 = vmax.f32 %v195, %v199
  %v328 = vmax.f32 %v200, %v204
  %v329 = vmax.f32 %v201, %v205
  %v330 = vmax.f32 %v202, %v206
  %v331 = vmax.f32 %v203, %v207
  %v332 = vmax.f32 %v208, %v212
  %v333 = vmax.f32 %v209, %v213
  %v334 = vmax.f32 %v210, %v214
  %v335 = vmax.f32 %v211, %v215
  %v336 = vmax.f32 %v216, %v220
  %v337 = vmax.f32 %v217, %v221
  %v338 = vmax.f32 %v218, %v222
  %v339 = vmax.f32 %v219, %v223
  %v340 = vmax.f32 %v224, %v228
  %v341 = vmax.f32 %v225, %v229
  %v342 = vmax.f32 %v226, %v230
  %v343 = vmax.f32 %v227, %v231
  %v344 = vmax.f32 %v232, %v233
  %v345 = vmax.f32 %v234, %v235
  %v346 = vmax.f32 %v236, %v237
  %v347 = vmax.f32 %v238, %v239
  %v348 = vmax.f32 %v240, %v241
  %v349 = vmax.f32 %v242, %v243
  %v350 = vmax.f32 %v244, %v245
  %v351 = vmax.f32 %v246, %v247
  %v352 = vmax.f32 %v248, %v249
  %v353 = vmax.f32 %v250, %v251
  %v354 = vmax.f32 %v252, %v253
  %v355 = vmax.f32 %v254, %v255
  %v356 = vmax.f32 %v256, %v257
  %v357 = vmax.f32 %v258, %v259
  %v358 = vmax.f32 %v260, %v261
  %v359 = vmax.f32 %v262, %v263
  %v360 = vmax.f32 %v264, %v265
  %v361 = vmax.f32 %v266, %v267
  %v362 = vmax.f32 %v268, %v269
  %v363 = vmax.f32 %v270, %v271
  %v364 = vmax.f32 %v272, %v273
  %v365 = vmax.f32 %v274, %v275
  %v366 = vmax.f32 %v276, %v277
  %v367 = vmax.f32 %v278, %v279
  %v368 = vmax.f32 %v280, %v281
  %v369 = vmax.f32 %v282, %v283
  %v370 = vmax.f32 %v284, %v285
  %v371 = vmax.f32 %v286, %v287
  %v372 = vmax.f32 %v288, %v289
  %v373 = vmax.f32 %v290, %v291
  %v374 = vmax.f32 %v292, %v293
  %v375 = vmax.f32 %v294, %v295
  %v376 = vmax.f32 %v296, %v297
  %v377 = vmax.f32 %v298, %v299
  %v378 = vmax.f32 %v300, %v301
  %v379 = vmax.f32 %v302, %v303
  %v380 = vmax.f32 %v304, %v305
  %v381 = vmax.f32 %v306, %v307
  %v382 = vmax.f32 %v308, %v309
  %v383 = vmax.f32 %v310, %v311
  %v384 = vmax.f32 %v312, %v313
  %v385 = vmax.f32 %v314, %v315
  %v386 = vmax.f32 %v316, %v317
  %v387 = vmax.f32 %v318, %v319
  %v388 = vmax.f32 %v320, %v321
  %v389 = vmax.f32 %v322, %v323
  %v390 = vmax.f32 %v324, %v325
  %v391 = vmax.f32 %v326, %v327
  %v392 = vmax.f32 %v328, %v329
  %v393 = vmax.f32 %v330, %v331
  %v394 = vmax.f32 %v332, %v333
  %v395 = vmax.f32 %v334, %v335
  %v396 = vmax.f32 %v336, %v337
  %v397 = vmax.f32 %v338, %v339
  %v398 = vmax.f32 %v340, %v341
  %v399 = vmax.f32 %v342, %v343
  %400 = vst [vmem:[%s1] sm:$0xff] %v344
  %401 = vst [vmem:[%s1 + $0x8] sm:$0x3f] %v345
  %402 = vst [vmem:[%s1 + $0x10] sm:$0xff] %v346
  %403 = vst [vmem:[%s1 + $0x18] sm:$0x3f] %v347
  %404 = vst [vmem:[%s1 + $0x20] sm:$0xff] %v348
  %405 = vst [vmem:[%s1 + $0x28] sm:$0x3f] %v349
  %406 = vst [vmem:[%s1 + $0x30] sm:$0xff] %v350
  %407 = vst [vmem:[%s1 + $0x38] sm:$0x3f] %v351
  %408 = vst [vmem:[%s1 + $0x40] sm:$0xff] %v352
  %409 = vst [vmem:[%s1 + $0x48] sm:$0x3f] %v353
  %410 = vst [vmem:[%s1 + $0x50] sm:$0xff] %v354
  %411 = vst [vmem:[%s1 + $0x58] sm:$0x3f] %v355
  %412 = vst [vmem:[%s1 + $0x60] sm:$0xff] %v356
  %413 = vst [vmem:[%s1 + $0x68] sm:$0x3f] %v357
  %414 = vst [vmem:[%s1 + $0x70] sm:$0xff] %v358
  %415 = vst [vmem:[%s1 + $0x78] sm:$0x3f] %v359
  %416 = vst [vmem:[%s1 + $0x80] sm:$0xff] %v360
  %417 = vst [vmem:[%s1 + $0x88] sm:$0x3f] %v361
  %418 = vst [vmem:[%s1 + $0x90] sm:$0xff] %v362
  %419 = vst [vmem:[%s1 + $0x98] sm:$0x3f] %v363
  %420 = vst [vmem:[%s1 + $0xa0] sm:$0xff] %v364
  %421 = vst [vmem:[%s1 + $0xa8] sm:$0x3f] %v365
  %422 = vst [vmem:[%s1 + $0xb0] sm:$0xff] %v366
  %423 = vst [vmem:[%s1 + $0xb8] sm:$0x3f] %v367
  %424 = vst [vmem:[%s1 + $0xc0] sm:$0xff] %v368
  %425 = vst [vmem:[%s1 + $0xc8] sm:$0x3f] %v369
  %426 = vst [vmem:[%s1 + $0xd0] sm:$0xff] %v370
  %427 = vst [vmem:[%s1 + $0xd8] sm:$0x3f] %v371
  %428 = vst [vmem:[%s1 + $0xe0] sm:$0xff] %v372
  %429 = vst [vmem:[%s1 + $0xe8] sm:$0x3f] %v373
  %430 = vst [vmem:[%s1 + $0xf0] sm:$0xff] %v374
  %431 = vst [vmem:[%s1 + $0xf8] sm:$0x3f] %v375
  %432 = vst [vmem:[%s1 + $0x100] sm:$0xff] %v376
  %433 = vst [vmem:[%s1 + $0x108] sm:$0x3f] %v377
  %434 = vst [vmem:[%s1 + $0x110] sm:$0xff] %v378
  %435 = vst [vmem:[%s1 + $0x118] sm:$0x3f] %v379
  %436 = vst [vmem:[%s1 + $0x120] sm:$0xff] %v380
  %437 = vst [vmem:[%s1 + $0x128] sm:$0x3f] %v381
  %438 = vst [vmem:[%s1 + $0x130] sm:$0xff] %v382
  %439 = vst [vmem:[%s1 + $0x138] sm:$0x3f] %v383
  %440 = vst [vmem:[%s1 + $0x140] sm:$0xff] %v384
  %441 = vst [vmem:[%s1 + $0x148] sm:$0x3f] %v385
  %442 = vst [vmem:[%s1 + $0x150] sm:$0xff] %v386
  %443 = vst [vmem:[%s1 + $0x158] sm:$0x3f] %v387
  %444 = vst [vmem:[%s1 + $0x160] sm:$0xff] %v388
  %445 = vst [vmem:[%s1 + $0x168] sm:$0x3f] %v389
  %446 = vst [vmem:[%s1 + $0x170] sm:$0xff] %v390
  %447 = vst [vmem:[%s1 + $0x178] sm:$0x3f] %v391
  %448 = vst [vmem:[%s1 + $0x180] sm:$0xff] %v392
  %449 = vst [vmem:[%s1 + $0x188] sm:$0x3f] %v393
  %450 = vst [vmem:[%s1 + $0x190] sm:$0xff] %v394
  %451 = vst [vmem:[%s1 + $0x198] sm:$0x3f] %v395
  %452 = vst [vmem:[%s1 + $0x1a0] sm:$0xff] %v396
  %453 = vst [vmem:[%s1 + $0x1a8] sm:$0x3f] %v397
  %454 = vst [vmem:[%s1 + $0x1b0] sm:$0xff] %v398
  %455 = vst [vmem:[%s1 + $0x1b8] sm:$0x3f] %v399
  // Predicated region
  $region6: #{net_forward.6} parent=0 // pred_check
    _
  $region7: #{net_forward.6} parent=0 // pred_check_branch
    %457 = sbr.rel (0) target = $region9
  $region8: #{net_forward.6} parent=0 // pred_region
    _
  $region9: #{net_forward.6} parent=0 // pred_fallthru
    _
  // Predicated region
  $region10: #{net_forward.6} parent=0 // pred_check
    _
  $region11: #{net_forward.6} parent=0 // pred_check_branch
    %459 = sbr.rel (0) target = $region13
  $region12: #{net_forward.6} parent=0 // pred_region
    _
  $region13: #{net_forward.6} parent=0 // pred_fallthru
    _

// kernel: net_forward.7
$region0: #{net_forward.7}
  #allocation0 [shape = 'u32[]', space=smem, size = 0x4, offset = 0x4, fixed_abs, tag = 'smem constant byte address 0x4 - core index']
  #allocation1 [shape = 'u32[144,128]{1,0:T(1,128)}', space=vmem, size = 0x12000, scoped, tag = 'internal scratch']
  %s0 = inlined_call_operand.vmem [shape: bf16[200,200], index: 0, kind: input, shape index: {}]
  %s1 = inlined_call_operand.vmem [shape: bf16[200,128], index: 1, kind: input, shape index: {}]
  %s2 = inlined_call_operand.vmem [shape: f32[1,128], index: 2, kind: input, shape index: {}]
  %s3 = inlined_call_operand.vmem [shape: f32[200,128], index: 3, kind: output, shape index: {}]
  %s4 = sld [smem:[#allocation0]]
  $region22: #{net_forward.7} parent=0
    _
  %s6 = ssub.s32 1, %s4
  %s7 = scalar_select 0, %s6, %s4
  // Predicated region
  $region2: #{net_forward.7} parent=0 // pred_check
    _
  $region3: #{net_forward.7} parent=0 // pred_check_branch
    %9 = sbr.rel (0) target = $region5
  $region4: #{net_forward.7} parent=0 // pred_region
    _
  $region5: #{net_forward.7} parent=0 // pred_fallthru
    _
  // Predicated region
  $region6: #{net_forward.7} parent=0 // pred_check
    _
  $region7: #{net_forward.7} parent=0 // pred_check_branch
    %11 = sbr.rel (0) target = $region9
  $region8: #{net_forward.7} parent=0 // pred_region
    _
  $region9: #{net_forward.7} parent=0 // pred_fallthru
    _
  // Predicated region
  $region10: #{net_forward.7} parent=0 // pred_check
    _
  $region11: #{net_forward.7} parent=0 // pred_check_branch
    %13 = sbr.rel (0) target = $region13
  $region12: #{net_forward.7} parent=0 // pred_region
    _
  $region13: #{net_forward.7} parent=0 // pred_fallthru
    _
  %v15 = vld [vmem:[%s0] sm:$0xff]
  %v16 = vld [vmem:[%s0 + $0x8] sm:$0xff]
  %v17 = vld [vmem:[%s0 + $0x10] sm:$0xff]
  %v18 = vld [vmem:[%s0 + $0x18] sm:$0xff]
  %v19 = vld [vmem:[%s0 + $0x20] sm:$0xff]
  %v20 = vld [vmem:[%s0 + $0x28] sm:$0xff]
  %v21 = vld [vmem:[%s0 + $0x30] sm:$0xff]
  %v22 = vld [vmem:[%s0 + $0x38] sm:$0xff]
  %v23 = vld [vmem:[%s0 + $0x40] sm:$0xff]
  %v24 = vld [vmem:[%s0 + $0x48] sm:$0xff]
  %v25 = vld [vmem:[%s0 + $0x50] sm:$0xff]
  %v26 = vld [vmem:[%s0 + $0x58] sm:$0xff]
  %v27 = vld [vmem:[%s0 + $0x60] sm:$0xff]
  %v28 = vld [vmem:[%s0 + $0x68] sm:$0xff]
  %v29 = vld [vmem:[%s0 + $0x70] sm:$0xff]
  %v30 = vld [vmem:[%s0 + $0x78] sm:$0xff]
  %v31 = vld [vmem:[%s0 + $0x80] sm:$0xff]
  %v32 = vld [vmem:[%s0 + $0x88] sm:$0xff]
  %v33 = vld [vmem:[%s0 + $0x90] sm:$0xff]
  %v34 = vld [vmem:[%s0 + $0x98] sm:$0xff]
  %v35 = vld [vmem:[%s0 + $0xa0] sm:$0xff]
  %v36 = vld [vmem:[%s0 + $0xa8] sm:$0xff]
  %v37 = vld [vmem:[%s0 + $0xb0] sm:$0xff]
  %v38 = vld [vmem:[%s0 + $0xb8] sm:$0xff]
  %v39 = vld [vmem:[%s0 + $0xc0] sm:$0xff]
  %v40 = vld [vmem:[%s1] sm:$0xf]
  %v41 = vld [vmem:[%s1 + $0x4] sm:$0xf]
  %v42 = vld [vmem:[%s1 + $0x8] sm:$0xf]
  %v43 = vld [vmem:[%s1 + $0xc] sm:$0xf]
  %v44 = vld [vmem:[%s1 + $0x10] sm:$0xf]
  %v45 = vld [vmem:[%s1 + $0x14] sm:$0xf]
  %v46 = vld [vmem:[%s1 + $0x18] sm:$0xf]
  %v47 = vld [vmem:[%s1 + $0x1c] sm:$0xf]
  %v48 = vld [vmem:[%s1 + $0x20] sm:$0xf]
  %v49 = vld [vmem:[%s1 + $0x24] sm:$0xf]
  %v50 = vld [vmem:[%s1 + $0x28] sm:$0xf]
  %v51 = vld [vmem:[%s1 + $0x2c] sm:$0xf]
  %v52 = vld [vmem:[%s1 + $0x30] sm:$0xf]
  %v53 = vld [vmem:[%s1 + $0x34] sm:$0xf]
  %v54 = vld [vmem:[%s1 + $0x38] sm:$0xf]
  %v55 = vld [vmem:[%s1 + $0x3c] sm:$0xf]
  %v56 = vld [vmem:[%s1 + $0x40] sm:$0xf]
  %v57 = vld [vmem:[%s1 + $0x44] sm:$0xf]
  %v58 = vld [vmem:[%s1 + $0x48] sm:$0xf]
  %v59 = vld [vmem:[%s1 + $0x4c] sm:$0xf]
  %v60 = vld [vmem:[%s1 + $0x50] sm:$0xf]
  %v61 = vld [vmem:[%s1 + $0x54] sm:$0xf]
  %v62 = vld [vmem:[%s1 + $0x58] sm:$0xf]
  %v63 = vld [vmem:[%s1 + $0x5c] sm:$0xf]
  %v64 = vld [vmem:[%s1 + $0x60] sm:$0xf]
  %v65 = vld [vmem:[%s2] sm:$0x1]
  %v67 = vlaneseq
  %v68 = vshrl.u32 %v67, 7
  %v69 = vsub.s32 0, %v68
  %v70 = vrot.slane %v65, %v69
  %v97 = vunpack.c.l.b16 %v15
  %v98 = vunpack.c.h.b16 %v15
  %v99 = vunpack.c.l.b16 %v16
  %v100 = vunpack.c.h.b16 %v16
  %v101 = vunpack.c.l.b16 %v17
  %v102 = vunpack.c.h.b16 %v17
  %v103 = vunpack.c.l.b16 %v18
  %v104 = vunpack.c.h.b16 %v18
  %v105 = vunpack.c.l.b16 %v19
  %v106 = vunpack.c.h.b16 %v19
  %v107 = vunpack.c.l.b16 %v20
  %v108 = vunpack.c.h.b16 %v20
  %v109 = vunpack.c.l.b16 %v21
  %v110 = vunpack.c.h.b16 %v21
  %v111 = vunpack.c.l.b16 %v22
  %v112 = vunpack.c.h.b16 %v22
  %v113 = vunpack.c.l.b16 %v23
  %v114 = vunpack.c.h.b16 %v23
  %v115 = vunpack.c.l.b16 %v24
  %v116 = vunpack.c.h.b16 %v24
  %v117 = vunpack.c.l.b16 %v25
  %v118 = vunpack.c.h.b16 %v25
  %v119 = vunpack.c.l.b16 %v26
  %v120 = vunpack.c.h.b16 %v26
  %v121 = vunpack.c.l.b16 %v27
  %v122 = vunpack.c.h.b16 %v27
  %v123 = vunpack.c.l.b16 %v28
  %v124 = vunpack.c.h.b16 %v28
  %v125 = vunpack.c.l.b16 %v29
  %v126 = vunpack.c.h.b16 %v29
  %v127 = vunpack.c.l.b16 %v30
  %v128 = vunpack.c.h.b16 %v30
  %v129 = vunpack.c.l.b16 %v31
  %v130 = vunpack.c.h.b16 %v31
  %v131 = vunpack.c.l.b16 %v32
  %v132 = vunpack.c.h.b16 %v32
  %v133 = vunpack.c.l.b16 %v33
  %v134 = vunpack.c.h.b16 %v33
  %v135 = vunpack.c.l.b16 %v34
  %v136 = vunpack.c.h.b16 %v34
  %v137 = vunpack.c.l.b16 %v35
  %v138 = vunpack.c.h.b16 %v35
  %v139 = vunpack.c.l.b16 %v36
  %v140 = vunpack.c.h.b16 %v36
  %v141 = vunpack.c.l.b16 %v37
  %v142 = vunpack.c.h.b16 %v37
  %v143 = vunpack.c.l.b16 %v38
  %v144 = vunpack.c.h.b16 %v38
  %v145 = vunpack.c.l.b16 %v39
  %v146 = vunpack.c.h.b16 %v39
  %v147 = vpack.c.b16 %v99, %v97
  %v148 = vpack.c.b16 %v100, %v98
  %v149 = vpack.c.b16 %v103, %v101
  %v150 = vpack.c.b16 %v104, %v102
  %v151 = vpack.c.b16 %v107, %v105
  %v152 = vpack.c.b16 %v108, %v106
  %v153 = vpack.c.b16 %v111, %v109
  %v154 = vpack.c.b16 %v112, %v110
  %v155 = vpack.c.b16 %v115, %v113
  %v156 = vpack.c.b16 %v116, %v114
  %v157 = vpack.c.b16 %v119, %v117
  %v158 = vpack.c.b16 %v120, %v118
  %v159 = vpack.c.b16 %v123, %v121
  %v160 = vpack.c.b16 %v124, %v122
  %v161 = vpack.c.b16 %v127, %v125
  %v162 = vpack.c.b16 %v128, %v126
  %v163 = vpack.c.b16 %v131, %v129
  %v164 = vpack.c.b16 %v132, %v130
  %v165 = vpack.c.b16 %v135, %v133
  %v166 = vpack.c.b16 %v136, %v134
  %v167 = vpack.c.b16 %v139, %v137
  %v168 = vpack.c.b16 %v140, %v138
  %v169 = vpack.c.b16 %v143, %v141
  %v170 = vpack.c.b16 %v144, %v142
  %v171 = vpack.c.b16 %v145, %v145
  %v172 = vpack.c.b16 %v146, %v146
  %v211 = vunpack.c.l.b16 %v40
  %v212 = vunpack.c.l.b16 %v41
  %v213 = vunpack.c.l.b16 %v42
  %v214 = vunpack.c.l.b16 %v43
  %v215 = vunpack.c.l.b16 %v44
  %v216 = vunpack.c.l.b16 %v45
  %v217 = vunpack.c.l.b16 %v46
  %v218 = vunpack.c.l.b16 %v47
  %v219 = vunpack.c.l.b16 %v48
  %v220 = vunpack.c.l.b16 %v49
  %v221 = vunpack.c.l.b16 %v50
  %v222 = vunpack.c.l.b16 %v51
  %v223 = vunpack.c.l.b16 %v52
  %v224 = vunpack.c.l.b16 %v53
  %v225 = vunpack.c.l.b16 %v54
  %v226 = vunpack.c.l.b16 %v55
  %v227 = vunpack.c.l.b16 %v56
  %v228 = vunpack.c.l.b16 %v57
  %v229 = vunpack.c.l.b16 %v58
  %v230 = vunpack.c.l.b16 %v59
  %v231 = vunpack.c.l.b16 %v60
  %v232 = vunpack.c.l.b16 %v61
  %v233 = vunpack.c.l.b16 %v62
  %v234 = vunpack.c.l.b16 %v63
  %v235 = vunpack.c.l.b16 %v64
  %v236 = vpack.c.b16 %v212, %v211
  %v237 = vpack.c.b16 %v214, %v213
  %v238 = vpack.c.b16 %v216, %v215
  %v239 = vpack.c.b16 %v218, %v217
  %v240 = vpack.c.b16 %v220, %v219
  %v241 = vpack.c.b16 %v222, %v221
  %v242 = vpack.c.b16 %v224, %v223
  %v243 = vpack.c.b16 %v226, %v225
  %v244 = vpack.c.b16 %v228, %v227
  %v245 = vpack.c.b16 %v230, %v229
  %v246 = vpack.c.b16 %v232, %v231
  %v247 = vpack.c.b16 %v234, %v233
  %v248 = vpack.c.b16 %v235, %v235
  %vm261 = vcmask 588800
  %v263 = vsel %vm261, %v148, 0
  %v266 = vsel %vm261, %v150, 0
  %v269 = vsel %vm261, %v152, 0
  %v272 = vsel %vm261, %v154, 0
  %v275 = vsel %vm261, %v156, 0
  %v278 = vsel %vm261, %v158, 0
  %v281 = vsel %vm261, %v160, 0
  %v284 = vsel %vm261, %v162, 0
  %v287 = vsel %vm261, %v164, 0
  %v290 = vsel %vm261, %v166, 0
  %v293 = vsel %vm261, %v168, 0
  %v296 = vsel %vm261, %v170, 0
  %v299 = vsel %vm261, %v172, 0
  %vm301 = vcmask 1043456
  %v303 = vsel %vm301, %v248, 0
  %305 = vmatprep.subr.bf16.mxu0 0
  %306 = vmatpush1.bf16.msra.mxu0 %v236
  %307 = vmatprep.subr.bf16.mxu0 0
  %308 = vmatpush1.bf16.msra.mxu0 %v237
  %309 = vmatprep.subr.bf16.mxu0 0
  %310 = vmatpush1.bf16.msra.mxu0 %v238
  %311 = vmatprep.subr.bf16.mxu0 0
  %312 = vmatpush1.bf16.msra.mxu0 %v239
  %313 = vmatprep.subr.bf16.mxu0 0
  %314 = vmatpush1.bf16.msra.mxu0 %v240
  %315 = vmatprep.subr.bf16.mxu0 0
  %316 = vmatpush1.bf16.msra.mxu0 %v241
  %317 = vmatprep.subr.bf16.mxu0 0
  %318 = vmatpush1.bf16.msra.mxu0 %v242
  %319 = vmatprep.subr.bf16.mxu0 0
  %320 = vmatpush1.bf16.msra.mxu0 %v243
  %321 = vmatprep.subr.bf16.mxu0 0
  %322 = vmatpush1.bf16.msra.mxu0 %v244
  %323 = vmatprep.subr.bf16.mxu0 0
  %324 = vmatpush1.bf16.msra.mxu0 %v245
  %325 = vmatprep.subr.bf16.mxu0 0
  %326 = vmatpush1.bf16.msra.mxu0 %v246
  %327 = vmatprep.subr.bf16.mxu0 0
  %328 = vmatpush1.bf16.msra.mxu0 %v247
  %329 = vmatprep.subr.bf16.mxu0 0
  %330 = vmatpush1.bf16.msra.mxu0 %v303
  %331 = vmatprep.subr.bf16.mxu0 0
  %332 = vmatpush1.bf16.msra.mxu0 0
  %333 = vmatprep.subr.bf16.mxu0 0
  %334 = vmatpush1.bf16.msra.mxu0 0
  %335 = vmatprep.subr.bf16.mxu0 0
  %336 = vmatpush1.bf16.msra.mxu0 0
  %337 = vmatprep.mubr.bf16.mxu0 %v263
  %338 = vmatmul.mubr.bf16.gmra.mrb[0].mxu0 %v147
  %v339 = vpop.f32.mrb[0].mxu0
  %v340 = vadd.f32 %v70, %v339
  %v341 = vpop.f32.mrb[0].mxu0
  %v342 = vpop.f32.mrb[0].mxu0
  %v343 = vadd.f32 %v70, %v342
  %v344 = vpop.f32.mrb[0].mxu0
  %345 = vmatprep.mubr.bf16.mxu0 %v266
  %346 = vmatmul.mubr.bf16.gmra.mrb[0].mxu0 %v149
  %v347 = vpop.f32.mrb[0].mxu0
  %v348 = vadd.f32 %v70, %v347
  %v349 = vpop.f32.mrb[0].mxu0
  %v350 = vpop.f32.mrb[0].mxu0
  %v351 = vadd.f32 %v70, %v350
  %v352 = vpop.f32.mrb[0].mxu0
  %353 = vmatprep.mubr.bf16.mxu0 %v269
  %354 = vmatmul.mubr.bf16.gmra.mrb[0].mxu0 %v151
  %v355 = vpop.f32.mrb[0].mxu0
  %v356 = vadd.f32 %v70, %v355
  %v357 = vpop.f32.mrb[0].mxu0
  %v358 = vpop.f32.mrb[0].mxu0
  %v359 = vadd.f32 %v70, %v358
  %v360 = vpop.f32.mrb[0].mxu0
  %361 = vmatprep.mubr.bf16.mxu0 %v272
  %362 = vmatmul.mubr.bf16.gmra.mrb[0].mxu0 %v153
  %v363 = vpop.f32.mrb[0].mxu0
  %v364 = vadd.f32 %v70, %v363
  %v365 = vpop.f32.mrb[0].mxu0
  %v366 = vpop.f32.mrb[0].mxu0
  %v367 = vadd.f32 %v70, %v366
  %v368 = vpop.f32.mrb[0].mxu0
  %369 = vmatprep.mubr.bf16.mxu0 %v275
  %370 = vmatmul.mubr.bf16.gmra.mrb[0].mxu0 %v155
  %v371 = vpop.f32.mrb[0].mxu0
  %v372 = vadd.f32 %v70, %v371
  %v373 = vpop.f32.mrb[0].mxu0
  %v374 = vpop.f32.mrb[0].mxu0
  %v375 = vadd.f32 %v70, %v374
  %v376 = vpop.f32.mrb[0].mxu0
  %377 = vmatprep.mubr.bf16.mxu0 %v278
  %378 = vmatmul.mubr.bf16.gmra.mrb[0].mxu0 %v157
  %v379 = vpop.f32.mrb[0].mxu0
  %v380 = vadd.f32 %v70, %v379
  %v381 = vpop.f32.mrb[0].mxu0
  %v382 = vpop.f32.mrb[0].mxu0
  %v383 = vadd.f32 %v70, %v382
  %v384 = vpop.f32.mrb[0].mxu0
  %385 = vmatprep.mubr.bf16.mxu0 %v281
  %386 = vmatmul.mubr.bf16.gmra.mrb[0].mxu0 %v159
  %v387 = vpop.f32.mrb[0].mxu0
  %v388 = vadd.f32 %v70, %v387
  %v389 = vpop.f32.mrb[0].mxu0
  %v390 = vpop.f32.mrb[0].mxu0
  %v391 = vadd.f32 %v70, %v390
  %v392 = vpop.f32.mrb[0].mxu0
  %393 = vmatprep.mubr.bf16.mxu0 %v284
  %394 = vmatmul.mubr.bf16.gmra.mrb[0].mxu0 %v161
  %v395 = vpop.f32.mrb[0].mxu0
  %v396 = vadd.f32 %v70, %v395
  %v397 = vpop.f32.mrb[0].mxu0
  %v398 = vpop.f32.mrb[0].mxu0
  %v399 = vadd.f32 %v70, %v398
  %v400 = vpop.f32.mrb[0].mxu0
  %401 = vmatprep.mubr.bf16.mxu0 %v287
  %402 = vmatmul.mubr.bf16.gmra.mrb[0].mxu0 %v163
  %v403 = vpop.f32.mrb[0].mxu0
  %v404 = vadd.f32 %v70, %v403
  %v405 = vpop.f32.mrb[0].mxu0
  %v406 = vpop.f32.mrb[0].mxu0
  %v407 = vadd.f32 %v70, %v406
  %v408 = vpop.f32.mrb[0].mxu0
  %409 = vmatprep.mubr.bf16.mxu0 %v290
  %410 = vmatmul.mubr.bf16.gmra.mrb[0].mxu0 %v165
  %v411 = vpop.f32.mrb[0].mxu0
  %v412 = vadd.f32 %v70, %v411
  %v413 = vpop.f32.mrb[0].mxu0
  %v414 = vpop.f32.mrb[0].mxu0
  %v415 = vadd.f32 %v70, %v414
  %v416 = vpop.f32.mrb[0].mxu0
  %417 = vmatprep.mubr.bf16.mxu0 %v293
  %418 = vmatmul.mubr.bf16.gmra.mrb[0].mxu0 %v167
  %v419 = vpop.f32.mrb[0].mxu0
  %v420 = vadd.f32 %v70, %v419
  %v421 = vpop.f32.mrb[0].mxu0
  %v422 = vpop.f32.mrb[0].mxu0
  %v423 = vadd.f32 %v70, %v422
  %v424 = vpop.f32.mrb[0].mxu0
  %425 = vmatprep.mubr.bf16.mxu0 %v296
  %426 = vmatmul.mubr.bf16.gmra.mrb[0].mxu0 %v169
  %v427 = vpop.f32.mrb[0].mxu0
  %v428 = vadd.f32 %v70, %v427
  %v429 = vpop.f32.mrb[0].mxu0
  %v430 = vpop.f32.mrb[0].mxu0
  %v431 = vadd.f32 %v70, %v430
  %v432 = vpop.f32.mrb[0].mxu0
  %433 = vmatprep.mubr.bf16.mxu0 %v299
  %434 = vmatmul.mubr.bf16.gmra.mrb[0].mxu0 %v171
  %v435 = vpop.f32.mrb[0].mxu0
  %v436 = vadd.f32 %v70, %v435
  %v437 = vpop.f32.mrb[0].mxu0
  %v438 = vpop.f32.mrb[0].mxu0
  %v439 = vpop.f32.mrb[0].mxu0
  %440 = vdwg.mxu0
  %v441 = vmax.f32 %v340, 0.0
  %v442 = vmax.f32 %v343, 0.0
  %v443 = vmax.f32 %v348, 0.0
  %v444 = vmax.f32 %v351, 0.0
  %v445 = vmax.f32 %v356, 0.0
  %v446 = vmax.f32 %v359, 0.0
  %v447 = vmax.f32 %v364, 0.0
  %v448 = vmax.f32 %v367, 0.0
  %v449 = vmax.f32 %v372, 0.0
  %v450 = vmax.f32 %v375, 0.0
  %v451 = vmax.f32 %v380, 0.0
  %v452 = vmax.f32 %v383, 0.0
  %v453 = vmax.f32 %v388, 0.0
  %v454 = vmax.f32 %v391, 0.0
  %v455 = vmax.f32 %v396, 0.0
  %v456 = vmax.f32 %v399, 0.0
  %v457 = vmax.f32 %v404, 0.0
  %v458 = vmax.f32 %v407, 0.0
  %v459 = vmax.f32 %v412, 0.0
  %v460 = vmax.f32 %v415, 0.0
  %v461 = vmax.f32 %v420, 0.0
  %v462 = vmax.f32 %v423, 0.0
  %v463 = vmax.f32 %v428, 0.0
  %v464 = vmax.f32 %v431, 0.0
  %v465 = vmax.f32 %v436, 0.0
  %466 = vst [vmem:[%s3] sm:$0xff] %v441
  %467 = vst [vmem:[%s3 + $0x8] sm:$0xff] %v442
  %468 = vst [vmem:[%s3 + $0x10] sm:$0xff] %v443
  %469 = vst [vmem:[%s3 + $0x18] sm:$0xff] %v444
  %470 = vst [vmem:[%s3 + $0x20] sm:$0xff] %v445
  %471 = vst [vmem:[%s3 + $0x28] sm:$0xff] %v446
  %472 = vst [vmem:[%s3 + $0x30] sm:$0xff] %v447
  %473 = vst [vmem:[%s3 + $0x38] sm:$0xff] %v448
  %474 = vst [vmem:[%s3 + $0x40] sm:$0xff] %v449
  %475 = vst [vmem:[%s3 + $0x48] sm:$0xff] %v450
  %476 = vst [vmem:[%s3 + $0x50] sm:$0xff] %v451
  %477 = vst [vmem:[%s3 + $0x58] sm:$0xff] %v452
  %478 = vst [vmem:[%s3 + $0x60] sm:$0xff] %v453
  %479 = vst [vmem:[%s3 + $0x68] sm:$0xff] %v454
  %480 = vst [vmem:[%s3 + $0x70] sm:$0xff] %v455
  %481 = vst [vmem:[%s3 + $0x78] sm:$0xff] %v456
  %482 = vst [vmem:[%s3 + $0x80] sm:$0xff] %v457
  %483 = vst [vmem:[%s3 + $0x88] sm:$0xff] %v458
  %484 = vst [vmem:[%s3 + $0x90] sm:$0xff] %v459
  %485 = vst [vmem:[%s3 + $0x98] sm:$0xff] %v460
  %486 = vst [vmem:[%s3 + $0xa0] sm:$0xff] %v461
  %487 = vst [vmem:[%s3 + $0xa8] sm:$0xff] %v462
  %488 = vst [vmem:[%s3 + $0xb0] sm:$0xff] %v463
  %489 = vst [vmem:[%s3 + $0xb8] sm:$0xff] %v464
  %490 = vst [vmem:[%s3 + $0xc0] sm:$0xff] %v465
  // Predicated region
  $region14: #{net_forward.7} parent=0 // pred_check
    _
  $region15: #{net_forward.7} parent=0 // pred_check_branch
    %492 = sbr.rel (0) target = $region17
  $region16: #{net_forward.7} parent=0 // pred_region
    _
  $region17: #{net_forward.7} parent=0 // pred_fallthru
    _
  // Predicated region
  $region18: #{net_forward.7} parent=0 // pred_check
    _
  $region19: #{net_forward.7} parent=0 // pred_check_branch
    %494 = sbr.rel (0) target = $region21
  $region20: #{net_forward.7} parent=0 // pred_region
    _
  $region21: #{net_forward.7} parent=0 // pred_fallthru
    _

// kernel: net_forward.8
$region0: #{net_forward.8}
  #allocation0 [shape = 'u32[]', space=smem, size = 0x4, offset = 0x4, fixed_abs, tag = 'smem constant byte address 0x4 - core index']
  #allocation1 [shape = 'u32[144,128]{1,0:T(1,128)}', space=vmem, size = 0x12000, scoped, tag = 'internal scratch']
  %s0 = inlined_call_operand.vmem [shape: f32[10,2,5,256], index: 0, kind: input, shape index: {}]
  %s1 = inlined_call_operand.vmem [shape: f32[10,5,128], index: 1, kind: output, shape index: {}]
  %s2 = sld [smem:[#allocation0]]
  $region14: #{net_forward.8} parent=0
    _
  %s4 = ssub.s32 1, %s2
  %s5 = scalar_select 0, %s4, %s2
  // Predicated region
  $region2: #{net_forward.8} parent=0 // pred_check
    _
  $region3: #{net_forward.8} parent=0 // pred_check_branch
    %7 = sbr.rel (0) target = $region5
  $region4: #{net_forward.8} parent=0 // pred_region
    _
  $region5: #{net_forward.8} parent=0 // pred_fallthru
    _
  %v8 = vld [vmem:[%s0] sm:$0x1f]
  %v9 = vld [vmem:[%s0 + $0x8] sm:$0x1f]
  %v10 = vld [vmem:[%s0 + $0x10] sm:$0x1f]
  %v11 = vld [vmem:[%s0 + $0x18] sm:$0x1f]
  %v12 = vld [vmem:[%s0 + $0x20] sm:$0x1f]
  %v13 = vld [vmem:[%s0 + $0x28] sm:$0x1f]
  %v14 = vld [vmem:[%s0 + $0x30] sm:$0x1f]
  %v15 = vld [vmem:[%s0 + $0x38] sm:$0x1f]
  %v16 = vld [vmem:[%s0 + $0x40] sm:$0x1f]
  %v17 = vld [vmem:[%s0 + $0x48] sm:$0x1f]
  %v18 = vld [vmem:[%s0 + $0x50] sm:$0x1f]
  %v19 = vld [vmem:[%s0 + $0x58] sm:$0x1f]
  %v20 = vld [vmem:[%s0 + $0x60] sm:$0x1f]
  %v21 = vld [vmem:[%s0 + $0x68] sm:$0x1f]
  %v22 = vld [vmem:[%s0 + $0x70] sm:$0x1f]
  %v23 = vld [vmem:[%s0 + $0x78] sm:$0x1f]
  %v24 = vld [vmem:[%s0 + $0x80] sm:$0x1f]
  %v25 = vld [vmem:[%s0 + $0x88] sm:$0x1f]
  %v26 = vld [vmem:[%s0 + $0x90] sm:$0x1f]
  %v27 = vld [vmem:[%s0 + $0x98] sm:$0x1f]
  %v28 = vld [vmem:[%s0 + $0xa0] sm:$0x1f]
  %v29 = vld [vmem:[%s0 + $0xa8] sm:$0x1f]
  %v30 = vld [vmem:[%s0 + $0xb0] sm:$0x1f]
  %v31 = vld [vmem:[%s0 + $0xb8] sm:$0x1f]
  %v32 = vld [vmem:[%s0 + $0xc0] sm:$0x1f]
  %v33 = vld [vmem:[%s0 + $0xc8] sm:$0x1f]
  %v34 = vld [vmem:[%s0 + $0xd0] sm:$0x1f]
  %v35 = vld [vmem:[%s0 + $0xd8] sm:$0x1f]
  %v36 = vld [vmem:[%s0 + $0xe0] sm:$0x1f]
  %v37 = vld [vmem:[%s0 + $0xe8] sm:$0x1f]
  %v38 = vld [vmem:[%s0 + $0xf0] sm:$0x1f]
  %v39 = vld [vmem:[%s0 + $0xf8] sm:$0x1f]
  %v40 = vld [vmem:[%s0 + $0x100] sm:$0x1f]
  %v41 = vld [vmem:[%s0 + $0x108] sm:$0x1f]
  %v42 = vld [vmem:[%s0 + $0x110] sm:$0x1f]
  %v43 = vld [vmem:[%s0 + $0x118] sm:$0x1f]
  %v44 = vld [vmem:[%s0 + $0x120] sm:$0x1f]
  %v45 = vld [vmem:[%s0 + $0x128] sm:$0x1f]
  %v46 = vld [vmem:[%s0 + $0x130] sm:$0x1f]
  %v47 = vld [vmem:[%s0 + $0x138] sm:$0x1f]
  %v48 = vmax.f32 %v8, %v10
  %v49 = vmax.f32 %v9, %v11
  %v50 = vmax.f32 %v12, %v14
  %v51 = vmax.f32 %v13, %v15
  %v52 = vmax.f32 %v16, %v18
  %v53 = vmax.f32 %v17, %v19
  %v54 = vmax.f32 %v20, %v22
  %v55 = vmax.f32 %v21, %v23
  %v56 = vmax.f32 %v24, %v26
  %v57 = vmax.f32 %v25, %v27
  %v58 = vmax.f32 %v28, %v30
  %v59 = vmax.f32 %v29, %v31
  %v60 = vmax.f32 %v32, %v34
  %v61 = vmax.f32 %v33, %v35
  %v62 = vmax.f32 %v36, %v38
  %v63 = vmax.f32 %v37, %v39
  %v64 = vmax.f32 %v40, %v42
  %v65 = vmax.f32 %v41, %v43
  %v66 = vmax.f32 %v44, %v46
  %v67 = vmax.f32 %v45, %v47
  %v68 = vmax.f32 %v48, %v49
  %v69 = vmax.f32 %v50, %v51
  %v70 = vmax.f32 %v52, %v53
  %v71 = vmax.f32 %v54, %v55
  %v72 = vmax.f32 %v56, %v57
  %v73 = vmax.f32 %v58, %v59
  %v74 = vmax.f32 %v60, %v61
  %v75 = vmax.f32 %v62, %v63
  %v76 = vmax.f32 %v64, %v65
  %v77 = vmax.f32 %v66, %v67
  %78 = vst [vmem:[%s1] sm:$0x1f] %v68
  %79 = vst [vmem:[%s1 + $0x8] sm:$0x1f] %v69
  %80 = vst [vmem:[%s1 + $0x10] sm:$0x1f] %v70
  %81 = vst [vmem:[%s1 + $0x18] sm:$0x1f] %v71
  %82 = vst [vmem:[%s1 + $0x20] sm:$0x1f] %v72
  %83 = vst [vmem:[%s1 + $0x28] sm:$0x1f] %v73
  %84 = vst [vmem:[%s1 + $0x30] sm:$0x1f] %v74
  %85 = vst [vmem:[%s1 + $0x38] sm:$0x1f] %v75
  %86 = vst [vmem:[%s1 + $0x40] sm:$0x1f] %v76
  %87 = vst [vmem:[%s1 + $0x48] sm:$0x1f] %v77
  // Predicated region
  $region6: #{net_forward.8} parent=0 // pred_check
    _
  $region7: #{net_forward.8} parent=0 // pred_check_branch
    %89 = sbr.rel (0) target = $region9
  $region8: #{net_forward.8} parent=0 // pred_region
    _
  $region9: #{net_forward.8} parent=0 // pred_fallthru
    _
  // Predicated region
  $region10: #{net_forward.8} parent=0 // pred_check
    _
  $region11: #{net_forward.8} parent=0 // pred_check_branch
    %91 = sbr.rel (0) target = $region13
  $region12: #{net_forward.8} parent=0 // pred_region
    _
  $region13: #{net_forward.8} parent=0 // pred_fallthru
    _

// kernel: net_forward.9
$region0: #{net_forward.9}
  #allocation0 [shape = 'u32[]', space=smem, size = 0x4, offset = 0x4, fixed_abs, tag = 'smem constant byte address 0x4 - core index']
  #allocation1 [shape = 'u32[144,128]{1,0:T(1,128)}', space=vmem, size = 0x12000, scoped, tag = 'internal scratch']
  %s0 = inlined_call_operand.vmem [shape: bf16[2,3200], index: 0, kind: input, shape index: {}]
  %s1 = inlined_call_operand.vmem [shape: bf16[3200,128], index: 1, kind: input, shape index: {}]
  %s2 = inlined_call_operand.vmem [shape: f32[1,128], index: 2, kind: input, shape index: {}]
  %s3 = inlined_call_operand.vmem [shape: bf16[128,128], index: 3, kind: input, shape index: {}]
  %s4 = inlined_call_operand.vmem [shape: f32[1,128], index: 4, kind: input, shape index: {}]
  %s5 = inlined_call_operand.vmem [shape: bf16[128,128], index: 5, kind: input, shape index: {}]
  %s6 = inlined_call_operand.vmem [shape: f32[1,128], index: 6, kind: input, shape index: {}]
  %s7 = inlined_call_operand.hbm [shape: f32[2,128], index: 7, kind: output, shape index: {}]
  %s8 = sld [smem:[#allocation0]]
  $region38: #{net_forward.9} parent=0
    _
  %s10 = ssub.s32 1, %s8
  %s11 = scalar_select 0, %s10, %s8
  $region1: #{net_forward.9} parent=0
    #allocation2 [shape = 'u8[1024]{0}', space=vmem, size = 0x400, scoped, tag = 'output window, operand 0, single buffered']
    #allocation3 [shape = 's32[1]{0}', space=sflag, size = 0x4, scoped, tag = 'scoped memory for net_forward.9']
    %12 = vsyncpa [#allocation3], 0
    // Predicated region
    $region2: #{net_forward.9} parent=1 // pred_check
      _
    $region3: #{net_forward.9} parent=1 // pred_check_branch
      %14 = sbr.rel (0) target = $region5
    $region4: #{net_forward.9} parent=1 // pred_region
      _
    $region5: #{net_forward.9} parent=1 // pred_fallthru
      _
    // Predicated region
    $region6: #{net_forward.9} parent=1 // pred_check
      _
    $region7: #{net_forward.9} parent=1 // pred_check_branch
      %16 = sbr.rel (0) target = $region9
    $region8: #{net_forward.9} parent=1 // pred_region
      _
    $region9: #{net_forward.9} parent=1 // pred_fallthru
      _
    // Predicated region
    $region10: #{net_forward.9} parent=1 // pred_check
      _
    $region11: #{net_forward.9} parent=1 // pred_check_branch
      %18 = sbr.rel (0) target = $region13
    $region12: #{net_forward.9} parent=1 // pred_region
      _
    $region13: #{net_forward.9} parent=1 // pred_fallthru
      _
    // Predicated region
    $region14: #{net_forward.9} parent=1 // pred_check
      _
    $region15: #{net_forward.9} parent=1 // pred_check_branch
      %20 = sbr.rel (0) target = $region17
    $region16: #{net_forward.9} parent=1 // pred_region
      _
    $region17: #{net_forward.9} parent=1 // pred_fallthru
      _
    // Predicated region
    $region18: #{net_forward.9} parent=1 // pred_check
      _
    $region19: #{net_forward.9} parent=1 // pred_check_branch
      %22 = sbr.rel (0) target = $region21
    $region20: #{net_forward.9} parent=1 // pred_region
      _
    $region21: #{net_forward.9} parent=1 // pred_fallthru
      _
    // Predicated region
    $region22: #{net_forward.9} parent=1 // pred_check
      _
    $region23: #{net_forward.9} parent=1 // pred_check_branch
      %24 = sbr.rel (0) target = $region25
    $region24: #{net_forward.9} parent=1 // pred_region
      _
    $region25: #{net_forward.9} parent=1 // pred_fallthru
      _
    // Predicated region
    $region26: #{net_forward.9} parent=1 // pred_check
      _
    $region27: #{net_forward.9} parent=1 // pred_check_branch
      %26 = sbr.rel (0) target = $region29
    $region28: #{net_forward.9} parent=1 // pred_region
      _
    $region29: #{net_forward.9} parent=1 // pred_fallthru
      _
    %v28 = vld [vmem:[%s0] sm:$0xff]
    %v29 = vld [vmem:[%s0 + $0x8] sm:$0xff]
    %v30 = vld [vmem:[%s0 + $0x10] sm:$0xff]
    %v31 = vld [vmem:[%s0 + $0x18] sm:$0x1]
    %v32 = vld [vmem:[%s1] sm:$0xf]
    %v33 = vld [vmem:[%s1 + $0x4] sm:$0xf]
    %v34 = vld [vmem:[%s1 + $0x8] sm:$0xf]
    %v35 = vld [vmem:[%s1 + $0xc] sm:$0xf]
    %v36 = vld [vmem:[%s1 + $0x10] sm:$0xf]
    %v37 = vld [vmem:[%s1 + $0x14] sm:$0xf]
    %v38 = vld [vmem:[%s1 + $0x18] sm:$0xf]
    %v39 = vld [vmem:[%s1 + $0x1c] sm:$0xf]
    %v40 = vld [vmem:[%s1 + $0x20] sm:$0xf]
    %v41 = vld [vmem:[%s1 + $0x24] sm:$0xf]
    %v42 = vld [vmem:[%s1 + $0x28] sm:$0xf]
    %v43 = vld [vmem:[%s1 + $0x2c] sm:$0xf]
    %v44 = vld [vmem:[%s1 + $0x30] sm:$0xf]
    %v45 = vld [vmem:[%s1 + $0x34] sm:$0xf]
    %v46 = vld [vmem:[%s1 + $0x38] sm:$0xf]
    %v47 = vld [vmem:[%s1 + $0x3c] sm:$0xf]
    %v48 = vld [vmem:[%s1 + $0x40] sm:$0xf]
    %v49 = vld [vmem:[%s1 + $0x44] sm:$0xf]
    %v50 = vld [vmem:[%s1 + $0x48] sm:$0xf]
    %v51 = vld [vmem:[%s1 + $0x4c] sm:$0xf]
    %v52 = vld [vmem:[%s1 + $0x50] sm:$0xf]
    %v53 = vld [vmem:[%s1 + $0x54] sm:$0xf]
    %v54 = vld [vmem:[%s1 + $0x58] sm:$0xf]
    %v55 = vld [vmem:[%s1 + $0x5c] sm:$0xf]
    %v56 = vld [vmem:[%s1 + $0x60] sm:$0xf]
    %v57 = vld [vmem:[%s1 + $0x64] sm:$0xf]
    %v58 = vld [vmem:[%s1 + $0x68] sm:$0xf]
    %v59 = vld [vmem:[%s1 + $0x6c] sm:$0xf]
    %v60 = vld [vmem:[%s1 + $0x70] sm:$0xf]
    %v61 = vld [vmem:[%s1 + $0x74] sm:$0xf]
    %v62 = vld [vmem:[%s1 + $0x78] sm:$0xf]
    %v63 = vld [vmem:[%s1 + $0x7c] sm:$0xf]
    %v64 = vld [vmem:[%s1 + $0x80] sm:$0xf]
    %v65 = vld [vmem:[%s1 + $0x84] sm:$0xf]
    %v66 = vld [vmem:[%s1 + $0x88] sm:$0xf]
    %v67 = vld [vmem:[%s1 + $0x8c] sm:$0xf]
    %v68 = vld [vmem:[%s1 + $0x90] sm:$0xf]
    %v69 = vld [vmem:[%s1 + $0x94] sm:$0xf]
    %v70 = vld [vmem:[%s1 + $0x98] sm:$0xf]
    %v71 = vld [vmem:[%s1 + $0x9c] sm:$0xf]
    %v72 = vld [vmem:[%s1 + $0xa0] sm:$0xf]
    %v73 = vld [vmem:[%s1 + $0xa4] sm:$0xf]
    %v74 = vld [vmem:[%s1 + $0xa8] sm:$0xf]
    %v75 = vld [vmem:[%s1 + $0xac] sm:$0xf]
    %v76 = vld [vmem:[%s1 + $0xb0] sm:$0xf]
    %v77 = vld [vmem:[%s1 + $0xb4] sm:$0xf]
    %v78 = vld [vmem:[%s1 + $0xb8] sm:$0xf]
    %v79 = vld [vmem:[%s1 + $0xbc] sm:$0xf]
    %v80 = vld [vmem:[%s1 + $0xc0] sm:$0xf]
    %v81 = vld [vmem:[%s1 + $0xc4] sm:$0xf]
    %v82 = vld [vmem:[%s1 + $0xc8] sm:$0xf]
    %v83 = vld [vmem:[%s1 + $0xcc] sm:$0xf]
    %v84 = vld [vmem:[%s1 + $0xd0] sm:$0xf]
    %v85 = vld [vmem:[%s1 + $0xd4] sm:$0xf]
    %v86 = vld [vmem:[%s1 + $0xd8] sm:$0xf]
    %v87 = vld [vmem:[%s1 + $0xdc] sm:$0xf]
    %v88 = vld [vmem:[%s1 + $0xe0] sm:$0xf]
    %v89 = vld [vmem:[%s1 + $0xe4] sm:$0xf]
    %v90 = vld [vmem:[%s1 + $0xe8] sm:$0xf]
    %v91 = vld [vmem:[%s1 + $0xec] sm:$0xf]
    %v92 = vld [vmem:[%s1 + $0xf0] sm:$0xf]
    %v93 = vld [vmem:[%s1 + $0xf4] sm:$0xf]
    %v94 = vld [vmem:[%s1 + $0xf8] sm:$0xf]
    %v95 = vld [vmem:[%s1 + $0xfc] sm:$0xf]
    %v96 = vld [vmem:[%s1 + $0x100] sm:$0xf]
    %v97 = vld [vmem:[%s1 + $0x104] sm:$0xf]
    %v98 = vld [vmem:[%s1 + $0x108] sm:$0xf]
    %v99 = vld [vmem:[%s1 + $0x10c] sm:$0xf]
    %v100 = vld [vmem:[%s1 + $0x110] sm:$0xf]
    %v101 = vld [vmem:[%s1 + $0x114] sm:$0xf]
    %v102 = vld [vmem:[%s1 + $0x118] sm:$0xf]
    %v103 = vld [vmem:[%s1 + $0x11c] sm:$0xf]
    %v104 = vld [vmem:[%s1 + $0x120] sm:$0xf]
    %v105 = vld [vmem:[%s1 + $0x124] sm:$0xf]
    %v106 = vld [vmem:[%s1 + $0x128] sm:$0xf]
    %v107 = vld [vmem:[%s1 + $0x12c] sm:$0xf]
    %v108 = vld [vmem:[%s1 + $0x130] sm:$0xf]
    %v109 = vld [vmem:[%s1 + $0x134] sm:$0xf]
    %v110 = vld [vmem:[%s1 + $0x138] sm:$0xf]
    %v111 = vld [vmem:[%s1 + $0x13c] sm:$0xf]
    %v112 = vld [vmem:[%s1 + $0x140] sm:$0xf]
    %v113 = vld [vmem:[%s1 + $0x144] sm:$0xf]
    %v114 = vld [vmem:[%s1 + $0x148] sm:$0xf]
    %v115 = vld [vmem:[%s1 + $0x14c] sm:$0xf]
    %v116 = vld [vmem:[%s1 + $0x150] sm:$0xf]
    %v117 = vld [vmem:[%s1 + $0x154] sm:$0xf]
    %v118 = vld [vmem:[%s1 + $0x158] sm:$0xf]
    %v119 = vld [vmem:[%s1 + $0x15c] sm:$0xf]
    %v120 = vld [vmem:[%s1 + $0x160] sm:$0xf]
    %v121 = vld [vmem:[%s1 + $0x164] sm:$0xf]
    %v122 = vld [vmem:[%s1 + $0x168] sm:$0xf]
    %v123 = vld [vmem:[%s1 + $0x16c] sm:$0xf]
    %v124 = vld [vmem:[%s1 + $0x170] sm:$0xf]
    %v125 = vld [vmem:[%s1 + $0x174] sm:$0xf]
    %v126 = vld [vmem:[%s1 + $0x178] sm:$0xf]
    %v127 = vld [vmem:[%s1 + $0x17c] sm:$0xf]
    %v128 = vld [vmem:[%s1 + $0x180] sm:$0xf]
    %v129 = vld [vmem:[%s1 + $0x184] sm:$0xf]
    %v130 = vld [vmem:[%s1 + $0x188] sm:$0xf]
    %v131 = vld [vmem:[%s1 + $0x18c] sm:$0xf]
    %v132 = vld [vmem:[%s1 + $0x190] sm:$0xf]
    %v133 = vld [vmem:[%s1 + $0x194] sm:$0xf]
    %v134 = vld [vmem:[%s1 + $0x198] sm:$0xf]
    %v135 = vld [vmem:[%s1 + $0x19c] sm:$0xf]
    %v136 = vld [vmem:[%s1 + $0x1a0] sm:$0xf]
    %v137 = vld [vmem:[%s1 + $0x1a4] sm:$0xf]
    %v138 = vld [vmem:[%s1 + $0x1a8] sm:$0xf]
    %v139 = vld [vmem:[%s1 + $0x1ac] sm:$0xf]
    %v140 = vld [vmem:[%s1 + $0x1b0] sm:$0xf]
    %v141 = vld [vmem:[%s1 + $0x1b4] sm:$0xf]
    %v142 = vld [vmem:[%s1 + $0x1b8] sm:$0xf]
    %v143 = vld [vmem:[%s1 + $0x1bc] sm:$0xf]
    %v144 = vld [vmem:[%s1 + $0x1c0] sm:$0xf]
    %v145 = vld [vmem:[%s1 + $0x1c4] sm:$0xf]
    %v146 = vld [vmem:[%s1 + $0x1c8] sm:$0xf]
    %v147 = vld [vmem:[%s1 + $0x1cc] sm:$0xf]
    %v148 = vld [vmem:[%s1 + $0x1d0] sm:$0xf]
    %v149 = vld [vmem:[%s1 + $0x1d4] sm:$0xf]
    %v150 = vld [vmem:[%s1 + $0x1d8] sm:$0xf]
    %v151 = vld [vmem:[%s1 + $0x1dc] sm:$0xf]
    %v152 = vld [vmem:[%s1 + $0x1e0] sm:$0xf]
    %v153 = vld [vmem:[%s1 + $0x1e4] sm:$0xf]
    %v154 = vld [vmem:[%s1 + $0x1e8] sm:$0xf]
    %v155 = vld [vmem:[%s1 + $0x1ec] sm:$0xf]
    %v156 = vld [vmem:[%s1 + $0x1f0] sm:$0xf]
    %v157 = vld [vmem:[%s1 + $0x1f4] sm:$0xf]
    %v158 = vld [vmem:[%s1 + $0x1f8] sm:$0xf]
    %v159 = vld [vmem:[%s1 + $0x1fc] sm:$0xf]
    %v160 = vld [vmem:[%s1 + $0x200] sm:$0xf]
    %v161 = vld [vmem:[%s1 + $0x204] sm:$0xf]
    %v162 = vld [vmem:[%s1 + $0x208] sm:$0xf]
    %v163 = vld [vmem:[%s1 + $0x20c] sm:$0xf]
    %v164 = vld [vmem:[%s1 + $0x210] sm:$0xf]
    %v165 = vld [vmem:[%s1 + $0x214] sm:$0xf]
    %v166 = vld [vmem:[%s1 + $0x218] sm:$0xf]
    %v167 = vld [vmem:[%s1 + $0x21c] sm:$0xf]
    %v168 = vld [vmem:[%s1 + $0x220] sm:$0xf]
    %v169 = vld [vmem:[%s1 + $0x224] sm:$0xf]
    %v170 = vld [vmem:[%s1 + $0x228] sm:$0xf]
    %v171 = vld [vmem:[%s1 + $0x22c] sm:$0xf]
    %v172 = vld [vmem:[%s1 + $0x230] sm:$0xf]
    %v173 = vld [vmem:[%s1 + $0x234] sm:$0xf]
    %v174 = vld [vmem:[%s1 + $0x238] sm:$0xf]
    %v175 = vld [vmem:[%s1 + $0x23c] sm:$0xf]
    %v176 = vld [vmem:[%s1 + $0x240] sm:$0xf]
    %v177 = vld [vmem:[%s1 + $0x244] sm:$0xf]
    %v178 = vld [vmem:[%s1 + $0x248] sm:$0xf]
    %v179 = vld [vmem:[%s1 + $0x24c] sm:$0xf]
    %v180 = vld [vmem:[%s1 + $0x250] sm:$0xf]
    %v181 = vld [vmem:[%s1 + $0x254] sm:$0xf]
    %v182 = vld [vmem:[%s1 + $0x258] sm:$0xf]
    %v183 = vld [vmem:[%s1 + $0x25c] sm:$0xf]
    %v184 = vld [vmem:[%s1 + $0x260] sm:$0xf]
    %v185 = vld [vmem:[%s1 + $0x264] sm:$0xf]
    %v186 = vld [vmem:[%s1 + $0x268] sm:$0xf]
    %v187 = vld [vmem:[%s1 + $0x26c] sm:$0xf]
    %v188 = vld [vmem:[%s1 + $0x270] sm:$0xf]
    %v189 = vld [vmem:[%s1 + $0x274] sm:$0xf]
    %v190 = vld [vmem:[%s1 + $0x278] sm:$0xf]
    %v191 = vld [vmem:[%s1 + $0x27c] sm:$0xf]
    %v192 = vld [vmem:[%s1 + $0x280] sm:$0xf]
    %v193 = vld [vmem:[%s1 + $0x284] sm:$0xf]
    %v194 = vld [vmem:[%s1 + $0x288] sm:$0xf]
    %v195 = vld [vmem:[%s1 + $0x28c] sm:$0xf]
    %v196 = vld [vmem:[%s1 + $0x290] sm:$0xf]
    %v197 = vld [vmem:[%s1 + $0x294] sm:$0xf]
    %v198 = vld [vmem:[%s1 + $0x298] sm:$0xf]
    %v199 = vld [vmem:[%s1 + $0x29c] sm:$0xf]
    %v200 = vld [vmem:[%s1 + $0x2a0] sm:$0xf]
    %v201 = vld [vmem:[%s1 + $0x2a4] sm:$0xf]
    %v202 = vld [vmem:[%s1 + $0x2a8] sm:$0xf]
    %v203 = vld [vmem:[%s1 + $0x2ac] sm:$0xf]
    %v204 = vld [vmem:[%s1 + $0x2b0] sm:$0xf]
    %v205 = vld [vmem:[%s1 + $0x2b4] sm:$0xf]
    %v206 = vld [vmem:[%s1 + $0x2b8] sm:$0xf]
    %v207 = vld [vmem:[%s1 + $0x2bc] sm:$0xf]
    %v208 = vld [vmem:[%s1 + $0x2c0] sm:$0xf]
    %v209 = vld [vmem:[%s1 + $0x2c4] sm:$0xf]
    %v210 = vld [vmem:[%s1 + $0x2c8] sm:$0xf]
    %v211 = vld [vmem:[%s1 + $0x2cc] sm:$0xf]
    %v212 = vld [vmem:[%s1 + $0x2d0] sm:$0xf]
    %v213 = vld [vmem:[%s1 + $0x2d4] sm:$0xf]
    %v214 = vld [vmem:[%s1 + $0x2d8] sm:$0xf]
    %v215 = vld [vmem:[%s1 + $0x2dc] sm:$0xf]
    %v216 = vld [vmem:[%s1 + $0x2e0] sm:$0xf]
    %v217 = vld [vmem:[%s1 + $0x2e4] sm:$0xf]
    %v218 = vld [vmem:[%s1 + $0x2e8] sm:$0xf]
    %v219 = vld [vmem:[%s1 + $0x2ec] sm:$0xf]
    %v220 = vld [vmem:[%s1 + $0x2f0] sm:$0xf]
    %v221 = vld [vmem:[%s1 + $0x2f4] sm:$0xf]
    %v222 = vld [vmem:[%s1 + $0x2f8] sm:$0xf]
    %v223 = vld [vmem:[%s1 + $0x2fc] sm:$0xf]
    %v224 = vld [vmem:[%s1 + $0x300] sm:$0xf]
    %v225 = vld [vmem:[%s1 + $0x304] sm:$0xf]
    %v226 = vld [vmem:[%s1 + $0x308] sm:$0xf]
    %v227 = vld [vmem:[%s1 + $0x30c] sm:$0xf]
    %v228 = vld [vmem:[%s1 + $0x310] sm:$0xf]
    %v229 = vld [vmem:[%s1 + $0x314] sm:$0xf]
    %v230 = vld [vmem:[%s1 + $0x318] sm:$0xf]
    %v231 = vld [vmem:[%s1 + $0x31c] sm:$0xf]
    %v232 = vld [vmem:[%s1 + $0x320] sm:$0xf]
    %v233 = vld [vmem:[%s1 + $0x324] sm:$0xf]
    %v234 = vld [vmem:[%s1 + $0x328] sm:$0xf]
    %v235 = vld [vmem:[%s1 + $0x32c] sm:$0xf]
    %v236 = vld [vmem:[%s1 + $0x330] sm:$0xf]
    %v237 = vld [vmem:[%s1 + $0x334] sm:$0xf]
    %v238 = vld [vmem:[%s1 + $0x338] sm:$0xf]
    %v239 = vld [vmem:[%s1 + $0x33c] sm:$0xf]
    %v240 = vld [vmem:[%s1 + $0x340] sm:$0xf]
    %v241 = vld [vmem:[%s1 + $0x344] sm:$0xf]
    %v242 = vld [vmem:[%s1 + $0x348] sm:$0xf]
    %v243 = vld [vmem:[%s1 + $0x34c] sm:$0xf]
    %v244 = vld [vmem:[%s1 + $0x350] sm:$0xf]
    %v245 = vld [vmem:[%s1 + $0x354] sm:$0xf]
    %v246 = vld [vmem:[%s1 + $0x358] sm:$0xf]
    %v247 = vld [vmem:[%s1 + $0x35c] sm:$0xf]
    %v248 = vld [vmem:[%s1 + $0x360] sm:$0xf]
    %v249 = vld [vmem:[%s1 + $0x364] sm:$0xf]
    %v250 = vld [vmem:[%s1 + $0x368] sm:$0xf]
    %v251 = vld [vmem:[%s1 + $0x36c] sm:$0xf]
    %v252 = vld [vmem:[%s1 + $0x370] sm:$0xf]
    %v253 = vld [vmem:[%s1 + $0x374] sm:$0xf]
    %v254 = vld [vmem:[%s1 + $0x378] sm:$0xf]
    %v255 = vld [vmem:[%s1 + $0x37c] sm:$0xf]
    %v256 = vld [vmem:[%s1 + $0x380] sm:$0xf]
    %v257 = vld [vmem:[%s1 + $0x384] sm:$0xf]
    %v258 = vld [vmem:[%s1 + $0x388] sm:$0xf]
    %v259 = vld [vmem:[%s1 + $0x38c] sm:$0xf]
    %v260 = vld [vmem:[%s1 + $0x390] sm:$0xf]
    %v261 = vld [vmem:[%s1 + $0x394] sm:$0xf]
    %v262 = vld [vmem:[%s1 + $0x398] sm:$0xf]
    %v263 = vld [vmem:[%s1 + $0x39c] sm:$0xf]
    %v264 = vld [vmem:[%s1 + $0x3a0] sm:$0xf]
    %v265 = vld [vmem:[%s1 + $0x3a4] sm:$0xf]
    %v266 = vld [vmem:[%s1 + $0x3a8] sm:$0xf]
    %v267 = vld [vmem:[%s1 + $0x3ac] sm:$0xf]
    %v268 = vld [vmem:[%s1 + $0x3b0] sm:$0xf]
    %v269 = vld [vmem:[%s1 + $0x3b4] sm:$0xf]
    %v270 = vld [vmem:[%s1 + $0x3b8] sm:$0xf]
    %v271 = vld [vmem:[%s1 + $0x3bc] sm:$0xf]
    %v272 = vld [vmem:[%s1 + $0x3c0] sm:$0xf]
    %v273 = vld [vmem:[%s1 + $0x3c4] sm:$0xf]
    %v274 = vld [vmem:[%s1 + $0x3c8] sm:$0xf]
    %v275 = vld [vmem:[%s1 + $0x3cc] sm:$0xf]
    %v276 = vld [vmem:[%s1 + $0x3d0] sm:$0xf]
    %v277 = vld [vmem:[%s1 + $0x3d4] sm:$0xf]
    %v278 = vld [vmem:[%s1 + $0x3d8] sm:$0xf]
    %v279 = vld [vmem:[%s1 + $0x3dc] sm:$0xf]
    %v280 = vld [vmem:[%s1 + $0x3e0] sm:$0xf]
    %v281 = vld [vmem:[%s1 + $0x3e4] sm:$0xf]
    %v282 = vld [vmem:[%s1 + $0x3e8] sm:$0xf]
    %v283 = vld [vmem:[%s1 + $0x3ec] sm:$0xf]
    %v284 = vld [vmem:[%s1 + $0x3f0] sm:$0xf]
    %v285 = vld [vmem:[%s1 + $0x3f4] sm:$0xf]
    %v286 = vld [vmem:[%s1 + $0x3f8] sm:$0xf]
    %v287 = vld [vmem:[%s1 + $0x3fc] sm:$0xf]
    %v288 = vld [vmem:[%s1 + $0x400] sm:$0xf]
    %v289 = vld [vmem:[%s1 + $0x404] sm:$0xf]
    %v290 = vld [vmem:[%s1 + $0x408] sm:$0xf]
    %v291 = vld [vmem:[%s1 + $0x40c] sm:$0xf]
    %v292 = vld [vmem:[%s1 + $0x410] sm:$0xf]
    %v293 = vld [vmem:[%s1 + $0x414] sm:$0xf]
    %v294 = vld [vmem:[%s1 + $0x418] sm:$0xf]
    %v295 = vld [vmem:[%s1 + $0x41c] sm:$0xf]
    %v296 = vld [vmem:[%s1 + $0x420] sm:$0xf]
    %v297 = vld [vmem:[%s1 + $0x424] sm:$0xf]
    %v298 = vld [vmem:[%s1 + $0x428] sm:$0xf]
    %v299 = vld [vmem:[%s1 + $0x42c] sm:$0xf]
    %v300 = vld [vmem:[%s1 + $0x430] sm:$0xf]
    %v301 = vld [vmem:[%s1 + $0x434] sm:$0xf]
    %v302 = vld [vmem:[%s1 + $0x438] sm:$0xf]
    %v303 = vld [vmem:[%s1 + $0x43c] sm:$0xf]
    %v304 = vld [vmem:[%s1 + $0x440] sm:$0xf]
    %v305 = vld [vmem:[%s1 + $0x444] sm:$0xf]
    %v306 = vld [vmem:[%s1 + $0x448] sm:$0xf]
    %v307 = vld [vmem:[%s1 + $0x44c] sm:$0xf]
    %v308 = vld [vmem:[%s1 + $0x450] sm:$0xf]
    %v309 = vld [vmem:[%s1 + $0x454] sm:$0xf]
    %v310 = vld [vmem:[%s1 + $0x458] sm:$0xf]
    %v311 = vld [vmem:[%s1 + $0x45c] sm:$0xf]
    %v312 = vld [vmem:[%s1 + $0x460] sm:$0xf]
    %v313 = vld [vmem:[%s1 + $0x464] sm:$0xf]
    %v314 = vld [vmem:[%s1 + $0x468] sm:$0xf]
    %v315 = vld [vmem:[%s1 + $0x46c] sm:$0xf]
    %v316 = vld [vmem:[%s1 + $0x470] sm:$0xf]
    %v317 = vld [vmem:[%s1 + $0x474] sm:$0xf]
    %v318 = vld [vmem:[%s1 + $0x478] sm:$0xf]
    %v319 = vld [vmem:[%s1 + $0x47c] sm:$0xf]
    %v320 = vld [vmem:[%s1 + $0x480] sm:$0xf]
    %v321 = vld [vmem:[%s1 + $0x484] sm:$0xf]
    %v322 = vld [vmem:[%s1 + $0x488] sm:$0xf]
    %v323 = vld [vmem:[%s1 + $0x48c] sm:$0xf]
    %v324 = vld [vmem:[%s1 + $0x490] sm:$0xf]
    %v325 = vld [vmem:[%s1 + $0x494] sm:$0xf]
    %v326 = vld [vmem:[%s1 + $0x498] sm:$0xf]
    %v327 = vld [vmem:[%s1 + $0x49c] sm:$0xf]
    %v328 = vld [vmem:[%s1 + $0x4a0] sm:$0xf]
    %v329 = vld [vmem:[%s1 + $0x4a4] sm:$0xf]
    %v330 = vld [vmem:[%s1 + $0x4a8] sm:$0xf]
    %v331 = vld [vmem:[%s1 + $0x4ac] sm:$0xf]
    %v332 = vld [vmem:[%s1 + $0x4b0] sm:$0xf]
    %v333 = vld [vmem:[%s1 + $0x4b4] sm:$0xf]
    %v334 = vld [vmem:[%s1 + $0x4b8] sm:$0xf]
    %v335 = vld [vmem:[%s1 + $0x4bc] sm:$0xf]
    %v336 = vld [vmem:[%s1 + $0x4c0] sm:$0xf]
    %v337 = vld [vmem:[%s1 + $0x4c4] sm:$0xf]
    %v338 = vld [vmem:[%s1 + $0x4c8] sm:$0xf]
    %v339 = vld [vmem:[%s1 + $0x4cc] sm:$0xf]
    %v340 = vld [vmem:[%s1 + $0x4d0] sm:$0xf]
    %v341 = vld [vmem:[%s1 + $0x4d4] sm:$0xf]
    %v342 = vld [vmem:[%s1 + $0x4d8] sm:$0xf]
    %v343 = vld [vmem:[%s1 + $0x4dc] sm:$0xf]
    %v344 = vld [vmem:[%s1 + $0x4e0] sm:$0xf]
    %v345 = vld [vmem:[%s1 + $0x4e4] sm:$0xf]
    %v346 = vld [vmem:[%s1 + $0x4e8] sm:$0xf]
    %v347 = vld [vmem:[%s1 + $0x4ec] sm:$0xf]
    %v348 = vld [vmem:[%s1 + $0x4f0] sm:$0xf]
    %v349 = vld [vmem:[%s1 + $0x4f4] sm:$0xf]
    %v350 = vld [vmem:[%s1 + $0x4f8] sm:$0xf]
    %v351 = vld [vmem:[%s1 + $0x4fc] sm:$0xf]
    %v352 = vld [vmem:[%s1 + $0x500] sm:$0xf]
    %v353 = vld [vmem:[%s1 + $0x504] sm:$0xf]
    %v354 = vld [vmem:[%s1 + $0x508] sm:$0xf]
    %v355 = vld [vmem:[%s1 + $0x50c] sm:$0xf]
    %v356 = vld [vmem:[%s1 + $0x510] sm:$0xf]
    %v357 = vld [vmem:[%s1 + $0x514] sm:$0xf]
    %v358 = vld [vmem:[%s1 + $0x518] sm:$0xf]
    %v359 = vld [vmem:[%s1 + $0x51c] sm:$0xf]
    %v360 = vld [vmem:[%s1 + $0x520] sm:$0xf]
    %v361 = vld [vmem:[%s1 + $0x524] sm:$0xf]
    %v362 = vld [vmem:[%s1 + $0x528] sm:$0xf]
    %v363 = vld [vmem:[%s1 + $0x52c] sm:$0xf]
    %v364 = vld [vmem:[%s1 + $0x530] sm:$0xf]
    %v365 = vld [vmem:[%s1 + $0x534] sm:$0xf]
    %v366 = vld [vmem:[%s1 + $0x538] sm:$0xf]
    %v367 = vld [vmem:[%s1 + $0x53c] sm:$0xf]
    %v368 = vld [vmem:[%s1 + $0x540] sm:$0xf]
    %v369 = vld [vmem:[%s1 + $0x544] sm:$0xf]
    %v370 = vld [vmem:[%s1 + $0x548] sm:$0xf]
    %v371 = vld [vmem:[%s1 + $0x54c] sm:$0xf]
    %v372 = vld [vmem:[%s1 + $0x550] sm:$0xf]
    %v373 = vld [vmem:[%s1 + $0x554] sm:$0xf]
    %v374 = vld [vmem:[%s1 + $0x558] sm:$0xf]
    %v375 = vld [vmem:[%s1 + $0x55c] sm:$0xf]
    %v376 = vld [vmem:[%s1 + $0x560] sm:$0xf]
    %v377 = vld [vmem:[%s1 + $0x564] sm:$0xf]
    %v378 = vld [vmem:[%s1 + $0x568] sm:$0xf]
    %v379 = vld [vmem:[%s1 + $0x56c] sm:$0xf]
    %v380 = vld [vmem:[%s1 + $0x570] sm:$0xf]
    %v381 = vld [vmem:[%s1 + $0x574] sm:$0xf]
    %v382 = vld [vmem:[%s1 + $0x578] sm:$0xf]
    %v383 = vld [vmem:[%s1 + $0x57c] sm:$0xf]
    %v384 = vld [vmem:[%s1 + $0x580] sm:$0xf]
    %v385 = vld [vmem:[%s1 + $0x584] sm:$0xf]
    %v386 = vld [vmem:[%s1 + $0x588] sm:$0xf]
    %v387 = vld [vmem:[%s1 + $0x58c] sm:$0xf]
    %v388 = vld [vmem:[%s1 + $0x590] sm:$0xf]
    %v389 = vld [vmem:[%s1 + $0x594] sm:$0xf]
    %v390 = vld [vmem:[%s1 + $0x598] sm:$0xf]
    %v391 = vld [vmem:[%s1 + $0x59c] sm:$0xf]
    %v392 = vld [vmem:[%s1 + $0x5a0] sm:$0xf]
    %v393 = vld [vmem:[%s1 + $0x5a4] sm:$0xf]
    %v394 = vld [vmem:[%s1 + $0x5a8] sm:$0xf]
    %v395 = vld [vmem:[%s1 + $0x5ac] sm:$0xf]
    %v396 = vld [vmem:[%s1 + $0x5b0] sm:$0xf]
    %v397 = vld [vmem:[%s1 + $0x5b4] sm:$0xf]
    %v398 = vld [vmem:[%s1 + $0x5b8] sm:$0xf]
    %v399 = vld [vmem:[%s1 + $0x5bc] sm:$0xf]
    %v400 = vld [vmem:[%s1 + $0x5c0] sm:$0xf]
    %v401 = vld [vmem:[%s1 + $0x5c4] sm:$0xf]
    %v402 = vld [vmem:[%s1 + $0x5c8] sm:$0xf]
    %v403 = vld [vmem:[%s1 + $0x5cc] sm:$0xf]
    %v404 = vld [vmem:[%s1 + $0x5d0] sm:$0xf]
    %v405 = vld [vmem:[%s1 + $0x5d4] sm:$0xf]
    %v406 = vld [vmem:[%s1 + $0x5d8] sm:$0xf]
    %v407 = vld [vmem:[%s1 + $0x5dc] sm:$0xf]
    %v408 = vld [vmem:[%s1 + $0x5e0] sm:$0xf]
    %v409 = vld [vmem:[%s1 + $0x5e4] sm:$0xf]
    %v410 = vld [vmem:[%s1 + $0x5e8] sm:$0xf]
    %v411 = vld [vmem:[%s1 + $0x5ec] sm:$0xf]
    %v412 = vld [vmem:[%s1 + $0x5f0] sm:$0xf]
    %v413 = vld [vmem:[%s1 + $0x5f4] sm:$0xf]
    %v414 = vld [vmem:[%s1 + $0x5f8] sm:$0xf]
    %v415 = vld [vmem:[%s1 + $0x5fc] sm:$0xf]
    %v416 = vld [vmem:[%s1 + $0x600] sm:$0xf]
    %v417 = vld [vmem:[%s1 + $0x604] sm:$0xf]
    %v418 = vld [vmem:[%s1 + $0x608] sm:$0xf]
    %v419 = vld [vmem:[%s1 + $0x60c] sm:$0xf]
    %v420 = vld [vmem:[%s1 + $0x610] sm:$0xf]
    %v421 = vld [vmem:[%s1 + $0x614] sm:$0xf]
    %v422 = vld [vmem:[%s1 + $0x618] sm:$0xf]
    %v423 = vld [vmem:[%s1 + $0x61c] sm:$0xf]
    %v424 = vld [vmem:[%s1 + $0x620] sm:$0xf]
    %v425 = vld [vmem:[%s1 + $0x624] sm:$0xf]
    %v426 = vld [vmem:[%s1 + $0x628] sm:$0xf]
    %v427 = vld [vmem:[%s1 + $0x62c] sm:$0xf]
    %v428 = vld [vmem:[%s1 + $0x630] sm:$0xf]
    %v429 = vld [vmem:[%s1 + $0x634] sm:$0xf]
    %v430 = vld [vmem:[%s1 + $0x638] sm:$0xf]
    %v431 = vld [vmem:[%s1 + $0x63c] sm:$0xf]
    %v432 = vld [vmem:[%s2] sm:$0x1]
    %v434 = vlaneseq
    %v435 = vshrl.u32 %v434, 7
    %v436 = vsub.s32 0, %v435
    %v437 = vrot.slane %v432, %v436
    %v443 = vcombine.high %v28, %v28
    %v445 = vunpack.c.l.s4 1966171168
    %v446 = vunpack.c.0.s8 %v445
    %v447 = vlaneseq
    %v448 = vshrl.u32 %v447, 7
    %v449 = vsub.s32 %v446, %v448
    %v450 = vrot.slane %v28, %v449
    %v452 = vunpack.c.l.s4 1966171168
    %v453 = vunpack.c.0.s8 %v452
    %v454 = vlaneseq
    %v455 = vshrl.u32 %v454, 7
    %v456 = vsub.s32 %v453, %v455
    %v457 = vrot.slane %v443, %v456
    %v458 = vcombine.high %v450, %v450
    %v459 = vcombine.high %v457, %v457
    %v461 = vunpack.c.l.s4 1966171168
    %v462 = vunpack.c.0.s8 %v461
    %v463 = vlaneseq
    %v464 = vshrl.u32 %v463, 7
    %v465 = vsub.s32 %v462, %v464
    %v466 = vrot.slane %v450, %v465
    %v468 = vunpack.c.l.s4 1966171168
    %v469 = vunpack.c.0.s8 %v468
    %v470 = vlaneseq
    %v471 = vshrl.u32 %v470, 7
    %v472 = vsub.s32 %v469, %v471
    %v473 = vrot.slane %v457, %v472
    %v475 = vunpack.c.l.s4 1966171168
    %v476 = vunpack.c.0.s8 %v475
    %v477 = vlaneseq
    %v478 = vshrl.u32 %v477, 7
    %v479 = vsub.s32 %v476, %v478
    %v480 = vrot.slane %v458, %v479
    %v482 = vunpack.c.l.s4 1966171168
    %v483 = vunpack.c.0.s8 %v482
    %v484 = vlaneseq
    %v485 = vshrl.u32 %v484, 7
    %v486 = vsub.s32 %v483, %v485
    %v487 = vrot.slane %v459, %v486
    %v488 = vcombine.high %v466, %v466
    %v489 = vcombine.high %v473, %v473
    %v490 = vcombine.high %v480, %v480
    %v491 = vcombine.high %v487, %v487
    %v492 = vcombine.high %v29, %v29
    %v494 = vunpack.c.l.s4 1966171168
    %v495 = vunpack.c.0.s8 %v494
    %v496 = vlaneseq
    %v497 = vshrl.u32 %v496, 7
    %v498 = vsub.s32 %v495, %v497
    %v499 = vrot.slane %v29, %v498
    %v501 = vunpack.c.l.s4 1966171168
    %v502 = vunpack.c.0.s8 %v501
    %v503 = vlaneseq
    %v504 = vshrl.u32 %v503, 7
    %v505 = vsub.s32 %v502, %v504
    %v506 = vrot.slane %v492, %v505
    %v507 = vcombine.high %v499, %v499
    %v508 = vcombine.high %v506, %v506
    %v510 = vunpack.c.l.s4 1966171168
    %v511 = vunpack.c.0.s8 %v510
    %v512 = vlaneseq
    %v513 = vshrl.u32 %v512, 7
    %v514 = vsub.s32 %v511, %v513
    %v515 = vrot.slane %v499, %v514
    %v517 = vunpack.c.l.s4 1966171168
    %v518 = vunpack.c.0.s8 %v517
    %v519 = vlaneseq
    %v520 = vshrl.u32 %v519, 7
    %v521 = vsub.s32 %v518, %v520
    %v522 = vrot.slane %v506, %v521
    %v524 = vunpack.c.l.s4 1966171168
    %v525 = vunpack.c.0.s8 %v524
    %v526 = vlaneseq
    %v527 = vshrl.u32 %v526, 7
    %v528 = vsub.s32 %v525, %v527
    %v529 = vrot.slane %v507, %v528
    %v531 = vunpack.c.l.s4 1966171168
    %v532 = vunpack.c.0.s8 %v531
    %v533 = vlaneseq
    %v534 = vshrl.u32 %v533, 7
    %v535 = vsub.s32 %v532, %v534
    %v536 = vrot.slane %v508, %v535
    %v537 = vcombine.high %v515, %v515
    %v538 = vcombine.high %v522, %v522
    %v539 = vcombine.high %v529, %v529
    %v540 = vcombine.high %v536, %v536
    %v541 = vcombine.high %v30, %v30
    %v543 = vunpack.c.l.s4 1966171168
    %v544 = vunpack.c.0.s8 %v543
    %v545 = vlaneseq
    %v546 = vshrl.u32 %v545, 7
    %v547 = vsub.s32 %v544, %v546
    %v548 = vrot.slane %v30, %v547
    %v550 = vunpack.c.l.s4 1966171168
    %v551 = vunpack.c.0.s8 %v550
    %v552 = vlaneseq
    %v553 = vshrl.u32 %v552, 7
    %v554 = vsub.s32 %v551, %v553
    %v555 = vrot.slane %v541, %v554
    %v556 = vcombine.high %v548, %v548
    %v557 = vcombine.high %v555, %v555
    %v559 = vunpack.c.l.s4 1966171168
    %v560 = vunpack.c.0.s8 %v559
    %v561 = vlaneseq
    %v562 = vshrl.u32 %v561, 7
    %v563 = vsub.s32 %v560, %v562
    %v564 = vrot.slane %v548, %v563
    %v566 = vunpack.c.l.s4 1966171168
    %v567 = vunpack.c.0.s8 %v566
    %v568 = vlaneseq
    %v569 = vshrl.u32 %v568, 7
    %v570 = vsub.s32 %v567, %v569
    %v571 = vrot.slane %v555, %v570
    %v573 = vunpack.c.l.s4 1966171168
    %v574 = vunpack.c.0.s8 %v573
    %v575 = vlaneseq
    %v576 = vshrl.u32 %v575, 7
    %v577 = vsub.s32 %v574, %v576
    %v578 = vrot.slane %v556, %v577
    %v580 = vunpack.c.l.s4 1966171168
    %v581 = vunpack.c.0.s8 %v580
    %v582 = vlaneseq
    %v583 = vshrl.u32 %v582, 7
    %v584 = vsub.s32 %v581, %v583
    %v585 = vrot.slane %v557, %v584
    %v586 = vcombine.high %v564, %v564
    %v587 = vcombine.high %v571, %v571
    %v588 = vcombine.high %v578, %v578
    %v589 = vcombine.high %v585, %v585
    %v591 = vunpack.c.l.s4 1966171168
    %v592 = vunpack.c.0.s8 %v591
    %v593 = vlaneseq
    %v594 = vshrl.u32 %v593, 7
    %v595 = vsub.s32 %v592, %v594
    %v596 = vrot.slane %v31, %v595
    %v598 = vunpack.c.l.s4 1966171168
    %v599 = vunpack.c.0.s8 %v598
    %v600 = vlaneseq
    %v601 = vshrl.u32 %v600, 7
    %v602 = vsub.s32 %v599, %v601
    %v603 = vrot.slane %v596, %v602
    %v1029 = vunpack.c.l.b16 %v32
    %v1030 = vunpack.c.l.b16 %v33
    %v1031 = vunpack.c.l.b16 %v34
    %v1032 = vunpack.c.l.b16 %v35
    %v1033 = vunpack.c.l.b16 %v36
    %v1034 = vunpack.c.l.b16 %v37
    %v1035 = vunpack.c.l.b16 %v38
    %v1036 = vunpack.c.l.b16 %v39
    %v1037 = vunpack.c.l.b16 %v40
    %v1038 = vunpack.c.l.b16 %v41
    %v1039 = vunpack.c.l.b16 %v42
    %v1040 = vunpack.c.l.b16 %v43
    %v1041 = vunpack.c.l.b16 %v44
    %v1042 = vunpack.c.l.b16 %v45
    %v1043 = vunpack.c.l.b16 %v46
    %v1044 = vunpack.c.l.b16 %v47
    %v1045 = vunpack.c.l.b16 %v48
    %v1046 = vunpack.c.l.b16 %v49
    %v1047 = vunpack.c.l.b16 %v50
    %v1048 = vunpack.c.l.b16 %v51
    %v1049 = vunpack.c.l.b16 %v52
    %v1050 = vunpack.c.l.b16 %v53
    %v1051 = vunpack.c.l.b16 %v54
    %v1052 = vunpack.c.l.b16 %v55
    %v1053 = vunpack.c.l.b16 %v56
    %v1054 = vunpack.c.l.b16 %v57
    %v1055 = vunpack.c.l.b16 %v58
    %v1056 = vunpack.c.l.b16 %v59
    %v1057 = vunpack.c.l.b16 %v60
    %v1058 = vunpack.c.l.b16 %v61
    %v1059 = vunpack.c.l.b16 %v62
    %v1060 = vunpack.c.l.b16 %v63
    %v1061 = vunpack.c.l.b16 %v64
    %v1062 = vunpack.c.l.b16 %v65
    %v1063 = vunpack.c.l.b16 %v66
    %v1064 = vunpack.c.l.b16 %v67
    %v1065 = vunpack.c.l.b16 %v68
    %v1066 = vunpack.c.l.b16 %v69
    %v1067 = vunpack.c.l.b16 %v70
    %v1068 = vunpack.c.l.b16 %v71
    %v1069 = vunpack.c.l.b16 %v72
    %v1070 = vunpack.c.l.b16 %v73
    %v1071 = vunpack.c.l.b16 %v74
    %v1072 = vunpack.c.l.b16 %v75
    %v1073 = vunpack.c.l.b16 %v76
    %v1074 = vunpack.c.l.b16 %v77
    %v1075 = vunpack.c.l.b16 %v78
    %v1076 = vunpack.c.l.b16 %v79
    %v1077 = vunpack.c.l.b16 %v80
    %v1078 = vunpack.c.l.b16 %v81
    %v1079 = vunpack.c.l.b16 %v82
    %v1080 = vunpack.c.l.b16 %v83
    %v1081 = vunpack.c.l.b16 %v84
    %v1082 = vunpack.c.l.b16 %v85
    %v1083 = vunpack.c.l.b16 %v86
    %v1084 = vunpack.c.l.b16 %v87
    %v1085 = vunpack.c.l.b16 %v88
    %v1086 = vunpack.c.l.b16 %v89
    %v1087 = vunpack.c.l.b16 %v90
    %v1088 = vunpack.c.l.b16 %v91
    %v1089 = vunpack.c.l.b16 %v92
    %v1090 = vunpack.c.l.b16 %v93
    %v1091 = vunpack.c.l.b16 %v94
    %v1092 = vunpack.c.l.b16 %v95
    %v1093 = vunpack.c.l.b16 %v96
    %v1094 = vunpack.c.l.b16 %v97
    %v1095 = vunpack.c.l.b16 %v98
    %v1096 = vunpack.c.l.b16 %v99
    %v1097 = vunpack.c.l.b16 %v100
    %v1098 = vunpack.c.l.b16 %v101
    %v1099 = vunpack.c.l.b16 %v102
    %v1100 = vunpack.c.l.b16 %v103
    %v1101 = vunpack.c.l.b16 %v104
    %v1102 = vunpack.c.l.b16 %v105
    %v1103 = vunpack.c.l.b16 %v106
    %v1104 = vunpack.c.l.b16 %v107
    %v1105 = vunpack.c.l.b16 %v108
    %v1106 = vunpack.c.l.b16 %v109
    %v1107 = vunpack.c.l.b16 %v110
    %v1108 = vunpack.c.l.b16 %v111
    %v1109 = vunpack.c.l.b16 %v112
    %v1110 = vunpack.c.l.b16 %v113
    %v1111 = vunpack.c.l.b16 %v114
    %v1112 = vunpack.c.l.b16 %v115
    %v1113 = vunpack.c.l.b16 %v116
    %v1114 = vunpack.c.l.b16 %v117
    %v1115 = vunpack.c.l.b16 %v118
    %v1116 = vunpack.c.l.b16 %v119
    %v1117 = vunpack.c.l.b16 %v120
    %v1118 = vunpack.c.l.b16 %v121
    %v1119 = vunpack.c.l.b16 %v122
    %v1120 = vunpack.c.l.b16 %v123
    %v1121 = vunpack.c.l.b16 %v124
    %v1122 = vunpack.c.l.b16 %v125
    %v1123 = vunpack.c.l.b16 %v126
    %v1124 = vunpack.c.l.b16 %v127
    %v1125 = vunpack.c.l.b16 %v128
    %v1126 = vunpack.c.l.b16 %v129
    %v1127 = vunpack.c.l.b16 %v130
    %v1128 = vunpack.c.l.b16 %v131
    %v1129 = vunpack.c.l.b16 %v132
    %v1130 = vunpack.c.l.b16 %v133
    %v1131 = vunpack.c.l.b16 %v134
    %v1132 = vunpack.c.l.b16 %v135
    %v1133 = vunpack.c.l.b16 %v136
    %v1134 = vunpack.c.l.b16 %v137
    %v1135 = vunpack.c.l.b16 %v138
    %v1136 = vunpack.c.l.b16 %v139
    %v1137 = vunpack.c.l.b16 %v140
    %v1138 = vunpack.c.l.b16 %v141
    %v1139 = vunpack.c.l.b16 %v142
    %v1140 = vunpack.c.l.b16 %v143
    %v1141 = vunpack.c.l.b16 %v144
    %v1142 = vunpack.c.l.b16 %v145
    %v1143 = vunpack.c.l.b16 %v146
    %v1144 = vunpack.c.l.b16 %v147
    %v1145 = vunpack.c.l.b16 %v148
    %v1146 = vunpack.c.l.b16 %v149
    %v1147 = vunpack.c.l.b16 %v150
    %v1148 = vunpack.c.l.b16 %v151
    %v1149 = vunpack.c.l.b16 %v152
    %v1150 = vunpack.c.l.b16 %v153
    %v1151 = vunpack.c.l.b16 %v154
    %v1152 = vunpack.c.l.b16 %v155
    %v1153 = vunpack.c.l.b16 %v156
    %v1154 = vunpack.c.l.b16 %v157
    %v1155 = vunpack.c.l.b16 %v158
    %v1156 = vunpack.c.l.b16 %v159
    %v1157 = vunpack.c.l.b16 %v160
    %v1158 = vunpack.c.l.b16 %v161
    %v1159 = vunpack.c.l.b16 %v162
    %v1160 = vunpack.c.l.b16 %v163
    %v1161 = vunpack.c.l.b16 %v164
    %v1162 = vunpack.c.l.b16 %v165
    %v1163 = vunpack.c.l.b16 %v166
    %v1164 = vunpack.c.l.b16 %v167
    %v1165 = vunpack.c.l.b16 %v168
    %v1166 = vunpack.c.l.b16 %v169
    %v1167 = vunpack.c.l.b16 %v170
    %v1168 = vunpack.c.l.b16 %v171
    %v1169 = vunpack.c.l.b16 %v172
    %v1170 = vunpack.c.l.b16 %v173
    %v1171 = vunpack.c.l.b16 %v174
    %v1172 = vunpack.c.l.b16 %v175
    %v1173 = vunpack.c.l.b16 %v176
    %v1174 = vunpack.c.l.b16 %v177
    %v1175 = vunpack.c.l.b16 %v178
    %v1176 = vunpack.c.l.b16 %v179
    %v1177 = vunpack.c.l.b16 %v180
    %v1178 = vunpack.c.l.b16 %v181
    %v1179 = vunpack.c.l.b16 %v182
    %v1180 = vunpack.c.l.b16 %v183
    %v1181 = vunpack.c.l.b16 %v184
    %v1182 = vunpack.c.l.b16 %v185
    %v1183 = vunpack.c.l.b16 %v186
    %v1184 = vunpack.c.l.b16 %v187
    %v1185 = vunpack.c.l.b16 %v188
    %v1186 = vunpack.c.l.b16 %v189
    %v1187 = vunpack.c.l.b16 %v190
    %v1188 = vunpack.c.l.b16 %v191
    %v1189 = vunpack.c.l.b16 %v192
    %v1190 = vunpack.c.l.b16 %v193
    %v1191 = vunpack.c.l.b16 %v194
    %v1192 = vunpack.c.l.b16 %v195
    %v1193 = vunpack.c.l.b16 %v196
    %v1194 = vunpack.c.l.b16 %v197
    %v1195 = vunpack.c.l.b16 %v198
    %v1196 = vunpack.c.l.b16 %v199
    %v1197 = vunpack.c.l.b16 %v200
    %v1198 = vunpack.c.l.b16 %v201
    %v1199 = vunpack.c.l.b16 %v202
    %v1200 = vunpack.c.l.b16 %v203
    %v1201 = vunpack.c.l.b16 %v204
    %v1202 = vunpack.c.l.b16 %v205
    %v1203 = vunpack.c.l.b16 %v206
    %v1204 = vunpack.c.l.b16 %v207
    %v1205 = vunpack.c.l.b16 %v208
    %v1206 = vunpack.c.l.b16 %v209
    %v1207 = vunpack.c.l.b16 %v210
    %v1208 = vunpack.c.l.b16 %v211
    %v1209 = vunpack.c.l.b16 %v212
    %v1210 = vunpack.c.l.b16 %v213
    %v1211 = vunpack.c.l.b16 %v214
    %v1212 = vunpack.c.l.b16 %v215
    %v1213 = vunpack.c.l.b16 %v216
    %v1214 = vunpack.c.l.b16 %v217
    %v1215 = vunpack.c.l.b16 %v218
    %v1216 = vunpack.c.l.b16 %v219
    %v1217 = vunpack.c.l.b16 %v220
    %v1218 = vunpack.c.l.b16 %v221
    %v1219 = vunpack.c.l.b16 %v222
    %v1220 = vunpack.c.l.b16 %v223
    %v1221 = vunpack.c.l.b16 %v224
    %v1222 = vunpack.c.l.b16 %v225
    %v1223 = vunpack.c.l.b16 %v226
    %v1224 = vunpack.c.l.b16 %v227
    %v1225 = vunpack.c.l.b16 %v228
    %v1226 = vunpack.c.l.b16 %v229
    %v1227 = vunpack.c.l.b16 %v230
    %v1228 = vunpack.c.l.b16 %v231
    %v1229 = vunpack.c.l.b16 %v232
    %v1230 = vunpack.c.l.b16 %v233
    %v1231 = vunpack.c.l.b16 %v234
    %v1232 = vunpack.c.l.b16 %v235
    %v1233 = vunpack.c.l.b16 %v236
    %v1234 = vunpack.c.l.b16 %v237
    %v1235 = vunpack.c.l.b16 %v238
    %v1236 = vunpack.c.l.b16 %v239
    %v1237 = vunpack.c.l.b16 %v240
    %v1238 = vunpack.c.l.b16 %v241
    %v1239 = vunpack.c.l.b16 %v242
    %v1240 = vunpack.c.l.b16 %v243
    %v1241 = vunpack.c.l.b16 %v244
    %v1242 = vunpack.c.l.b16 %v245
    %v1243 = vunpack.c.l.b16 %v246
    %v1244 = vunpack.c.l.b16 %v247
    %v1245 = vunpack.c.l.b16 %v248
    %v1246 = vunpack.c.l.b16 %v249
    %v1247 = vunpack.c.l.b16 %v250
    %v1248 = vunpack.c.l.b16 %v251
    %v1249 = vunpack.c.l.b16 %v252
    %v1250 = vunpack.c.l.b16 %v253
    %v1251 = vunpack.c.l.b16 %v254
    %v1252 = vunpack.c.l.b16 %v255
    %v1253 = vunpack.c.l.b16 %v256
    %v1254 = vunpack.c.l.b16 %v257
    %v1255 = vunpack.c.l.b16 %v258
    %v1256 = vunpack.c.l.b16 %v259
    %v1257 = vunpack.c.l.b16 %v260
    %v1258 = vunpack.c.l.b16 %v261
    %v1259 = vunpack.c.l.b16 %v262
    %v1260 = vunpack.c.l.b16 %v263
    %v1261 = vunpack.c.l.b16 %v264
    %v1262 = vunpack.c.l.b16 %v265
    %v1263 = vunpack.c.l.b16 %v266
    %v1264 = vunpack.c.l.b16 %v267
    %v1265 = vunpack.c.l.b16 %v268
    %v1266 = vunpack.c.l.b16 %v269
    %v1267 = vunpack.c.l.b16 %v270
    %v1268 = vunpack.c.l.b16 %v271
    %v1269 = vunpack.c.l.b16 %v272
    %v1270 = vunpack.c.l.b16 %v273
    %v1271 = vunpack.c.l.b16 %v274
    %v1272 = vunpack.c.l.b16 %v275
    %v1273 = vunpack.c.l.b16 %v276
    %v1274 = vunpack.c.l.b16 %v277
    %v1275 = vunpack.c.l.b16 %v278
    %v1276 = vunpack.c.l.b16 %v279
    %v1277 = vunpack.c.l.b16 %v280
    %v1278 = vunpack.c.l.b16 %v281
    %v1279 = vunpack.c.l.b16 %v282
    %v1280 = vunpack.c.l.b16 %v283
    %v1281 = vunpack.c.l.b16 %v284
    %v1282 = vunpack.c.l.b16 %v285
    %v1283 = vunpack.c.l.b16 %v286
    %v1284 = vunpack.c.l.b16 %v287
    %v1285 = vunpack.c.l.b16 %v288
    %v1286 = vunpack.c.l.b16 %v289
    %v1287 = vunpack.c.l.b16 %v290
    %v1288 = vunpack.c.l.b16 %v291
    %v1289 = vunpack.c.l.b16 %v292
    %v1290 = vunpack.c.l.b16 %v293
    %v1291 = vunpack.c.l.b16 %v294
    %v1292 = vunpack.c.l.b16 %v295
    %v1293 = vunpack.c.l.b16 %v296
    %v1294 = vunpack.c.l.b16 %v297
    %v1295 = vunpack.c.l.b16 %v298
    %v1296 = vunpack.c.l.b16 %v299
    %v1297 = vunpack.c.l.b16 %v300
    %v1298 = vunpack.c.l.b16 %v301
    %v1299 = vunpack.c.l.b16 %v302
    %v1300 = vunpack.c.l.b16 %v303
    %v1301 = vunpack.c.l.b16 %v304
    %v1302 = vunpack.c.l.b16 %v305
    %v1303 = vunpack.c.l.b16 %v306
    %v1304 = vunpack.c.l.b16 %v307
    %v1305 = vunpack.c.l.b16 %v308
    %v1306 = vunpack.c.l.b16 %v309
    %v1307 = vunpack.c.l.b16 %v310
    %v1308 = vunpack.c.l.b16 %v311
    %v1309 = vunpack.c.l.b16 %v312
    %v1310 = vunpack.c.l.b16 %v313
    %v1311 = vunpack.c.l.b16 %v314
    %v1312 = vunpack.c.l.b16 %v315
    %v1313 = vunpack.c.l.b16 %v316
    %v1314 = vunpack.c.l.b16 %v317
    %v1315 = vunpack.c.l.b16 %v318
    %v1316 = vunpack.c.l.b16 %v319
    %v1317 = vunpack.c.l.b16 %v320
    %v1318 = vunpack.c.l.b16 %v321
    %v1319 = vunpack.c.l.b16 %v322
    %v1320 = vunpack.c.l.b16 %v323
    %v1321 = vunpack.c.l.b16 %v324
    %v1322 = vunpack.c.l.b16 %v325
    %v1323 = vunpack.c.l.b16 %v326
    %v1324 = vunpack.c.l.b16 %v327
    %v1325 = vunpack.c.l.b16 %v328
    %v1326 = vunpack.c.l.b16 %v329
    %v1327 = vunpack.c.l.b16 %v330
    %v1328 = vunpack.c.l.b16 %v331
    %v1329 = vunpack.c.l.b16 %v332
    %v1330 = vunpack.c.l.b16 %v333
    %v1331 = vunpack.c.l.b16 %v334
    %v1332 = vunpack.c.l.b16 %v335
    %v1333 = vunpack.c.l.b16 %v336
    %v1334 = vunpack.c.l.b16 %v337
    %v1335 = vunpack.c.l.b16 %v338
    %v1336 = vunpack.c.l.b16 %v339
    %v1337 = vunpack.c.l.b16 %v340
    %v1338 = vunpack.c.l.b16 %v341
    %v1339 = vunpack.c.l.b16 %v342
    %v1340 = vunpack.c.l.b16 %v343
    %v1341 = vunpack.c.l.b16 %v344
    %v1342 = vunpack.c.l.b16 %v345
    %v1343 = vunpack.c.l.b16 %v346
    %v1344 = vunpack.c.l.b16 %v347
    %v1345 = vunpack.c.l.b16 %v348
    %v1346 = vunpack.c.l.b16 %v349
    %v1347 = vunpack.c.l.b16 %v350
    %v1348 = vunpack.c.l.b16 %v351
    %v1349 = vunpack.c.l.b16 %v352
    %v1350 = vunpack.c.l.b16 %v353
    %v1351 = vunpack.c.l.b16 %v354
    %v1352 = vunpack.c.l.b16 %v355
    %v1353 = vunpack.c.l.b16 %v356
    %v1354 = vunpack.c.l.b16 %v357
    %v1355 = vunpack.c.l.b16 %v358
    %v1356 = vunpack.c.l.b16 %v359
    %v1357 = vunpack.c.l.b16 %v360
    %v1358 = vunpack.c.l.b16 %v361
    %v1359 = vunpack.c.l.b16 %v362
    %v1360 = vunpack.c.l.b16 %v363
    %v1361 = vunpack.c.l.b16 %v364
    %v1362 = vunpack.c.l.b16 %v365
    %v1363 = vunpack.c.l.b16 %v366
    %v1364 = vunpack.c.l.b16 %v367
    %v1365 = vunpack.c.l.b16 %v368
    %v1366 = vunpack.c.l.b16 %v369
    %v1367 = vunpack.c.l.b16 %v370
    %v1368 = vunpack.c.l.b16 %v371
    %v1369 = vunpack.c.l.b16 %v372
    %v1370 = vunpack.c.l.b16 %v373
    %v1371 = vunpack.c.l.b16 %v374
    %v1372 = vunpack.c.l.b16 %v375
    %v1373 = vunpack.c.l.b16 %v376
    %v1374 = vunpack.c.l.b16 %v377
    %v1375 = vunpack.c.l.b16 %v378
    %v1376 = vunpack.c.l.b16 %v379
    %v1377 = vunpack.c.l.b16 %v380
    %v1378 = vunpack.c.l.b16 %v381
    %v1379 = vunpack.c.l.b16 %v382
    %v1380 = vunpack.c.l.b16 %v383
    %v1381 = vunpack.c.l.b16 %v384
    %v1382 = vunpack.c.l.b16 %v385
    %v1383 = vunpack.c.l.b16 %v386
    %v1384 = vunpack.c.l.b16 %v387
    %v1385 = vunpack.c.l.b16 %v388
    %v1386 = vunpack.c.l.b16 %v389
    %v1387 = vunpack.c.l.b16 %v390
    %v1388 = vunpack.c.l.b16 %v391
    %v1389 = vunpack.c.l.b16 %v392
    %v1390 = vunpack.c.l.b16 %v393
    %v1391 = vunpack.c.l.b16 %v394
    %v1392 = vunpack.c.l.b16 %v395
    %v1393 = vunpack.c.l.b16 %v396
    %v1394 = vunpack.c.l.b16 %v397
    %v1395 = vunpack.c.l.b16 %v398
    %v1396 = vunpack.c.l.b16 %v399
    %v1397 = vunpack.c.l.b16 %v400
    %v1398 = vunpack.c.l.b16 %v401
    %v1399 = vunpack.c.l.b16 %v402
    %v1400 = vunpack.c.l.b16 %v403
    %v1401 = vunpack.c.l.b16 %v404
    %v1402 = vunpack.c.l.b16 %v405
    %v1403 = vunpack.c.l.b16 %v406
    %v1404 = vunpack.c.l.b16 %v407
    %v1405 = vunpack.c.l.b16 %v408
    %v1406 = vunpack.c.l.b16 %v409
    %v1407 = vunpack.c.l.b16 %v410
    %v1408 = vunpack.c.l.b16 %v411
    %v1409 = vunpack.c.l.b16 %v412
    %v1410 = vunpack.c.l.b16 %v413
    %v1411 = vunpack.c.l.b16 %v414
    %v1412 = vunpack.c.l.b16 %v415
    %v1413 = vunpack.c.l.b16 %v416
    %v1414 = vunpack.c.l.b16 %v417
    %v1415 = vunpack.c.l.b16 %v418
    %v1416 = vunpack.c.l.b16 %v419
    %v1417 = vunpack.c.l.b16 %v420
    %v1418 = vunpack.c.l.b16 %v421
    %v1419 = vunpack.c.l.b16 %v422
    %v1420 = vunpack.c.l.b16 %v423
    %v1421 = vunpack.c.l.b16 %v424
    %v1422 = vunpack.c.l.b16 %v425
    %v1423 = vunpack.c.l.b16 %v426
    %v1424 = vunpack.c.l.b16 %v427
    %v1425 = vunpack.c.l.b16 %v428
    %v1426 = vunpack.c.l.b16 %v429
    %v1427 = vunpack.c.l.b16 %v430
    %v1428 = vunpack.c.l.b16 %v431
    %v1429 = vpack.c.b16 %v1030, %v1029
    %v1430 = vpack.c.b16 %v1032, %v1031
    %v1431 = vpack.c.b16 %v1034, %v1033
    %v1432 = vpack.c.b16 %v1036, %v1035
    %v1433 = vpack.c.b16 %v1038, %v1037
    %v1434 = vpack.c.b16 %v1040, %v1039
    %v1435 = vpack.c.b16 %v1042, %v1041
    %v1436 = vpack.c.b16 %v1044, %v1043
    %v1437 = vpack.c.b16 %v1046, %v1045
    %v1438 = vpack.c.b16 %v1048, %v1047
    %v1439 = vpack.c.b16 %v1050, %v1049
    %v1440 = vpack.c.b16 %v1052, %v1051
    %v1441 = vpack.c.b16 %v1054, %v1053
    %v1442 = vpack.c.b16 %v1056, %v1055
    %v1443 = vpack.c.b16 %v1058, %v1057
    %v1444 = vpack.c.b16 %v1060, %v1059
    %v1445 = vpack.c.b16 %v1062, %v1061
    %v1446 = vpack.c.b16 %v1064, %v1063
    %v1447 = vpack.c.b16 %v1066, %v1065
    %v1448 = vpack.c.b16 %v1068, %v1067
    %v1449 = vpack.c.b16 %v1070, %v1069
    %v1450 = vpack.c.b16 %v1072, %v1071
    %v1451 = vpack.c.b16 %v1074, %v1073
    %v1452 = vpack.c.b16 %v1076, %v1075
    %v1453 = vpack.c.b16 %v1078, %v1077
    %v1454 = vpack.c.b16 %v1080, %v1079
    %v1455 = vpack.c.b16 %v1082, %v1081
    %v1456 = vpack.c.b16 %v1084, %v1083
    %v1457 = vpack.c.b16 %v1086, %v1085
    %v1458 = vpack.c.b16 %v1088, %v1087
    %v1459 = vpack.c.b16 %v1090, %v1089
    %v1460 = vpack.c.b16 %v1092, %v1091
    %v1461 = vpack.c.b16 %v1094, %v1093
    %v1462 = vpack.c.b16 %v1096, %v1095
    %v1463 = vpack.c.b16 %v1098, %v1097
    %v1464 = vpack.c.b16 %v1100, %v1099
    %v1465 = vpack.c.b16 %v1102, %v1101
    %v1466 = vpack.c.b16 %v1104, %v1103
    %v1467 = vpack.c.b16 %v1106, %v1105
    %v1468 = vpack.c.b16 %v1108, %v1107
    %v1469 = vpack.c.b16 %v1110, %v1109
    %v1470 = vpack.c.b16 %v1112, %v1111
    %v1471 = vpack.c.b16 %v1114, %v1113
    %v1472 = vpack.c.b16 %v1116, %v1115
    %v1473 = vpack.c.b16 %v1118, %v1117
    %v1474 = vpack.c.b16 %v1120, %v1119
    %v1475 = vpack.c.b16 %v1122, %v1121
    %v1476 = vpack.c.b16 %v1124, %v1123
    %v1477 = vpack.c.b16 %v1126, %v1125
    %v1478 = vpack.c.b16 %v1128, %v1127
    %v1479 = vpack.c.b16 %v1130, %v1129
    %v1480 = vpack.c.b16 %v1132, %v1131
    %v1481 = vpack.c.b16 %v1134, %v1133
    %v1482 = vpack.c.b16 %v1136, %v1135
    %v1483 = vpack.c.b16 %v1138, %v1137
    %v1484 = vpack.c.b16 %v1140, %v1139
    %v1485 = vpack.c.b16 %v1142, %v1141
    %v1486 = vpack.c.b16 %v1144, %v1143
    %v1487 = vpack.c.b16 %v1146, %v1145
    %v1488 = vpack.c.b16 %v1148, %v1147
    %v1489 = vpack.c.b16 %v1150, %v1149
    %v1490 = vpack.c.b16 %v1152, %v1151
    %v1491 = vpack.c.b16 %v1154, %v1153
    %v1492 = vpack.c.b16 %v1156, %v1155
    %v1493 = vpack.c.b16 %v1158, %v1157
    %v1494 = vpack.c.b16 %v1160, %v1159
    %v1495 = vpack.c.b16 %v1162, %v1161
    %v1496 = vpack.c.b16 %v1164, %v1163
    %v1497 = vpack.c.b16 %v1166, %v1165
    %v1498 = vpack.c.b16 %v1168, %v1167
    %v1499 = vpack.c.b16 %v1170, %v1169
    %v1500 = vpack.c.b16 %v1172, %v1171
    %v1501 = vpack.c.b16 %v1174, %v1173
    %v1502 = vpack.c.b16 %v1176, %v1175
    %v1503 = vpack.c.b16 %v1178, %v1177
    %v1504 = vpack.c.b16 %v1180, %v1179
    %v1505 = vpack.c.b16 %v1182, %v1181
    %v1506 = vpack.c.b16 %v1184, %v1183
    %v1507 = vpack.c.b16 %v1186, %v1185
    %v1508 = vpack.c.b16 %v1188, %v1187
    %v1509 = vpack.c.b16 %v1190, %v1189
    %v1510 = vpack.c.b16 %v1192, %v1191
    %v1511 = vpack.c.b16 %v1194, %v1193
    %v1512 = vpack.c.b16 %v1196, %v1195
    %v1513 = vpack.c.b16 %v1198, %v1197
    %v1514 = vpack.c.b16 %v1200, %v1199
    %v1515 = vpack.c.b16 %v1202, %v1201
    %v1516 = vpack.c.b16 %v1204, %v1203
    %v1517 = vpack.c.b16 %v1206, %v1205
    %v1518 = vpack.c.b16 %v1208, %v1207
    %v1519 = vpack.c.b16 %v1210, %v1209
    %v1520 = vpack.c.b16 %v1212, %v1211
    %v1521 = vpack.c.b16 %v1214, %v1213
    %v1522 = vpack.c.b16 %v1216, %v1215
    %v1523 = vpack.c.b16 %v1218, %v1217
    %v1524 = vpack.c.b16 %v1220, %v1219
    %v1525 = vpack.c.b16 %v1222, %v1221
    %v1526 = vpack.c.b16 %v1224, %v1223
    %v1527 = vpack.c.b16 %v1226, %v1225
    %v1528 = vpack.c.b16 %v1228, %v1227
    %v1529 = vpack.c.b16 %v1230, %v1229
    %v1530 = vpack.c.b16 %v1232, %v1231
    %v1531 = vpack.c.b16 %v1234, %v1233
    %v1532 = vpack.c.b16 %v1236, %v1235
    %v1533 = vpack.c.b16 %v1238, %v1237
    %v1534 = vpack.c.b16 %v1240, %v1239
    %v1535 = vpack.c.b16 %v1242, %v1241
    %v1536 = vpack.c.b16 %v1244, %v1243
    %v1537 = vpack.c.b16 %v1246, %v1245
    %v1538 = vpack.c.b16 %v1248, %v1247
    %v1539 = vpack.c.b16 %v1250, %v1249
    %v1540 = vpack.c.b16 %v1252, %v1251
    %v1541 = vpack.c.b16 %v1254, %v1253
    %v1542 = vpack.c.b16 %v1256, %v1255
    %v1543 = vpack.c.b16 %v1258, %v1257
    %v1544 = vpack.c.b16 %v1260, %v1259
    %v1545 = vpack.c.b16 %v1262, %v1261
    %v1546 = vpack.c.b16 %v1264, %v1263
    %v1547 = vpack.c.b16 %v1266, %v1265
    %v1548 = vpack.c.b16 %v1268, %v1267
    %v1549 = vpack.c.b16 %v1270, %v1269
    %v1550 = vpack.c.b16 %v1272, %v1271
    %v1551 = vpack.c.b16 %v1274, %v1273
    %v1552 = vpack.c.b16 %v1276, %v1275
    %v1553 = vpack.c.b16 %v1278, %v1277
    %v1554 = vpack.c.b16 %v1280, %v1279
    %v1555 = vpack.c.b16 %v1282, %v1281
    %v1556 = vpack.c.b16 %v1284, %v1283
    %v1557 = vpack.c.b16 %v1286, %v1285
    %v1558 = vpack.c.b16 %v1288, %v1287
    %v1559 = vpack.c.b16 %v1290, %v1289
    %v1560 = vpack.c.b16 %v1292, %v1291
    %v1561 = vpack.c.b16 %v1294, %v1293
    %v1562 = vpack.c.b16 %v1296, %v1295
    %v1563 = vpack.c.b16 %v1298, %v1297
    %v1564 = vpack.c.b16 %v1300, %v1299
    %v1565 = vpack.c.b16 %v1302, %v1301
    %v1566 = vpack.c.b16 %v1304, %v1303
    %v1567 = vpack.c.b16 %v1306, %v1305
    %v1568 = vpack.c.b16 %v1308, %v1307
    %v1569 = vpack.c.b16 %v1310, %v1309
    %v1570 = vpack.c.b16 %v1312, %v1311
    %v1571 = vpack.c.b16 %v1314, %v1313
    %v1572 = vpack.c.b16 %v1316, %v1315
    %v1573 = vpack.c.b16 %v1318, %v1317
    %v1574 = vpack.c.b16 %v1320, %v1319
    %v1575 = vpack.c.b16 %v1322, %v1321
    %v1576 = vpack.c.b16 %v1324, %v1323
    %v1577 = vpack.c.b16 %v1326, %v1325
    %v1578 = vpack.c.b16 %v1328, %v1327
    %v1579 = vpack.c.b16 %v1330, %v1329
    %v1580 = vpack.c.b16 %v1332, %v1331
    %v1581 = vpack.c.b16 %v1334, %v1333
    %v1582 = vpack.c.b16 %v1336, %v1335
    %v1583 = vpack.c.b16 %v1338, %v1337
    %v1584 = vpack.c.b16 %v1340, %v1339
    %v1585 = vpack.c.b16 %v1342, %v1341
    %v1586 = vpack.c.b16 %v1344, %v1343
    %v1587 = vpack.c.b16 %v1346, %v1345
    %v1588 = vpack.c.b16 %v1348, %v1347
    %v1589 = vpack.c.b16 %v1350, %v1349
    %v1590 = vpack.c.b16 %v1352, %v1351
    %v1591 = vpack.c.b16 %v1354, %v1353
    %v1592 = vpack.c.b16 %v1356, %v1355
    %v1593 = vpack.c.b16 %v1358, %v1357
    %v1594 = vpack.c.b16 %v1360, %v1359
    %v1595 = vpack.c.b16 %v1362, %v1361
    %v1596 = vpack.c.b16 %v1364, %v1363
    %v1597 = vpack.c.b16 %v1366, %v1365
    %v1598 = vpack.c.b16 %v1368, %v1367
    %v1599 = vpack.c.b16 %v1370, %v1369
    %v1600 = vpack.c.b16 %v1372, %v1371
    %v1601 = vpack.c.b16 %v1374, %v1373
    %v1602 = vpack.c.b16 %v1376, %v1375
    %v1603 = vpack.c.b16 %v1378, %v1377
    %v1604 = vpack.c.b16 %v1380, %v1379
    %v1605 = vpack.c.b16 %v1382, %v1381
    %v1606 = vpack.c.b16 %v1384, %v1383
    %v1607 = vpack.c.b16 %v1386, %v1385
    %v1608 = vpack.c.b16 %v1388, %v1387
    %v1609 = vpack.c.b16 %v1390, %v1389
    %v1610 = vpack.c.b16 %v1392, %v1391
    %v1611 = vpack.c.b16 %v1394, %v1393
    %v1612 = vpack.c.b16 %v1396, %v1395
    %v1613 = vpack.c.b16 %v1398, %v1397
    %v1614 = vpack.c.b16 %v1400, %v1399
    %v1615 = vpack.c.b16 %v1402, %v1401
    %v1616 = vpack.c.b16 %v1404, %v1403
    %v1617 = vpack.c.b16 %v1406, %v1405
    %v1618 = vpack.c.b16 %v1408, %v1407
    %v1619 = vpack.c.b16 %v1410, %v1409
    %v1620 = vpack.c.b16 %v1412, %v1411
    %v1621 = vpack.c.b16 %v1414, %v1413
    %v1622 = vpack.c.b16 %v1416, %v1415
    %v1623 = vpack.c.b16 %v1418, %v1417
    %v1624 = vpack.c.b16 %v1420, %v1419
    %v1625 = vpack.c.b16 %v1422, %v1421
    %v1626 = vpack.c.b16 %v1424, %v1423
    %v1627 = vpack.c.b16 %v1426, %v1425
    %v1628 = vpack.c.b16 %v1428, %v1427
    %1829 = vmatprep.subr.bf16.mxu0 0
    %1830 = vmatpush1.bf16.msra.mxu0 %v1429
    %1831 = vmatprep.subr.bf16.mxu0 0
    %1832 = vmatpush1.bf16.msra.mxu0 %v1430
    %1833 = vmatprep.subr.bf16.mxu0 0
    %1834 = vmatpush1.bf16.msra.mxu0 %v1431
    %1835 = vmatprep.subr.bf16.mxu0 0
    %1836 = vmatpush1.bf16.msra.mxu0 %v1432
    %1837 = vmatprep.subr.bf16.mxu0 0
    %1838 = vmatpush1.bf16.msra.mxu0 %v1433
    %1839 = vmatprep.subr.bf16.mxu0 0
    %1840 = vmatpush1.bf16.msra.mxu0 %v1434
    %1841 = vmatprep.subr.bf16.mxu0 0
    %1842 = vmatpush1.bf16.msra.mxu0 %v1435
    %1843 = vmatprep.subr.bf16.mxu0 0
    %1844 = vmatpush1.bf16.msra.mxu0 %v1436
    %1845 = vmatprep.subr.bf16.mxu0 0
    %1846 = vmatpush1.bf16.msra.mxu0 %v1437
    %1847 = vmatprep.subr.bf16.mxu0 0
    %1848 = vmatpush1.bf16.msra.mxu0 %v1438
    %1849 = vmatprep.subr.bf16.mxu0 0
    %1850 = vmatpush1.bf16.msra.mxu0 %v1439
    %1851 = vmatprep.subr.bf16.mxu0 0
    %1852 = vmatpush1.bf16.msra.mxu0 %v1440
    %1853 = vmatprep.subr.bf16.mxu0 0
    %1854 = vmatpush1.bf16.msra.mxu0 %v1441
    %1855 = vmatprep.subr.bf16.mxu0 0
    %1856 = vmatpush1.bf16.msra.mxu0 %v1442
    %1857 = vmatprep.subr.bf16.mxu0 0
    %1858 = vmatpush1.bf16.msra.mxu0 %v1443
    %1859 = vmatprep.subr.bf16.mxu0 0
    %1860 = vmatpush1.bf16.msra.mxu0 %v1444
    %1861 = vmatprep.mubr.bf16.mxu0 %v480
    %1862 = vmatmul.mubr.bf16.gmra.mrb[0].mxu0 %v466
    %v1863 = vpop.f32.mrb[0].mxu0
    %v1864 = vadd.f32 %v437, %v1863
    %v1865 = vpop.f32.mrb[0].mxu0
    %v1866 = vpop.f32.mrb[0].mxu0
    %v1867 = vpop.f32.mrb[0].mxu0
    %1868 = vdwg.mxu0
    %1869 = vmatprep.subr.bf16.mxu0 0
    %1870 = vmatpush1.bf16.msra.mxu0 %v1445
    %1871 = vmatprep.subr.bf16.mxu0 0
    %1872 = vmatpush1.bf16.msra.mxu0 %v1446
    %1873 = vmatprep.subr.bf16.mxu0 0
    %1874 = vmatpush1.bf16.msra.mxu0 %v1447
    %1875 = vmatprep.subr.bf16.mxu0 0
    %1876 = vmatpush1.bf16.msra.mxu0 %v1448
    %1877 = vmatprep.subr.bf16.mxu0 0
    %1878 = vmatpush1.bf16.msra.mxu0 %v1449
    %1879 = vmatprep.subr.bf16.mxu0 0
    %1880 = vmatpush1.bf16.msra.mxu0 %v1450
    %1881 = vmatprep.subr.bf16.mxu0 0
    %1882 = vmatpush1.bf16.msra.mxu0 %v1451
    %1883 = vmatprep.subr.bf16.mxu0 0
    %1884 = vmatpush1.bf16.msra.mxu0 %v1452
    %1885 = vmatprep.subr.bf16.mxu0 0
    %1886 = vmatpush1.bf16.msra.mxu0 %v1453
    %1887 = vmatprep.subr.bf16.mxu0 0
    %1888 = vmatpush1.bf16.msra.mxu0 %v1454
    %1889 = vmatprep.subr.bf16.mxu0 0
    %1890 = vmatpush1.bf16.msra.mxu0 %v1455
    %1891 = vmatprep.subr.bf16.mxu0 0
    %1892 = vmatpush1.bf16.msra.mxu0 %v1456
    %1893 = vmatprep.subr.bf16.mxu0 0
    %1894 = vmatpush1.bf16.msra.mxu0 %v1457
    %1895 = vmatprep.subr.bf16.mxu0 0
    %1896 = vmatpush1.bf16.msra.mxu0 %v1458
    %1897 = vmatprep.subr.bf16.mxu0 0
    %1898 = vmatpush1.bf16.msra.mxu0 %v1459
    %1899 = vmatprep.subr.bf16.mxu0 0
    %1900 = vmatpush1.bf16.msra.mxu0 %v1460
    %1901 = vmatprep.mubr.bf16.mxu0 %v490
    %1902 = vmatmul.mubr.bf16.gmra.mrb[0].mxu0 %v488
    %v1903 = vpop.f32.mrb[0].mxu0
    %v1904 = vadd.f32 %v1864, %v1903
    %v1905 = vpop.f32.mrb[0].mxu0
    %v1906 = vpop.f32.mrb[0].mxu0
    %v1907 = vpop.f32.mrb[0].mxu0
    %1908 = vdwg.mxu0
    %1909 = vmatprep.subr.bf16.mxu0 0
    %1910 = vmatpush1.bf16.msra.mxu0 %v1461
    %1911 = vmatprep.subr.bf16.mxu0 0
    %1912 = vmatpush1.bf16.msra.mxu0 %v1462
    %1913 = vmatprep.subr.bf16.mxu0 0
    %1914 = vmatpush1.bf16.msra.mxu0 %v1463
    %1915 = vmatprep.subr.bf16.mxu0 0
    %1916 = vmatpush1.bf16.msra.mxu0 %v1464
    %1917 = vmatprep.subr.bf16.mxu0 0
    %1918 = vmatpush1.bf16.msra.mxu0 %v1465
    %1919 = vmatprep.subr.bf16.mxu0 0
    %1920 = vmatpush1.bf16.msra.mxu0 %v1466
    %1921 = vmatprep.subr.bf16.mxu0 0
    %1922 = vmatpush1.bf16.msra.mxu0 %v1467
    %1923 = vmatprep.subr.bf16.mxu0 0
    %1924 = vmatpush1.bf16.msra.mxu0 %v1468
    %1925 = vmatprep.subr.bf16.mxu0 0
    %1926 = vmatpush1.bf16.msra.mxu0 %v1469
    %1927 = vmatprep.subr.bf16.mxu0 0
    %1928 = vmatpush1.bf16.msra.mxu0 %v1470
    %1929 = vmatprep.subr.bf16.mxu0 0
    %1930 = vmatpush1.bf16.msra.mxu0 %v1471
    %1931 = vmatprep.subr.bf16.mxu0 0
    %1932 = vmatpush1.bf16.msra.mxu0 %v1472
    %1933 = vmatprep.subr.bf16.mxu0 0
    %1934 = vmatpush1.bf16.msra.mxu0 %v1473
    %1935 = vmatprep.subr.bf16.mxu0 0
    %1936 = vmatpush1.bf16.msra.mxu0 %v1474
    %1937 = vmatprep.subr.bf16.mxu0 0
    %1938 = vmatpush1.bf16.msra.mxu0 %v1475
    %1939 = vmatprep.subr.bf16.mxu0 0
    %1940 = vmatpush1.bf16.msra.mxu0 %v1476
    %1941 = vmatprep.mubr.bf16.mxu0 %v487
    %1942 = vmatmul.mubr.bf16.gmra.mrb[0].mxu0 %v473
    %v1943 = vpop.f32.mrb[0].mxu0
    %v1944 = vadd.f32 %v1904, %v1943
    %v1945 = vpop.f32.mrb[0].mxu0
    %v1946 = vpop.f32.mrb[0].mxu0
    %v1947 = vpop.f32.mrb[0].mxu0
    %1948 = vdwg.mxu0
    %1949 = vmatprep.subr.bf16.mxu0 0
    %1950 = vmatpush1.bf16.msra.mxu0 %v1477
    %1951 = vmatprep.subr.bf16.mxu0 0
    %1952 = vmatpush1.bf16.msra.mxu0 %v1478
    %1953 = vmatprep.subr.bf16.mxu0 0
    %1954 = vmatpush1.bf16.msra.mxu0 %v1479
    %1955 = vmatprep.subr.bf16.mxu0 0
    %1956 = vmatpush1.bf16.msra.mxu0 %v1480
    %1957 = vmatprep.subr.bf16.mxu0 0
    %1958 = vmatpush1.bf16.msra.mxu0 %v1481
    %1959 = vmatprep.subr.bf16.mxu0 0
    %1960 = vmatpush1.bf16.msra.mxu0 %v1482
    %1961 = vmatprep.subr.bf16.mxu0 0
    %1962 = vmatpush1.bf16.msra.mxu0 %v1483
    %1963 = vmatprep.subr.bf16.mxu0 0
    %1964 = vmatpush1.bf16.msra.mxu0 %v1484
    %1965 = vmatprep.subr.bf16.mxu0 0
    %1966 = vmatpush1.bf16.msra.mxu0 %v1485
    %1967 = vmatprep.subr.bf16.mxu0 0
    %1968 = vmatpush1.bf16.msra.mxu0 %v1486
    %1969 = vmatprep.subr.bf16.mxu0 0
    %1970 = vmatpush1.bf16.msra.mxu0 %v1487
    %1971 = vmatprep.subr.bf16.mxu0 0
    %1972 = vmatpush1.bf16.msra.mxu0 %v1488
    %1973 = vmatprep.subr.bf16.mxu0 0
    %1974 = vmatpush1.bf16.msra.mxu0 %v1489
    %1975 = vmatprep.subr.bf16.mxu0 0
    %1976 = vmatpush1.bf16.msra.mxu0 %v1490
    %1977 = vmatprep.subr.bf16.mxu0 0
    %1978 = vmatpush1.bf16.msra.mxu0 %v1491
    %1979 = vmatprep.subr.bf16.mxu0 0
    %1980 = vmatpush1.bf16.msra.mxu0 %v1492
    %1981 = vmatprep.mubr.bf16.mxu0 %v491
    %1982 = vmatmul.mubr.bf16.gmra.mrb[0].mxu0 %v489
    %v1983 = vpop.f32.mrb[0].mxu0
    %v1984 = vadd.f32 %v1944, %v1983
    %v1985 = vpop.f32.mrb[0].mxu0
    %v1986 = vpop.f32.mrb[0].mxu0
    %v1987 = vpop.f32.mrb[0].mxu0
    %1988 = vdwg.mxu0
    %1989 = vmatprep.subr.bf16.mxu0 0
    %1990 = vmatpush1.bf16.msra.mxu0 %v1493
    %1991 = vmatprep.subr.bf16.mxu0 0
    %1992 = vmatpush1.bf16.msra.mxu0 %v1494
    %1993 = vmatprep.subr.bf16.mxu0 0
    %1994 = vmatpush1.bf16.msra.mxu0 %v1495
    %1995 = vmatprep.subr.bf16.mxu0 0
    %1996 = vmatpush1.bf16.msra.mxu0 %v1496
    %1997 = vmatprep.subr.bf16.mxu0 0
    %1998 = vmatpush1.bf16.msra.mxu0 %v1497
    %1999 = vmatprep.subr.bf16.mxu0 0
    %2000 = vmatpush1.bf16.msra.mxu0 %v1498
    %2001 = vmatprep.subr.bf16.mxu0 0
    %2002 = vmatpush1.bf16.msra.mxu0 %v1499
    %2003 = vmatprep.subr.bf16.mxu0 0
    %2004 = vmatpush1.bf16.msra.mxu0 %v1500
    %2005 = vmatprep.subr.bf16.mxu0 0
    %2006 = vmatpush1.bf16.msra.mxu0 %v1501
    %2007 = vmatprep.subr.bf16.mxu0 0
    %2008 = vmatpush1.bf16.msra.mxu0 %v1502
    %2009 = vmatprep.subr.bf16.mxu0 0
    %2010 = vmatpush1.bf16.msra.mxu0 %v1503
    %2011 = vmatprep.subr.bf16.mxu0 0
    %2012 = vmatpush1.bf16.msra.mxu0 %v1504
    %2013 = vmatprep.subr.bf16.mxu0 0
    %2014 = vmatpush1.bf16.msra.mxu0 %v1505
    %2015 = vmatprep.subr.bf16.mxu0 0
    %2016 = vmatpush1.bf16.msra.mxu0 %v1506
    %2017 = vmatprep.subr.bf16.mxu0 0
    %2018 = vmatpush1.bf16.msra.mxu0 %v1507
    %2019 = vmatprep.subr.bf16.mxu0 0
    %2020 = vmatpush1.bf16.msra.mxu0 %v1508
    %2021 = vmatprep.mubr.bf16.mxu0 %v529
    %2022 = vmatmul.mubr.bf16.gmra.mrb[0].mxu0 %v515
    %v2023 = vpop.f32.mrb[0].mxu0
    %v2024 = vadd.f32 %v1984, %v2023
    %v2025 = vpop.f32.mrb[0].mxu0
    %v2026 = vpop.f32.mrb[0].mxu0
    %v2027 = vpop.f32.mrb[0].mxu0
    %2028 = vdwg.mxu0
    %2029 = vmatprep.subr.bf16.mxu0 0
    %2030 = vmatpush1.bf16.msra.mxu0 %v1509
    %2031 = vmatprep.subr.bf16.mxu0 0
    %2032 = vmatpush1.bf16.msra.mxu0 %v1510
    %2033 = vmatprep.subr.bf16.mxu0 0
    %2034 = vmatpush1.bf16.msra.mxu0 %v1511
    %2035 = vmatprep.subr.bf16.mxu0 0
    %2036 = vmatpush1.bf16.msra.mxu0 %v1512
    %2037 = vmatprep.subr.bf16.mxu0 0
    %2038 = vmatpush1.bf16.msra.mxu0 %v1513
    %2039 = vmatprep.subr.bf16.mxu0 0
    %2040 = vmatpush1.bf16.msra.mxu0 %v1514
    %2041 = vmatprep.subr.bf16.mxu0 0
    %2042 = vmatpush1.bf16.msra.mxu0 %v1515
    %2043 = vmatprep.subr.bf16.mxu0 0
    %2044 = vmatpush1.bf16.msra.mxu0 %v1516
    %2045 = vmatprep.subr.bf16.mxu0 0
    %2046 = vmatpush1.bf16.msra.mxu0 %v1517
    %2047 = vmatprep.subr.bf16.mxu0 0
    %2048 = vmatpush1.bf16.msra.mxu0 %v1518
    %2049 = vmatprep.subr.bf16.mxu0 0
    %2050 = vmatpush1.bf16.msra.mxu0 %v1519
    %2051 = vmatprep.subr.bf16.mxu0 0
    %2052 = vmatpush1.bf16.msra.mxu0 %v1520
    %2053 = vmatprep.subr.bf16.mxu0 0
    %2054 = vmatpush1.bf16.msra.mxu0 %v1521
    %2055 = vmatprep.subr.bf16.mxu0 0
    %2056 = vmatpush1.bf16.msra.mxu0 %v1522
    %2057 = vmatprep.subr.bf16.mxu0 0
    %2058 = vmatpush1.bf16.msra.mxu0 %v1523
    %2059 = vmatprep.subr.bf16.mxu0 0
    %2060 = vmatpush1.bf16.msra.mxu0 %v1524
    %2061 = vmatprep.mubr.bf16.mxu0 %v539
    %2062 = vmatmul.mubr.bf16.gmra.mrb[0].mxu0 %v537
    %v2063 = vpop.f32.mrb[0].mxu0
    %v2064 = vadd.f32 %v2024, %v2063
    %v2065 = vpop.f32.mrb[0].mxu0
    %v2066 = vpop.f32.mrb[0].mxu0
    %v2067 = vpop.f32.mrb[0].mxu0
    %2068 = vdwg.mxu0
    %2069 = vmatprep.subr.bf16.mxu0 0
    %2070 = vmatpush1.bf16.msra.mxu0 %v1525
    %2071 = vmatprep.subr.bf16.mxu0 0
    %2072 = vmatpush1.bf16.msra.mxu0 %v1526
    %2073 = vmatprep.subr.bf16.mxu0 0
    %2074 = vmatpush1.bf16.msra.mxu0 %v1527
    %2075 = vmatprep.subr.bf16.mxu0 0
    %2076 = vmatpush1.bf16.msra.mxu0 %v1528
    %2077 = vmatprep.subr.bf16.mxu0 0
    %2078 = vmatpush1.bf16.msra.mxu0 %v1529
    %2079 = vmatprep.subr.bf16.mxu0 0
    %2080 = vmatpush1.bf16.msra.mxu0 %v1530
    %2081 = vmatprep.subr.bf16.mxu0 0
    %2082 = vmatpush1.bf16.msra.mxu0 %v1531
    %2083 = vmatprep.subr.bf16.mxu0 0
    %2084 = vmatpush1.bf16.msra.mxu0 %v1532
    %2085 = vmatprep.subr.bf16.mxu0 0
    %2086 = vmatpush1.bf16.msra.mxu0 %v1533
    %2087 = vmatprep.subr.bf16.mxu0 0
    %2088 = vmatpush1.bf16.msra.mxu0 %v1534
    %2089 = vmatprep.subr.bf16.mxu0 0
    %2090 = vmatpush1.bf16.msra.mxu0 %v1535
    %2091 = vmatprep.subr.bf16.mxu0 0
    %2092 = vmatpush1.bf16.msra.mxu0 %v1536
    %2093 = vmatprep.subr.bf16.mxu0 0
    %2094 = vmatpush1.bf16.msra.mxu0 %v1537
    %2095 = vmatprep.subr.bf16.mxu0 0
    %2096 = vmatpush1.bf16.msra.mxu0 %v1538
    %2097 = vmatprep.subr.bf16.mxu0 0
    %2098 = vmatpush1.bf16.msra.mxu0 %v1539
    %2099 = vmatprep.subr.bf16.mxu0 0
    %2100 = vmatpush1.bf16.msra.mxu0 %v1540
    %2101 = vmatprep.mubr.bf16.mxu0 %v536
    %2102 = vmatmul.mubr.bf16.gmra.mrb[0].mxu0 %v522
    %v2103 = vpop.f32.mrb[0].mxu0
    %v2104 = vadd.f32 %v2064, %v2103
    %v2105 = vpop.f32.mrb[0].mxu0
    %v2106 = vpop.f32.mrb[0].mxu0
    %v2107 = vpop.f32.mrb[0].mxu0
    %2108 = vdwg.mxu0
    %2109 = vmatprep.subr.bf16.mxu0 0
    %2110 = vmatpush1.bf16.msra.mxu0 %v1541
    %2111 = vmatprep.subr.bf16.mxu0 0
    %2112 = vmatpush1.bf16.msra.mxu0 %v1542
    %2113 = vmatprep.subr.bf16.mxu0 0
    %2114 = vmatpush1.bf16.msra.mxu0 %v1543
    %2115 = vmatprep.subr.bf16.mxu0 0
    %2116 = vmatpush1.bf16.msra.mxu0 %v1544
    %2117 = vmatprep.subr.bf16.mxu0 0
    %2118 = vmatpush1.bf16.msra.mxu0 %v1545
    %2119 = vmatprep.subr.bf16.mxu0 0
    %2120 = vmatpush1.bf16.msra.mxu0 %v1546
    %2121 = vmatprep.subr.bf16.mxu0 0
    %2122 = vmatpush1.bf16.msra.mxu0 %v1547
    %2123 = vmatprep.subr.bf16.mxu0 0
    %2124 = vmatpush1.bf16.msra.mxu0 %v1548
    %2125 = vmatprep.subr.bf16.mxu0 0
    %2126 = vmatpush1.bf16.msra.mxu0 %v1549
    %2127 = vmatprep.subr.bf16.mxu0 0
    %2128 = vmatpush1.bf16.msra.mxu0 %v1550
    %2129 = vmatprep.subr.bf16.mxu0 0
    %2130 = vmatpush1.bf16.msra.mxu0 %v1551
    %2131 = vmatprep.subr.bf16.mxu0 0
    %2132 = vmatpush1.bf16.msra.mxu0 %v1552
    %2133 = vmatprep.subr.bf16.mxu0 0
    %2134 = vmatpush1.bf16.msra.mxu0 %v1553
    %2135 = vmatprep.subr.bf16.mxu0 0
    %2136 = vmatpush1.bf16.msra.mxu0 %v1554
    %2137 = vmatprep.subr.bf16.mxu0 0
    %2138 = vmatpush1.bf16.msra.mxu0 %v1555
    %2139 = vmatprep.subr.bf16.mxu0 0
    %2140 = vmatpush1.bf16.msra.mxu0 %v1556
    %2141 = vmatprep.mubr.bf16.mxu0 %v540
    %2142 = vmatmul.mubr.bf16.gmra.mrb[0].mxu0 %v538
    %v2143 = vpop.f32.mrb[0].mxu0
    %v2144 = vadd.f32 %v2104, %v2143
    %v2145 = vpop.f32.mrb[0].mxu0
    %v2146 = vpop.f32.mrb[0].mxu0
    %v2147 = vpop.f32.mrb[0].mxu0
    %2148 = vdwg.mxu0
    %2149 = vmatprep.subr.bf16.mxu0 0
    %2150 = vmatpush1.bf16.msra.mxu0 %v1557
    %2151 = vmatprep.subr.bf16.mxu0 0
    %2152 = vmatpush1.bf16.msra.mxu0 %v1558
    %2153 = vmatprep.subr.bf16.mxu0 0
    %2154 = vmatpush1.bf16.msra.mxu0 %v1559
    %2155 = vmatprep.subr.bf16.mxu0 0
    %2156 = vmatpush1.bf16.msra.mxu0 %v1560
    %2157 = vmatprep.subr.bf16.mxu0 0
    %2158 = vmatpush1.bf16.msra.mxu0 %v1561
    %2159 = vmatprep.subr.bf16.mxu0 0
    %2160 = vmatpush1.bf16.msra.mxu0 %v1562
    %2161 = vmatprep.subr.bf16.mxu0 0
    %2162 = vmatpush1.bf16.msra.mxu0 %v1563
    %2163 = vmatprep.subr.bf16.mxu0 0
    %2164 = vmatpush1.bf16.msra.mxu0 %v1564
    %2165 = vmatprep.subr.bf16.mxu0 0
    %2166 = vmatpush1.bf16.msra.mxu0 %v1565
    %2167 = vmatprep.subr.bf16.mxu0 0
    %2168 = vmatpush1.bf16.msra.mxu0 %v1566
    %2169 = vmatprep.subr.bf16.mxu0 0
    %2170 = vmatpush1.bf16.msra.mxu0 %v1567
    %2171 = vmatprep.subr.bf16.mxu0 0
    %2172 = vmatpush1.bf16.msra.mxu0 %v1568
    %2173 = vmatprep.subr.bf16.mxu0 0
    %2174 = vmatpush1.bf16.msra.mxu0 %v1569
    %2175 = vmatprep.subr.bf16.mxu0 0
    %2176 = vmatpush1.bf16.msra.mxu0 %v1570
    %2177 = vmatprep.subr.bf16.mxu0 0
    %2178 = vmatpush1.bf16.msra.mxu0 %v1571
    %2179 = vmatprep.subr.bf16.mxu0 0
    %2180 = vmatpush1.bf16.msra.mxu0 %v1572
    %2181 = vmatprep.mubr.bf16.mxu0 %v578
    %2182 = vmatmul.mubr.bf16.gmra.mrb[0].mxu0 %v564
    %v2183 = vpop.f32.mrb[0].mxu0
    %v2184 = vadd.f32 %v2144, %v2183
    %v2185 = vpop.f32.mrb[0].mxu0
    %v2186 = vpop.f32.mrb[0].mxu0
    %v2187 = vpop.f32.mrb[0].mxu0
    %2188 = vdwg.mxu0
    %2189 = vmatprep.subr.bf16.mxu0 0
    %2190 = vmatpush1.bf16.msra.mxu0 %v1573
    %2191 = vmatprep.subr.bf16.mxu0 0
    %2192 = vmatpush1.bf16.msra.mxu0 %v1574
    %2193 = vmatprep.subr.bf16.mxu0 0
    %2194 = vmatpush1.bf16.msra.mxu0 %v1575
    %2195 = vmatprep.subr.bf16.mxu0 0
    %2196 = vmatpush1.bf16.msra.mxu0 %v1576
    %2197 = vmatprep.subr.bf16.mxu0 0
    %2198 = vmatpush1.bf16.msra.mxu0 %v1577
    %2199 = vmatprep.subr.bf16.mxu0 0
    %2200 = vmatpush1.bf16.msra.mxu0 %v1578
    %2201 = vmatprep.subr.bf16.mxu0 0
    %2202 = vmatpush1.bf16.msra.mxu0 %v1579
    %2203 = vmatprep.subr.bf16.mxu0 0
    %2204 = vmatpush1.bf16.msra.mxu0 %v1580
    %2205 = vmatprep.subr.bf16.mxu0 0
    %2206 = vmatpush1.bf16.msra.mxu0 %v1581
    %2207 = vmatprep.subr.bf16.mxu0 0
    %2208 = vmatpush1.bf16.msra.mxu0 %v1582
    %2209 = vmatprep.subr.bf16.mxu0 0
    %2210 = vmatpush1.bf16.msra.mxu0 %v1583
    %2211 = vmatprep.subr.bf16.mxu0 0
    %2212 = vmatpush1.bf16.msra.mxu0 %v1584
    %2213 = vmatprep.subr.bf16.mxu0 0
    %2214 = vmatpush1.bf16.msra.mxu0 %v1585
    %2215 = vmatprep.subr.bf16.mxu0 0
    %2216 = vmatpush1.bf16.msra.mxu0 %v1586
    %2217 = vmatprep.subr.bf16.mxu0 0
    %2218 = vmatpush1.bf16.msra.mxu0 %v1587
    %2219 = vmatprep.subr.bf16.mxu0 0
    %2220 = vmatpush1.bf16.msra.mxu0 %v1588
    %2221 = vmatprep.mubr.bf16.mxu0 %v588
    %2222 = vmatmul.mubr.bf16.gmra.mrb[0].mxu0 %v586
    %v2223 = vpop.f32.mrb[0].mxu0
    %v2224 = vadd.f32 %v2184, %v2223
    %v2225 = vpop.f32.mrb[0].mxu0
    %v2226 = vpop.f32.mrb[0].mxu0
    %v2227 = vpop.f32.mrb[0].mxu0
    %2228 = vdwg.mxu0
    %2229 = vmatprep.subr.bf16.mxu0 0
    %2230 = vmatpush1.bf16.msra.mxu0 %v1589
    %2231 = vmatprep.subr.bf16.mxu0 0
    %2232 = vmatpush1.bf16.msra.mxu0 %v1590
    %2233 = vmatprep.subr.bf16.mxu0 0
    %2234 = vmatpush1.bf16.msra.mxu0 %v1591
    %2235 = vmatprep.subr.bf16.mxu0 0
    %2236 = vmatpush1.bf16.msra.mxu0 %v1592
    %2237 = vmatprep.subr.bf16.mxu0 0
    %2238 = vmatpush1.bf16.msra.mxu0 %v1593
    %2239 = vmatprep.subr.bf16.mxu0 0
    %2240 = vmatpush1.bf16.msra.mxu0 %v1594
    %2241 = vmatprep.subr.bf16.mxu0 0
    %2242 = vmatpush1.bf16.msra.mxu0 %v1595
    %2243 = vmatprep.subr.bf16.mxu0 0
    %2244 = vmatpush1.bf16.msra.mxu0 %v1596
    %2245 = vmatprep.subr.bf16.mxu0 0
    %2246 = vmatpush1.bf16.msra.mxu0 %v1597
    %2247 = vmatprep.subr.bf16.mxu0 0
    %2248 = vmatpush1.bf16.msra.mxu0 %v1598
    %2249 = vmatprep.subr.bf16.mxu0 0
    %2250 = vmatpush1.bf16.msra.mxu0 %v1599
    %2251 = vmatprep.subr.bf16.mxu0 0
    %2252 = vmatpush1.bf16.msra.mxu0 %v1600
    %2253 = vmatprep.subr.bf16.mxu0 0
    %2254 = vmatpush1.bf16.msra.mxu0 %v1601
    %2255 = vmatprep.subr.bf16.mxu0 0
    %2256 = vmatpush1.bf16.msra.mxu0 %v1602
    %2257 = vmatprep.subr.bf16.mxu0 0
    %2258 = vmatpush1.bf16.msra.mxu0 %v1603
    %2259 = vmatprep.subr.bf16.mxu0 0
    %2260 = vmatpush1.bf16.msra.mxu0 %v1604
    %2261 = vmatprep.mubr.bf16.mxu0 %v585
    %2262 = vmatmul.mubr.bf16.gmra.mrb[0].mxu0 %v571
    %v2263 = vpop.f32.mrb[0].mxu0
    %v2264 = vadd.f32 %v2224, %v2263
    %v2265 = vpop.f32.mrb[0].mxu0
    %v2266 = vpop.f32.mrb[0].mxu0
    %v2267 = vpop.f32.mrb[0].mxu0
    %2268 = vdwg.mxu0
    %2269 = vmatprep.subr.bf16.mxu0 0
    %2270 = vmatpush1.bf16.msra.mxu0 %v1605
    %2271 = vmatprep.subr.bf16.mxu0 0
    %2272 = vmatpush1.bf16.msra.mxu0 %v1606
    %2273 = vmatprep.subr.bf16.mxu0 0
    %2274 = vmatpush1.bf16.msra.mxu0 %v1607
    %2275 = vmatprep.subr.bf16.mxu0 0
    %2276 = vmatpush1.bf16.msra.mxu0 %v1608
    %2277 = vmatprep.subr.bf16.mxu0 0
    %2278 = vmatpush1.bf16.msra.mxu0 %v1609
    %2279 = vmatprep.subr.bf16.mxu0 0
    %2280 = vmatpush1.bf16.msra.mxu0 %v1610
    %2281 = vmatprep.subr.bf16.mxu0 0
    %2282 = vmatpush1.bf16.msra.mxu0 %v1611
    %2283 = vmatprep.subr.bf16.mxu0 0
    %2284 = vmatpush1.bf16.msra.mxu0 %v1612
    %2285 = vmatprep.subr.bf16.mxu0 0
    %2286 = vmatpush1.bf16.msra.mxu0 %v1613
    %2287 = vmatprep.subr.bf16.mxu0 0
    %2288 = vmatpush1.bf16.msra.mxu0 %v1614
    %2289 = vmatprep.subr.bf16.mxu0 0
    %2290 = vmatpush1.bf16.msra.mxu0 %v1615
    %2291 = vmatprep.subr.bf16.mxu0 0
    %2292 = vmatpush1.bf16.msra.mxu0 %v1616
    %2293 = vmatprep.subr.bf16.mxu0 0
    %2294 = vmatpush1.bf16.msra.mxu0 %v1617
    %2295 = vmatprep.subr.bf16.mxu0 0
    %2296 = vmatpush1.bf16.msra.mxu0 %v1618
    %2297 = vmatprep.subr.bf16.mxu0 0
    %2298 = vmatpush1.bf16.msra.mxu0 %v1619
    %2299 = vmatprep.subr.bf16.mxu0 0
    %2300 = vmatpush1.bf16.msra.mxu0 %v1620
    %2301 = vmatprep.mubr.bf16.mxu0 %v589
    %2302 = vmatmul.mubr.bf16.gmra.mrb[0].mxu0 %v587
    %v2303 = vpop.f32.mrb[0].mxu0
    %v2304 = vadd.f32 %v2264, %v2303
    %v2305 = vpop.f32.mrb[0].mxu0
    %v2306 = vpop.f32.mrb[0].mxu0
    %v2307 = vpop.f32.mrb[0].mxu0
    %2308 = vdwg.mxu0
    %2309 = vmatprep.subr.bf16.mxu0 0
    %2310 = vmatpush1.bf16.msra.mxu0 %v1621
    %2311 = vmatprep.subr.bf16.mxu0 0
    %2312 = vmatpush1.bf16.msra.mxu0 %v1622
    %2313 = vmatprep.subr.bf16.mxu0 0
    %2314 = vmatpush1.bf16.msra.mxu0 %v1623
    %2315 = vmatprep.subr.bf16.mxu0 0
    %2316 = vmatpush1.bf16.msra.mxu0 %v1624
    %2317 = vmatprep.subr.bf16.mxu0 0
    %2318 = vmatpush1.bf16.msra.mxu0 %v1625
    %2319 = vmatprep.subr.bf16.mxu0 0
    %2320 = vmatpush1.bf16.msra.mxu0 %v1626
    %2321 = vmatprep.subr.bf16.mxu0 0
    %2322 = vmatpush1.bf16.msra.mxu0 %v1627
    %2323 = vmatprep.subr.bf16.mxu0 0
    %2324 = vmatpush1.bf16.msra.mxu0 %v1628
    %2325 = vmatprep.subr.bf16.mxu0 0
    %2326 = vmatpush1.bf16.msra.mxu0 0
    %2327 = vmatprep.subr.bf16.mxu0 0
    %2328 = vmatpush1.bf16.msra.mxu0 0
    %2329 = vmatprep.subr.bf16.mxu0 0
    %2330 = vmatpush1.bf16.msra.mxu0 0
    %2331 = vmatprep.subr.bf16.mxu0 0
    %2332 = vmatpush1.bf16.msra.mxu0 0
    %2333 = vmatprep.subr.bf16.mxu0 0
    %2334 = vmatpush1.bf16.msra.mxu0 0
    %2335 = vmatprep.subr.bf16.mxu0 0
    %2336 = vmatpush1.bf16.msra.mxu0 0
    %2337 = vmatprep.subr.bf16.mxu0 0
    %2338 = vmatpush1.bf16.msra.mxu0 0
    %2339 = vmatprep.subr.bf16.mxu0 0
    %2340 = vmatpush1.bf16.msra.mxu0 0
    %2341 = vmatprep.mubr.bf16.mxu0 0
    %2342 = vmatmul.mubr.bf16.gmra.mrb[0].mxu0 %v603
    %v2343 = vpop.f32.mrb[0].mxu0
    %v2344 = vadd.f32 %v2304, %v2343
    %v2345 = vpop.f32.mrb[0].mxu0
    %v2346 = vpop.f32.mrb[0].mxu0
    %v2347 = vpop.f32.mrb[0].mxu0
    %2348 = vdwg.mxu0
    %v2349 = vmax.f32 %v2344, 0.0
    %v2350 = vpack.c.bf16 %v2349, %v2349
    %v2351 = vld [vmem:[%s3] sm:$0xf]
    %v2352 = vld [vmem:[%s3 + $0x4] sm:$0xf]
    %v2353 = vld [vmem:[%s3 + $0x8] sm:$0xf]
    %v2354 = vld [vmem:[%s3 + $0xc] sm:$0xf]
    %v2355 = vld [vmem:[%s3 + $0x10] sm:$0xf]
    %v2356 = vld [vmem:[%s3 + $0x14] sm:$0xf]
    %v2357 = vld [vmem:[%s3 + $0x18] sm:$0xf]
    %v2358 = vld [vmem:[%s3 + $0x1c] sm:$0xf]
    %v2359 = vld [vmem:[%s3 + $0x20] sm:$0xf]
    %v2360 = vld [vmem:[%s3 + $0x24] sm:$0xf]
    %v2361 = vld [vmem:[%s3 + $0x28] sm:$0xf]
    %v2362 = vld [vmem:[%s3 + $0x2c] sm:$0xf]
    %v2363 = vld [vmem:[%s3 + $0x30] sm:$0xf]
    %v2364 = vld [vmem:[%s3 + $0x34] sm:$0xf]
    %v2365 = vld [vmem:[%s3 + $0x38] sm:$0xf]
    %v2366 = vld [vmem:[%s3 + $0x3c] sm:$0xf]
    %v2367 = vld [vmem:[%s4] sm:$0x1]
    %v2369 = vlaneseq
    %v2370 = vshrl.u32 %v2369, 7
    %v2371 = vsub.s32 0, %v2370
    %v2372 = vrot.slane %v2367, %v2371
    %v2390 = vunpack.c.l.b16 %v2351
    %v2391 = vunpack.c.l.b16 %v2352
    %v2392 = vunpack.c.l.b16 %v2353
    %v2393 = vunpack.c.l.b16 %v2354
    %v2394 = vunpack.c.l.b16 %v2355
    %v2395 = vunpack.c.l.b16 %v2356
    %v2396 = vunpack.c.l.b16 %v2357
    %v2397 = vunpack.c.l.b16 %v2358
    %v2398 = vunpack.c.l.b16 %v2359
    %v2399 = vunpack.c.l.b16 %v2360
    %v2400 = vunpack.c.l.b16 %v2361
    %v2401 = vunpack.c.l.b16 %v2362
    %v2402 = vunpack.c.l.b16 %v2363
    %v2403 = vunpack.c.l.b16 %v2364
    %v2404 = vunpack.c.l.b16 %v2365
    %v2405 = vunpack.c.l.b16 %v2366
    %v2406 = vpack.c.b16 %v2391, %v2390
    %v2407 = vpack.c.b16 %v2393, %v2392
    %v2408 = vpack.c.b16 %v2395, %v2394
    %v2409 = vpack.c.b16 %v2397, %v2396
    %v2410 = vpack.c.b16 %v2399, %v2398
    %v2411 = vpack.c.b16 %v2401, %v2400
    %v2412 = vpack.c.b16 %v2403, %v2402
    %v2413 = vpack.c.b16 %v2405, %v2404
    %2422 = vmatprep.subr.bf16.mxu0 0
    %2423 = vmatpush1.bf16.msra.mxu0 %v2406
    %2424 = vmatprep.subr.bf16.mxu0 0
    %2425 = vmatpush1.bf16.msra.mxu0 %v2407
    %2426 = vmatprep.subr.bf16.mxu0 0
    %2427 = vmatpush1.bf16.msra.mxu0 %v2408
    %2428 = vmatprep.subr.bf16.mxu0 0
    %2429 = vmatpush1.bf16.msra.mxu0 %v2409
    %2430 = vmatprep.subr.bf16.mxu0 0
    %2431 = vmatpush1.bf16.msra.mxu0 %v2410
    %2432 = vmatprep.subr.bf16.mxu0 0
    %2433 = vmatpush1.bf16.msra.mxu0 %v2411
    %2434 = vmatprep.subr.bf16.mxu0 0
    %2435 = vmatpush1.bf16.msra.mxu0 %v2412
    %2436 = vmatprep.subr.bf16.mxu0 0
    %2437 = vmatpush1.bf16.msra.mxu0 %v2413
    %2438 = vmatprep.subr.bf16.mxu0 0
    %2439 = vmatpush1.bf16.msra.mxu0 0
    %2440 = vmatprep.subr.bf16.mxu0 0
    %2441 = vmatpush1.bf16.msra.mxu0 0
    %2442 = vmatprep.subr.bf16.mxu0 0
    %2443 = vmatpush1.bf16.msra.mxu0 0
    %2444 = vmatprep.subr.bf16.mxu0 0
    %2445 = vmatpush1.bf16.msra.mxu0 0
    %2446 = vmatprep.subr.bf16.mxu0 0
    %2447 = vmatpush1.bf16.msra.mxu0 0
    %2448 = vmatprep.subr.bf16.mxu0 0
    %2449 = vmatpush1.bf16.msra.mxu0 0
    %2450 = vmatprep.subr.bf16.mxu0 0
    %2451 = vmatpush1.bf16.msra.mxu0 0
    %2452 = vmatprep.subr.bf16.mxu0 0
    %2453 = vmatpush1.bf16.msra.mxu0 0
    %2454 = vmatprep.mubr.bf16.mxu0 0
    %2455 = vmatmul.mubr.bf16.gmra.mrb[0].mxu0 %v2350
    %v2456 = vpop.f32.mrb[0].mxu0
    %v2457 = vadd.f32 %v2372, %v2456
    %v2458 = vpop.f32.mrb[0].mxu0
    %v2459 = vpop.f32.mrb[0].mxu0
    %v2460 = vpop.f32.mrb[0].mxu0
    %2461 = vdwg.mxu0
    %v2462 = vmax.f32 %v2457, 0.0
    %v2463 = vpack.c.bf16 %v2462, %v2462
    %v2464 = vld [vmem:[%s5] sm:$0xf]
    %v2465 = vld [vmem:[%s5 + $0x4] sm:$0xf]
    %v2466 = vld [vmem:[%s5 + $0x8] sm:$0xf]
    %v2467 = vld [vmem:[%s5 + $0xc] sm:$0xf]
    %v2468 = vld [vmem:[%s5 + $0x10] sm:$0xf]
    %v2469 = vld [vmem:[%s5 + $0x14] sm:$0xf]
    %v2470 = vld [vmem:[%s5 + $0x18] sm:$0xf]
    %v2471 = vld [vmem:[%s5 + $0x1c] sm:$0xf]
    %v2472 = vld [vmem:[%s5 + $0x20] sm:$0xf]
    %v2473 = vld [vmem:[%s5 + $0x24] sm:$0xf]
    %v2474 = vld [vmem:[%s5 + $0x28] sm:$0xf]
    %v2475 = vld [vmem:[%s5 + $0x2c] sm:$0xf]
    %v2476 = vld [vmem:[%s5 + $0x30] sm:$0xf]
    %v2477 = vld [vmem:[%s5 + $0x34] sm:$0xf]
    %v2478 = vld [vmem:[%s5 + $0x38] sm:$0xf]
    %v2479 = vld [vmem:[%s5 + $0x3c] sm:$0xf]
    %v2480 = vld [vmem:[%s6] sm:$0x1]
    %v2482 = vlaneseq
    %v2483 = vshrl.u32 %v2482, 7
    %v2484 = vsub.s32 0, %v2483
    %v2485 = vrot.slane %v2480, %v2484
    %v2503 = vunpack.c.l.b16 %v2464
    %v2504 = vunpack.c.l.b16 %v2465
    %v2505 = vunpack.c.l.b16 %v2466
    %v2506 = vunpack.c.l.b16 %v2467
    %v2507 = vunpack.c.l.b16 %v2468
    %v2508 = vunpack.c.l.b16 %v2469
    %v2509 = vunpack.c.l.b16 %v2470
    %v2510 = vunpack.c.l.b16 %v2471
    %v2511 = vunpack.c.l.b16 %v2472
    %v2512 = vunpack.c.l.b16 %v2473
    %v2513 = vunpack.c.l.b16 %v2474
    %v2514 = vunpack.c.l.b16 %v2475
    %v2515 = vunpack.c.l.b16 %v2476
    %v2516 = vunpack.c.l.b16 %v2477
    %v2517 = vunpack.c.l.b16 %v2478
    %v2518 = vunpack.c.l.b16 %v2479
    %v2519 = vpack.c.b16 %v2504, %v2503
    %v2520 = vpack.c.b16 %v2506, %v2505
    %v2521 = vpack.c.b16 %v2508, %v2507
    %v2522 = vpack.c.b16 %v2510, %v2509
    %v2523 = vpack.c.b16 %v2512, %v2511
    %v2524 = vpack.c.b16 %v2514, %v2513
    %v2525 = vpack.c.b16 %v2516, %v2515
    %v2526 = vpack.c.b16 %v2518, %v2517
    %2535 = vmatprep.subr.bf16.mxu0 0
    %2536 = vmatpush1.bf16.msra.mxu0 %v2519
    %2537 = vmatprep.subr.bf16.mxu0 0
    %2538 = vmatpush1.bf16.msra.mxu0 %v2520
    %2539 = vmatprep.subr.bf16.mxu0 0
    %2540 = vmatpush1.bf16.msra.mxu0 %v2521
    %2541 = vmatprep.subr.bf16.mxu0 0
    %2542 = vmatpush1.bf16.msra.mxu0 %v2522
    %2543 = vmatprep.subr.bf16.mxu0 0
    %2544 = vmatpush1.bf16.msra.mxu0 %v2523
    %2545 = vmatprep.subr.bf16.mxu0 0
    %2546 = vmatpush1.bf16.msra.mxu0 %v2524
    %2547 = vmatprep.subr.bf16.mxu0 0
    %2548 = vmatpush1.bf16.msra.mxu0 %v2525
    %2549 = vmatprep.subr.bf16.mxu0 0
    %2550 = vmatpush1.bf16.msra.mxu0 %v2526
    %2551 = vmatprep.subr.bf16.mxu0 0
    %2552 = vmatpush1.bf16.msra.mxu0 0
    %2553 = vmatprep.subr.bf16.mxu0 0
    %2554 = vmatpush1.bf16.msra.mxu0 0
    %2555 = vmatprep.subr.bf16.mxu0 0
    %2556 = vmatpush1.bf16.msra.mxu0 0
    %2557 = vmatprep.subr.bf16.mxu0 0
    %2558 = vmatpush1.bf16.msra.mxu0 0
    %2559 = vmatprep.subr.bf16.mxu0 0
    %2560 = vmatpush1.bf16.msra.mxu0 0
    %2561 = vmatprep.subr.bf16.mxu0 0
    %2562 = vmatpush1.bf16.msra.mxu0 0
    %2563 = vmatprep.subr.bf16.mxu0 0
    %2564 = vmatpush1.bf16.msra.mxu0 0
    %2565 = vmatprep.subr.bf16.mxu0 0
    %2566 = vmatpush1.bf16.msra.mxu0 0
    %2567 = vmatprep.mubr.bf16.mxu0 0
    %2568 = vmatmul.mubr.bf16.gmra.mrb[0].mxu0 %v2463
    %v2569 = vpop.f32.mrb[0].mxu0
    %v2570 = vadd.f32 %v2485, %v2569
    %v2571 = vpop.f32.mrb[0].mxu0
    %v2572 = vpop.f32.mrb[0].mxu0
    %v2573 = vpop.f32.mrb[0].mxu0
    %2574 = vdwg.mxu0
    %2575 = vst [vmem:[#allocation2] sm:$0x3] %v2570
    // Predicated region
    $region30: #{net_forward.9} parent=1 // pred_check
      _
    $region31: #{net_forward.9} parent=1 // pred_check_branch
      %2577 = sbr.rel (0) target = $region33
    $region32: #{net_forward.9} parent=1 // pred_region
      %s2579 = ssub.s32 32, 32
      %2580 = vsyncadd [#allocation3], %s2579
      %s2582 = sshll.u32 [#allocation2], 4
      %s2583 = int_to_ptr.vmem [resolvable:$true] %s2582
      %2585 = dma.vmem_to_hbm [thread:$0]  %s2583, 32, %s7, [#allocation3]
    $region33: #{net_forward.9} parent=1 // pred_fallthru
      _
    // Predicated region
    $region34: #{net_forward.9} parent=1 // pred_check
      _
    $region35: #{net_forward.9} parent=1 // pred_check_branch
      %2587 = sbr.rel (0) target = $region37
    $region36: #{net_forward.9} parent=1 // pred_region
      %2588 = dma.done [#allocation3], 32
    $region37: #{net_forward.9} parent=1 // pred_fallthru
      _
    %2589 = vsyncpa [#allocation3], 1

</llo_original>
